<compile_context>
chip_gen: v6e
topology: v6e:2x2x1
jax: 0.10.0
libtpu: 0.0.40
codegen_flags: <defaults>
</compile_context>

<pallas_src>
import functools

import jax
import jax.numpy as jnp
from jax import lax
from jax.experimental import pallas as pl
from jax.experimental.pallas import tpu as pltpu


# ----------------------------------------------------------------------------
# Fused kernel: a single grid step processes the whole (B, N, C) input.
#   x_ref     : (B, N, C)
#   wq/wk/wv  : (H, C, Dh)   head-major, scale folded into wq
#   bq/bk/bv  : (H, 1, Dh)   scale folded into bq
#   wproj_ref : (H, Dh, C)   bproj_ref : (1, C)
#   o_ref     : (B, N, C)
# ----------------------------------------------------------------------------
def fused_self_attention_kernel(x_ref, wq_ref, wk_ref, wv_ref,
                                bq_ref, bk_ref, bv_ref,
                                wproj_ref, bproj_ref, o_ref,
                                *, num_heads, mxu_dtype):
    B, N, C = x_ref.shape
    Dh = wq_ref.shape[-1]

    def mx(a):  # cast MXU operands (no-op when mxu_dtype == float32)
        return a.astype(mxu_dtype)

    xf = x_ref[...].reshape(B * N, C)          # lane-dense (BN, C) slab
    xf_mx = mx(xf)
    acc = jnp.zeros((B * N, C), jnp.float32)   # output-projection accumulator

    # Static unroll is fine at H=8.  If num_heads grows, switch to
    # lax.fori_loop(..., unroll=True) over a head-major layout to bound
    # vreg live ranges while keeping LLO scheduler visibility.
    for h in range(num_heads):
        # Per-head projections: heads indexed along the leading ref axis
        # (no sub-128-lane column slicing).  scale is pre-folded into wq/bq.
        q = (jnp.dot(xf_mx, mx(wq_ref[h]), preferred_element_type=jnp.float32)
             + bq_ref[h]).reshape(B, N, Dh)
        k = (jnp.dot(xf_mx, mx(wk_ref[h]), preferred_element_type=jnp.float32)
             + bk_ref[h]).reshape(B, N, Dh)
        v = (jnp.dot(xf_mx, mx(wv_ref[h]), preferred_element_type=jnp.float32)
             + bv_ref[h]).reshape(B, N, Dh)

        # Scores: batched contraction over the last dims (no materialized k^T).
        s = jnp.einsum('bnd,bmd->bnm', mx(q), mx(k),
                       preferred_element_type=jnp.float32)       # (B, N, N)
        s = s - jnp.max(s, axis=-1, keepdims=True)
        p = jnp.exp(s)
        denom = jnp.sum(p, axis=-1, keepdims=True)               # (B, N, 1)
        # dropout(p) with rate 0.0 -> identity.
        o_h = jnp.einsum('bnm,bmd->bnd', mx(p), mx(v),
                         preferred_element_type=jnp.float32) / denom  # exact div

        # Per-head output-projection accumulation (no scratch, no masked
        # per-head stores): (BN, Dh) @ (Dh, C), accumulated in registers.
        acc = acc + jnp.dot(mx(o_h.reshape(B * N, Dh)), mx(wproj_ref[h]),
                            preferred_element_type=jnp.float32)

    out = acc + bproj_ref[...]                                   # (BN, C) + (1, C)
    # Single contiguous store of the whole output block.
    o_ref[...] = out.reshape(B, N, C).astype(o_ref.dtype)


# ----------------------------------------------------------------------------
# Parameter prep: one-time weight transforms (head-major layout, scale folding)
# ----------------------------------------------------------------------------
def prepare_params(params, num_heads):
    C = params["w_proj"].shape[0]
    Dh = C // num_heads
    scale = float(Dh) ** (-0.5)

    w_q, w_k, w_v = jnp.split(params["w_qkv"], 3, axis=1)   # each (C, C)
    b_q, b_k, b_v = jnp.split(params["b_qkv"], 3)           # each (C,)

    def w_head_major(w):    # (C, C) -> (H, C, Dh)
        return jnp.transpose(w.reshape(C, num_heads, Dh), (1, 0, 2))

    def b_head_major(b):    # (C,) -> (H, 1, Dh)
        return b.reshape(num_heads, 1, Dh)

    w_q = w_head_major(w_q) * scale          # fold softmax scale into Q
    b_q = b_head_major(b_q) * scale
    w_k = w_head_major(w_k)
    b_k = b_head_major(b_k)
    w_v = w_head_major(w_v)
    b_v = b_head_major(b_v)

    w_proj = params["w_proj"].reshape(num_heads, Dh, C)      # (H, Dh, C)
    b_proj = params["b_proj"].reshape(1, C)
    return w_q, w_k, w_v, b_q, b_k, b_v, w_proj, b_proj


# ----------------------------------------------------------------------------
# Wrapper
# ----------------------------------------------------------------------------
def self_attention_forward(x, params, num_heads, mxu_dtype=jnp.float32):
    B, N, C = x.shape
    Dh = C // num_heads
    w_q, w_k, w_v, b_q, b_k, b_v, w_proj, b_proj = prepare_params(params, num_heads)

    kern = functools.partial(fused_self_attention_kernel,
                             num_heads=num_heads, mxu_dtype=mxu_dtype)

    flops = int(2 * B * N * C * (3 * C)                      # qkv projections
                + 4 * B * num_heads * N * N * Dh             # q@k^T and p@v
                + 2 * B * N * C * C)                         # output projection
    bytes_accessed = int(4 * (2 * x.size + w_q.size + w_k.size + w_v.size
                              + b_q.size + b_k.size + b_v.size
                              + w_proj.size + b_proj.size))
    cost = pl.CostEstimate(flops=flops,
                           transcendentals=int(B * num_heads * N * N),
                           bytes_accessed=bytes_accessed)

    return pl.pallas_call(
        kern,
        out_shape=jax.ShapeDtypeStruct((B, N, C), x.dtype),
        grid=(1,),                                 # single step: grid collapsed
        in_specs=[
            pl.BlockSpec((B, N, C), lambda i: (0, 0, 0)),
            pl.BlockSpec((num_heads, C, Dh), lambda i: (0, 0, 0)),
            pl.BlockSpec((num_heads, C, Dh), lambda i: (0, 0, 0)),
            pl.BlockSpec((num_heads, C, Dh), lambda i: (0, 0, 0)),
            pl.BlockSpec((num_heads, 1, Dh), lambda i: (0, 0, 0)),
            pl.BlockSpec((num_heads, 1, Dh), lambda i: (0, 0, 0)),
            pl.BlockSpec((num_heads, 1, Dh), lambda i: (0, 0, 0)),
            pl.BlockSpec((num_heads, Dh, C), lambda i: (0, 0, 0)),
            pl.BlockSpec((1, C), lambda i: (0, 0)),
        ],
        out_specs=pl.BlockSpec((B, N, C), lambda i: (0, 0, 0)),
        compiler_params=pltpu.CompilerParams(
            dimension_semantics=("arbitrary",)),
        cost_estimate=cost,
    )(x, w_q, w_k, w_v, b_q, b_k, b_v, w_proj, b_proj)


def init_params(key, dim):
    # Deterministic init mimicking nn.Linear (uniform in +/- 1/sqrt(fan_in)).
    k1, k2, k3, k4 = jax.random.split(key, 4)
    bound = 1.0 / (dim ** 0.5)
    return {
        # stored transposed: (in, out) so projections are x @ w
        "w_qkv": jax.random.uniform(k1, (dim, 3 * dim), jnp.float32, -bound, bound),
        "b_qkv": jax.random.uniform(k2, (3 * dim,), jnp.float32, -bound, bound),
        "w_proj": jax.random.uniform(k3, (dim, dim), jnp.float32, -bound, bound),
        "b_proj": jax.random.uniform(k4, (dim,), jnp.float32, -bound, bound),
    }


if __name__ == "__main__":
    B, N, C = 2, 8, 32
    num_heads = 8

    key = jax.random.PRNGKey(0)
    kx, kp = jax.random.split(key)
    x = jax.random.normal(kx, (B, N, C), jnp.float32)
    params = init_params(kp, C)

    out = jax.block_until_ready(self_attention_forward(x, params, num_heads))

    # pure-JAX reference (matches the PyTorch module); HIGHEST precision so the
    # reference itself does not introduce bf16-pass error on TPU.
    HI = jax.lax.Precision.HIGHEST

    def ref(x, p):
        Bq, Nq, Cq = x.shape
        hd = Cq // num_heads
        scale = hd ** (-0.5)
        qkv = jnp.dot(x.reshape(Bq * Nq, Cq), p["w_qkv"], precision=HI) + p["b_qkv"]
        qkv = qkv.reshape(Bq, Nq, 3, num_heads, hd).transpose(2, 0, 3, 1, 4)
        q, k, v = qkv[0], qkv[1], qkv[2]
        s = jnp.einsum("bhqd,bhkd->bhqk", q, k, precision=HI) * scale
        a = jax.nn.softmax(s, axis=-1)
        o = jnp.einsum("bhqk,bhkd->bhqd", a, v, precision=HI)
        o = o.transpose(0, 2, 1, 3).reshape(Bq, Nq, Cq)
        return (jnp.dot(o.reshape(Bq * Nq, Cq), p["w_proj"], precision=HI)
                + p["b_proj"]).reshape(Bq, Nq, Cq)

    expected = ref(x, params)
    assert out.shape == (B, N, C)
    # Exact softmax division + f32 math -> tolerance tightened vs. previous 5e-3.
    assert jnp.allclose(out, expected, atol=2e-3, rtol=2e-3), (
        float(jnp.max(jnp.abs(out - expected))))
    print("KERNEL_OK")
</pallas_src>

<mosaic_0001>
module attributes {stable_mosaic.version = 11 : i64} {
  func.func @fused_self_attention_kernel(%arg0: i32, %arg1: memref<2x8x32xf32, #tpu.memory_space<vmem>>, %arg2: memref<8x32x4xf32, #tpu.memory_space<vmem>>, %arg3: memref<8x32x4xf32, #tpu.memory_space<vmem>>, %arg4: memref<8x32x4xf32, #tpu.memory_space<vmem>>, %arg5: memref<8x1x4xf32, #tpu.memory_space<vmem>>, %arg6: memref<8x1x4xf32, #tpu.memory_space<vmem>>, %arg7: memref<8x1x4xf32, #tpu.memory_space<vmem>>, %arg8: memref<8x4x32xf32, #tpu.memory_space<vmem>>, %arg9: memref<1x32xf32, #tpu.memory_space<vmem>>, %arg10: memref<2x8x32xf32, #tpu.memory_space<vmem>>) attributes {dimension_semantics = [#tpu.dimension_semantics<arbitrary>], iteration_bounds = array<i64: 1>, scalar_prefetch = 0 : i64, scratch_operands = 0 : i64, tpu.core_type = #tpu.core_type<tc>, window_params = [{pipeline_mode = #tpu.pipeline_mode<synchronous>, transform_indices = @transform_0, window_bounds = array<i64: 2, 8, 32>}, {pipeline_mode = #tpu.pipeline_mode<synchronous>, transform_indices = @transform_1, window_bounds = array<i64: 8, 32, 4>}, {pipeline_mode = #tpu.pipeline_mode<synchronous>, transform_indices = @transform_2, window_bounds = array<i64: 8, 32, 4>}, {pipeline_mode = #tpu.pipeline_mode<synchronous>, transform_indices = @transform_3, window_bounds = array<i64: 8, 32, 4>}, {pipeline_mode = #tpu.pipeline_mode<synchronous>, transform_indices = @transform_4, window_bounds = array<i64: 8, 1, 4>}, {pipeline_mode = #tpu.pipeline_mode<synchronous>, transform_indices = @transform_5, window_bounds = array<i64: 8, 1, 4>}, {pipeline_mode = #tpu.pipeline_mode<synchronous>, transform_indices = @transform_6, window_bounds = array<i64: 8, 1, 4>}, {pipeline_mode = #tpu.pipeline_mode<synchronous>, transform_indices = @transform_7, window_bounds = array<i64: 8, 4, 32>}, {pipeline_mode = #tpu.pipeline_mode<synchronous>, transform_indices = @transform_8, window_bounds = array<i64: 1, 32>}, {pipeline_mode = #tpu.pipeline_mode<synchronous>, transform_indices = @transform_9, window_bounds = array<i64: 2, 8, 32>}]} {
    %c0 = arith.constant 0 : index
    %c0_0 = arith.constant 0 : index
    %c0_1 = arith.constant 0 : index
    %0 = vector.load %arg1[%c0, %c0_0, %c0_1] : memref<2x8x32xf32, #tpu.memory_space<vmem>>, vector<2x8x32xf32>
    %1 = vector.shape_cast %0 : vector<2x8x32xf32> to vector<16x32xf32>
    %cst = arith.constant 0.000000e+00 : f32
    %2 = vector.broadcast %cst : f32 to vector<16x32xf32>
    %c0_2 = arith.constant 0 : index
    %c0_3 = arith.constant 0 : index
    %c0_4 = arith.constant 0 : index
    %3 = vector.load %arg2[%c0_2, %c0_3, %c0_4] : memref<8x32x4xf32, #tpu.memory_space<vmem>>, vector<1x32x4xf32>
    %4 = vector.shape_cast %3 : vector<1x32x4xf32> to vector<32x4xf32>
    %cst_5 = arith.constant dense<0.000000e+00> : vector<16x4xf32>
    %5 = tpu.matmul %1, %4, %cst_5 {dimension_numbers = #tpu.dot_dimension_numbers<[1], [0], [0], [1], [0, 0, 1, 1], [], []>} : vector<16x32xf32>, vector<32x4xf32>, vector<16x4xf32> -> vector<16x4xf32>
    %c0_6 = arith.constant 0 : index
    %c0_7 = arith.constant 0 : index
    %c0_8 = arith.constant 0 : index
    %6 = vector.load %arg5[%c0_6, %c0_7, %c0_8] : memref<8x1x4xf32, #tpu.memory_space<vmem>>, vector<1x1x4xf32>
    %7 = vector.shape_cast %6 : vector<1x1x4xf32> to vector<1x4xf32>
    %8 = vector.broadcast %7 : vector<1x4xf32> to vector<16x4xf32>
    %9 = arith.addf %5, %8 : vector<16x4xf32>
    %10 = vector.shape_cast %9 : vector<16x4xf32> to vector<2x8x4xf32>
    %c0_9 = arith.constant 0 : index
    %c0_10 = arith.constant 0 : index
    %c0_11 = arith.constant 0 : index
    %11 = vector.load %arg3[%c0_9, %c0_10, %c0_11] : memref<8x32x4xf32, #tpu.memory_space<vmem>>, vector<1x32x4xf32>
    %12 = vector.shape_cast %11 : vector<1x32x4xf32> to vector<32x4xf32>
    %cst_12 = arith.constant dense<0.000000e+00> : vector<16x4xf32>
    %13 = tpu.matmul %1, %12, %cst_12 {dimension_numbers = #tpu.dot_dimension_numbers<[1], [0], [0], [1], [0, 0, 1, 1], [], []>} : vector<16x32xf32>, vector<32x4xf32>, vector<16x4xf32> -> vector<16x4xf32>
    %c0_13 = arith.constant 0 : index
    %c0_14 = arith.constant 0 : index
    %c0_15 = arith.constant 0 : index
    %14 = vector.load %arg6[%c0_13, %c0_14, %c0_15] : memref<8x1x4xf32, #tpu.memory_space<vmem>>, vector<1x1x4xf32>
    %15 = vector.shape_cast %14 : vector<1x1x4xf32> to vector<1x4xf32>
    %16 = vector.broadcast %15 : vector<1x4xf32> to vector<16x4xf32>
    %17 = arith.addf %13, %16 : vector<16x4xf32>
    %18 = vector.shape_cast %17 : vector<16x4xf32> to vector<2x8x4xf32>
    %c0_16 = arith.constant 0 : index
    %c0_17 = arith.constant 0 : index
    %c0_18 = arith.constant 0 : index
    %19 = vector.load %arg4[%c0_16, %c0_17, %c0_18] : memref<8x32x4xf32, #tpu.memory_space<vmem>>, vector<1x32x4xf32>
    %20 = vector.shape_cast %19 : vector<1x32x4xf32> to vector<32x4xf32>
    %cst_19 = arith.constant dense<0.000000e+00> : vector<16x4xf32>
    %21 = tpu.matmul %1, %20, %cst_19 {dimension_numbers = #tpu.dot_dimension_numbers<[1], [0], [0], [1], [0, 0, 1, 1], [], []>} : vector<16x32xf32>, vector<32x4xf32>, vector<16x4xf32> -> vector<16x4xf32>
    %c0_20 = arith.constant 0 : index
    %c0_21 = arith.constant 0 : index
    %c0_22 = arith.constant 0 : index
    %22 = vector.load %arg7[%c0_20, %c0_21, %c0_22] : memref<8x1x4xf32, #tpu.memory_space<vmem>>, vector<1x1x4xf32>
    %23 = vector.shape_cast %22 : vector<1x1x4xf32> to vector<1x4xf32>
    %24 = vector.broadcast %23 : vector<1x4xf32> to vector<16x4xf32>
    %25 = arith.addf %21, %24 : vector<16x4xf32>
    %26 = vector.shape_cast %25 : vector<16x4xf32> to vector<2x8x4xf32>
    "tpu.trace_start"() <{level = 10 : i32, message = "bnd,bmd->bnm"}> : () -> ()
    %cst_23 = arith.constant dense<0.000000e+00> : vector<2x8x8xf32>
    %27 = tpu.matmul %10, %18, %cst_23 {dimension_numbers = #tpu.dot_dimension_numbers<[2], [2], [1], [1], [0, 0, 0, 1, 1, 1], [0], [0]>} : vector<2x8x4xf32>, vector<2x8x4xf32>, vector<2x8x8xf32> -> vector<2x8x8xf32>
    "tpu.trace_stop"() : () -> ()
    %cst_24 = arith.constant dense<0xFF800000> : vector<2x8xf32>
    %28 = vector.multi_reduction <maximumf>, %27, %cst_24 [2] : vector<2x8x8xf32> to vector<2x8xf32>
    %29 = vector.shape_cast %28 : vector<2x8xf32> to vector<2x8x1xf32>
    %30 = vector.broadcast %29 : vector<2x8x1xf32> to vector<2x8x8xf32>
    %31 = arith.subf %27, %30 : vector<2x8x8xf32>
    %32 = math.exp %31 : vector<2x8x8xf32>
    %cst_25 = arith.constant dense<0.000000e+00> : vector<2x8xf32>
    %33 = vector.multi_reduction <add>, %32, %cst_25 [2] : vector<2x8x8xf32> to vector<2x8xf32>
    %34 = vector.shape_cast %33 : vector<2x8xf32> to vector<2x8x1xf32>
    "tpu.trace_start"() <{level = 10 : i32, message = "bnm,bmd->bnd"}> : () -> ()
    %cst_26 = arith.constant dense<0.000000e+00> : vector<2x8x4xf32>
    %35 = tpu.matmul %32, %26, %cst_26 {dimension_numbers = #tpu.dot_dimension_numbers<[2], [1], [1], [2], [0, 0, 0, 1, 1, 2], [0], [0]>} : vector<2x8x8xf32>, vector<2x8x4xf32>, vector<2x8x4xf32> -> vector<2x8x4xf32>
    "tpu.trace_stop"() : () -> ()
    %36 = vector.broadcast %34 : vector<2x8x1xf32> to vector<2x8x4xf32>
    %37 = arith.divf %35, %36 : vector<2x8x4xf32>
    %38 = vector.shape_cast %37 : vector<2x8x4xf32> to vector<16x4xf32>
    %c0_27 = arith.constant 0 : index
    %c0_28 = arith.constant 0 : index
    %c0_29 = arith.constant 0 : index
    %39 = vector.load %arg8[%c0_27, %c0_28, %c0_29] : memref<8x4x32xf32, #tpu.memory_space<vmem>>, vector<1x4x32xf32>
    %40 = vector.shape_cast %39 : vector<1x4x32xf32> to vector<4x32xf32>
    %cst_30 = arith.constant dense<0.000000e+00> : vector<16x32xf32>
    %41 = tpu.matmul %38, %40, %cst_30 {dimension_numbers = #tpu.dot_dimension_numbers<[1], [0], [0], [1], [0, 0, 1, 1], [], []>} : vector<16x4xf32>, vector<4x32xf32>, vector<16x32xf32> -> vector<16x32xf32>
    %42 = arith.addf %2, %41 : vector<16x32xf32>
    %c1 = arith.constant 1 : index
    %c0_31 = arith.constant 0 : index
    %c0_32 = arith.constant 0 : index
    %43 = vector.load %arg2[%c1, %c0_31, %c0_32] : memref<8x32x4xf32, #tpu.memory_space<vmem>>, vector<1x32x4xf32>
    %44 = vector.shape_cast %43 : vector<1x32x4xf32> to vector<32x4xf32>
    %cst_33 = arith.constant dense<0.000000e+00> : vector<16x4xf32>
    %45 = tpu.matmul %1, %44, %cst_33 {dimension_numbers = #tpu.dot_dimension_numbers<[1], [0], [0], [1], [0, 0, 1, 1], [], []>} : vector<16x32xf32>, vector<32x4xf32>, vector<16x4xf32> -> vector<16x4xf32>
    %c1_34 = arith.constant 1 : index
    %c0_35 = arith.constant 0 : index
    %c0_36 = arith.constant 0 : index
    %46 = vector.load %arg5[%c1_34, %c0_35, %c0_36] : memref<8x1x4xf32, #tpu.memory_space<vmem>>, vector<1x1x4xf32>
    %47 = vector.shape_cast %46 : vector<1x1x4xf32> to vector<1x4xf32>
    %48 = vector.broadcast %47 : vector<1x4xf32> to vector<16x4xf32>
    %49 = arith.addf %45, %48 : vector<16x4xf32>
    %50 = vector.shape_cast %49 : vector<16x4xf32> to vector<2x8x4xf32>
    %c1_37 = arith.constant 1 : index
    %c0_38 = arith.constant 0 : index
    %c0_39 = arith.constant 0 : index
    %51 = vector.load %arg3[%c1_37, %c0_38, %c0_39] : memref<8x32x4xf32, #tpu.memory_space<vmem>>, vector<1x32x4xf32>
    %52 = vector.shape_cast %51 : vector<1x32x4xf32> to vector<32x4xf32>
    %cst_40 = arith.constant dense<0.000000e+00> : vector<16x4xf32>
    %53 = tpu.matmul %1, %52, %cst_40 {dimension_numbers = #tpu.dot_dimension_numbers<[1], [0], [0], [1], [0, 0, 1, 1], [], []>} : vector<16x32xf32>, vector<32x4xf32>, vector<16x4xf32> -> vector<16x4xf32>
    %c1_41 = arith.constant 1 : index
    %c0_42 = arith.constant 0 : index
    %c0_43 = arith.constant 0 : index
    %54 = vector.load %arg6[%c1_41, %c0_42, %c0_43] : memref<8x1x4xf32, #tpu.memory_space<vmem>>, vector<1x1x4xf32>
    %55 = vector.shape_cast %54 : vector<1x1x4xf32> to vector<1x4xf32>
    %56 = vector.broadcast %55 : vector<1x4xf32> to vector<16x4xf32>
    %57 = arith.addf %53, %56 : vector<16x4xf32>
    %58 = vector.shape_cast %57 : vector<16x4xf32> to vector<2x8x4xf32>
    %c1_44 = arith.constant 1 : index
    %c0_45 = arith.constant 0 : index
    %c0_46 = arith.constant 0 : index
    %59 = vector.load %arg4[%c1_44, %c0_45, %c0_46] : memref<8x32x4xf32, #tpu.memory_space<vmem>>, vector<1x32x4xf32>
    %60 = vector.shape_cast %59 : vector<1x32x4xf32> to vector<32x4xf32>
    %cst_47 = arith.constant dense<0.000000e+00> : vector<16x4xf32>
    %61 = tpu.matmul %1, %60, %cst_47 {dimension_numbers = #tpu.dot_dimension_numbers<[1], [0], [0], [1], [0, 0, 1, 1], [], []>} : vector<16x32xf32>, vector<32x4xf32>, vector<16x4xf32> -> vector<16x4xf32>
    %c1_48 = arith.constant 1 : index
    %c0_49 = arith.constant 0 : index
    %c0_50 = arith.constant 0 : index
    %62 = vector.load %arg7[%c1_48, %c0_49, %c0_50] : memref<8x1x4xf32, #tpu.memory_space<vmem>>, vector<1x1x4xf32>
    %63 = vector.shape_cast %62 : vector<1x1x4xf32> to vector<1x4xf32>
    %64 = vector.broadcast %63 : vector<1x4xf32> to vector<16x4xf32>
    %65 = arith.addf %61, %64 : vector<16x4xf32>
    %66 = vector.shape_cast %65 : vector<16x4xf32> to vector<2x8x4xf32>
    "tpu.trace_start"() <{level = 10 : i32, message = "bnd,bmd->bnm"}> : () -> ()
    %cst_51 = arith.constant dense<0.000000e+00> : vector<2x8x8xf32>
    %67 = tpu.matmul %50, %58, %cst_51 {dimension_numbers = #tpu.dot_dimension_numbers<[2], [2], [1], [1], [0, 0, 0, 1, 1, 1], [0], [0]>} : vector<2x8x4xf32>, vector<2x8x4xf32>, vector<2x8x8xf32> -> vector<2x8x8xf32>
    "tpu.trace_stop"() : () -> ()
    %cst_52 = arith.constant dense<0xFF800000> : vector<2x8xf32>
    %68 = vector.multi_reduction <maximumf>, %67, %cst_52 [2] : vector<2x8x8xf32> to vector<2x8xf32>
    %69 = vector.shape_cast %68 : vector<2x8xf32> to vector<2x8x1xf32>
    %70 = vector.broadcast %69 : vector<2x8x1xf32> to vector<2x8x8xf32>
    %71 = arith.subf %67, %70 : vector<2x8x8xf32>
    %72 = math.exp %71 : vector<2x8x8xf32>
    %cst_53 = arith.constant dense<0.000000e+00> : vector<2x8xf32>
    %73 = vector.multi_reduction <add>, %72, %cst_53 [2] : vector<2x8x8xf32> to vector<2x8xf32>
    %74 = vector.shape_cast %73 : vector<2x8xf32> to vector<2x8x1xf32>
    "tpu.trace_start"() <{level = 10 : i32, message = "bnm,bmd->bnd"}> : () -> ()
    %cst_54 = arith.constant dense<0.000000e+00> : vector<2x8x4xf32>
    %75 = tpu.matmul %72, %66, %cst_54 {dimension_numbers = #tpu.dot_dimension_numbers<[2], [1], [1], [2], [0, 0, 0, 1, 1, 2], [0], [0]>} : vector<2x8x8xf32>, vector<2x8x4xf32>, vector<2x8x4xf32> -> vector<2x8x4xf32>
    "tpu.trace_stop"() : () -> ()
    %76 = vector.broadcast %74 : vector<2x8x1xf32> to vector<2x8x4xf32>
    %77 = arith.divf %75, %76 : vector<2x8x4xf32>
    %78 = vector.shape_cast %77 : vector<2x8x4xf32> to vector<16x4xf32>
    %c1_55 = arith.constant 1 : index
    %c0_56 = arith.constant 0 : index
    %c0_57 = arith.constant 0 : index
    %79 = vector.load %arg8[%c1_55, %c0_56, %c0_57] : memref<8x4x32xf32, #tpu.memory_space<vmem>>, vector<1x4x32xf32>
    %80 = vector.shape_cast %79 : vector<1x4x32xf32> to vector<4x32xf32>
    %cst_58 = arith.constant dense<0.000000e+00> : vector<16x32xf32>
    %81 = tpu.matmul %78, %80, %cst_58 {dimension_numbers = #tpu.dot_dimension_numbers<[1], [0], [0], [1], [0, 0, 1, 1], [], []>} : vector<16x4xf32>, vector<4x32xf32>, vector<16x32xf32> -> vector<16x32xf32>
    %82 = arith.addf %42, %81 : vector<16x32xf32>
    %c2 = arith.constant 2 : index
    %c0_59 = arith.constant 0 : index
    %c0_60 = arith.constant 0 : index
    %83 = vector.load %arg2[%c2, %c0_59, %c0_60] : memref<8x32x4xf32, #tpu.memory_space<vmem>>, vector<1x32x4xf32>
    %84 = vector.shape_cast %83 : vector<1x32x4xf32> to vector<32x4xf32>
    %cst_61 = arith.constant dense<0.000000e+00> : vector<16x4xf32>
    %85 = tpu.matmul %1, %84, %cst_61 {dimension_numbers = #tpu.dot_dimension_numbers<[1], [0], [0], [1], [0, 0, 1, 1], [], []>} : vector<16x32xf32>, vector<32x4xf32>, vector<16x4xf32> -> vector<16x4xf32>
    %c2_62 = arith.constant 2 : index
    %c0_63 = arith.constant 0 : index
    %c0_64 = arith.constant 0 : index
    %86 = vector.load %arg5[%c2_62, %c0_63, %c0_64] : memref<8x1x4xf32, #tpu.memory_space<vmem>>, vector<1x1x4xf32>
    %87 = vector.shape_cast %86 : vector<1x1x4xf32> to vector<1x4xf32>
    %88 = vector.broadcast %87 : vector<1x4xf32> to vector<16x4xf32>
    %89 = arith.addf %85, %88 : vector<16x4xf32>
    %90 = vector.shape_cast %89 : vector<16x4xf32> to vector<2x8x4xf32>
    %c2_65 = arith.constant 2 : index
    %c0_66 = arith.constant 0 : index
    %c0_67 = arith.constant 0 : index
    %91 = vector.load %arg3[%c2_65, %c0_66, %c0_67] : memref<8x32x4xf32, #tpu.memory_space<vmem>>, vector<1x32x4xf32>
    %92 = vector.shape_cast %91 : vector<1x32x4xf32> to vector<32x4xf32>
    %cst_68 = arith.constant dense<0.000000e+00> : vector<16x4xf32>
    %93 = tpu.matmul %1, %92, %cst_68 {dimension_numbers = #tpu.dot_dimension_numbers<[1], [0], [0], [1], [0, 0, 1, 1], [], []>} : vector<16x32xf32>, vector<32x4xf32>, vector<16x4xf32> -> vector<16x4xf32>
    %c2_69 = arith.constant 2 : index
    %c0_70 = arith.constant 0 : index
    %c0_71 = arith.constant 0 : index
    %94 = vector.load %arg6[%c2_69, %c0_70, %c0_71] : memref<8x1x4xf32, #tpu.memory_space<vmem>>, vector<1x1x4xf32>
    %95 = vector.shape_cast %94 : vector<1x1x4xf32> to vector<1x4xf32>
    %96 = vector.broadcast %95 : vector<1x4xf32> to vector<16x4xf32>
    %97 = arith.addf %93, %96 : vector<16x4xf32>
    %98 = vector.shape_cast %97 : vector<16x4xf32> to vector<2x8x4xf32>
    %c2_72 = arith.constant 2 : index
    %c0_73 = arith.constant 0 : index
    %c0_74 = arith.constant 0 : index
    %99 = vector.load %arg4[%c2_72, %c0_73, %c0_74] : memref<8x32x4xf32, #tpu.memory_space<vmem>>, vector<1x32x4xf32>
    %100 = vector.shape_cast %99 : vector<1x32x4xf32> to vector<32x4xf32>
    %cst_75 = arith.constant dense<0.000000e+00> : vector<16x4xf32>
    %101 = tpu.matmul %1, %100, %cst_75 {dimension_numbers = #tpu.dot_dimension_numbers<[1], [0], [0], [1], [0, 0, 1, 1], [], []>} : vector<16x32xf32>, vector<32x4xf32>, vector<16x4xf32> -> vector<16x4xf32>
    %c2_76 = arith.constant 2 : index
    %c0_77 = arith.constant 0 : index
    %c0_78 = arith.constant 0 : index
    %102 = vector.load %arg7[%c2_76, %c0_77, %c0_78] : memref<8x1x4xf32, #tpu.memory_space<vmem>>, vector<1x1x4xf32>
    %103 = vector.shape_cast %102 : vector<1x1x4xf32> to vector<1x4xf32>
    %104 = vector.broadcast %103 : vector<1x4xf32> to vector<16x4xf32>
    %105 = arith.addf %101, %104 : vector<16x4xf32>
    %106 = vector.shape_cast %105 : vector<16x4xf32> to vector<2x8x4xf32>
    "tpu.trace_start"() <{level = 10 : i32, message = "bnd,bmd->bnm"}> : () -> ()
    %cst_79 = arith.constant dense<0.000000e+00> : vector<2x8x8xf32>
    %107 = tpu.matmul %90, %98, %cst_79 {dimension_numbers = #tpu.dot_dimension_numbers<[2], [2], [1], [1], [0, 0, 0, 1, 1, 1], [0], [0]>} : vector<2x8x4xf32>, vector<2x8x4xf32>, vector<2x8x8xf32> -> vector<2x8x8xf32>
    "tpu.trace_stop"() : () -> ()
    %cst_80 = arith.constant dense<0xFF800000> : vector<2x8xf32>
    %108 = vector.multi_reduction <maximumf>, %107, %cst_80 [2] : vector<2x8x8xf32> to vector<2x8xf32>
    %109 = vector.shape_cast %108 : vector<2x8xf32> to vector<2x8x1xf32>
    %110 = vector.broadcast %109 : vector<2x8x1xf32> to vector<2x8x8xf32>
    %111 = arith.subf %107, %110 : vector<2x8x8xf32>
    %112 = math.exp %111 : vector<2x8x8xf32>
    %cst_81 = arith.constant dense<0.000000e+00> : vector<2x8xf32>
    %113 = vector.multi_reduction <add>, %112, %cst_81 [2] : vector<2x8x8xf32> to vector<2x8xf32>
    %114 = vector.shape_cast %113 : vector<2x8xf32> to vector<2x8x1xf32>
    "tpu.trace_start"() <{level = 10 : i32, message = "bnm,bmd->bnd"}> : () -> ()
    %cst_82 = arith.constant dense<0.000000e+00> : vector<2x8x4xf32>
    %115 = tpu.matmul %112, %106, %cst_82 {dimension_numbers = #tpu.dot_dimension_numbers<[2], [1], [1], [2], [0, 0, 0, 1, 1, 2], [0], [0]>} : vector<2x8x8xf32>, vector<2x8x4xf32>, vector<2x8x4xf32> -> vector<2x8x4xf32>
    "tpu.trace_stop"() : () -> ()
    %116 = vector.broadcast %114 : vector<2x8x1xf32> to vector<2x8x4xf32>
    %117 = arith.divf %115, %116 : vector<2x8x4xf32>
    %118 = vector.shape_cast %117 : vector<2x8x4xf32> to vector<16x4xf32>
    %c2_83 = arith.constant 2 : index
    %c0_84 = arith.constant 0 : index
    %c0_85 = arith.constant 0 : index
    %119 = vector.load %arg8[%c2_83, %c0_84, %c0_85] : memref<8x4x32xf32, #tpu.memory_space<vmem>>, vector<1x4x32xf32>
    %120 = vector.shape_cast %119 : vector<1x4x32xf32> to vector<4x32xf32>
    %cst_86 = arith.constant dense<0.000000e+00> : vector<16x32xf32>
    %121 = tpu.matmul %118, %120, %cst_86 {dimension_numbers = #tpu.dot_dimension_numbers<[1], [0], [0], [1], [0, 0, 1, 1], [], []>} : vector<16x4xf32>, vector<4x32xf32>, vector<16x32xf32> -> vector<16x32xf32>
    %122 = arith.addf %82, %121 : vector<16x32xf32>
    %c3 = arith.constant 3 : index
    %c0_87 = arith.constant 0 : index
    %c0_88 = arith.constant 0 : index
    %123 = vector.load %arg2[%c3, %c0_87, %c0_88] : memref<8x32x4xf32, #tpu.memory_space<vmem>>, vector<1x32x4xf32>
    %124 = vector.shape_cast %123 : vector<1x32x4xf32> to vector<32x4xf32>
    %cst_89 = arith.constant dense<0.000000e+00> : vector<16x4xf32>
    %125 = tpu.matmul %1, %124, %cst_89 {dimension_numbers = #tpu.dot_dimension_numbers<[1], [0], [0], [1], [0, 0, 1, 1], [], []>} : vector<16x32xf32>, vector<32x4xf32>, vector<16x4xf32> -> vector<16x4xf32>
    %c3_90 = arith.constant 3 : index
    %c0_91 = arith.constant 0 : index
    %c0_92 = arith.constant 0 : index
    %126 = vector.load %arg5[%c3_90, %c0_91, %c0_92] : memref<8x1x4xf32, #tpu.memory_space<vmem>>, vector<1x1x4xf32>
    %127 = vector.shape_cast %126 : vector<1x1x4xf32> to vector<1x4xf32>
    %128 = vector.broadcast %127 : vector<1x4xf32> to vector<16x4xf32>
    %129 = arith.addf %125, %128 : vector<16x4xf32>
    %130 = vector.shape_cast %129 : vector<16x4xf32> to vector<2x8x4xf32>
    %c3_93 = arith.constant 3 : index
    %c0_94 = arith.constant 0 : index
    %c0_95 = arith.constant 0 : index
    %131 = vector.load %arg3[%c3_93, %c0_94, %c0_95] : memref<8x32x4xf32, #tpu.memory_space<vmem>>, vector<1x32x4xf32>
    %132 = vector.shape_cast %131 : vector<1x32x4xf32> to vector<32x4xf32>
    %cst_96 = arith.constant dense<0.000000e+00> : vector<16x4xf32>
    %133 = tpu.matmul %1, %132, %cst_96 {dimension_numbers = #tpu.dot_dimension_numbers<[1], [0], [0], [1], [0, 0, 1, 1], [], []>} : vector<16x32xf32>, vector<32x4xf32>, vector<16x4xf32> -> vector<16x4xf32>
    %c3_97 = arith.constant 3 : index
    %c0_98 = arith.constant 0 : index
    %c0_99 = arith.constant 0 : index
    %134 = vector.load %arg6[%c3_97, %c0_98, %c0_99] : memref<8x1x4xf32, #tpu.memory_space<vmem>>, vector<1x1x4xf32>
    %135 = vector.shape_cast %134 : vector<1x1x4xf32> to vector<1x4xf32>
    %136 = vector.broadcast %135 : vector<1x4xf32> to vector<16x4xf32>
    %137 = arith.addf %133, %136 : vector<16x4xf32>
    %138 = vector.shape_cast %137 : vector<16x4xf32> to vector<2x8x4xf32>
    %c3_100 = arith.constant 3 : index
    %c0_101 = arith.constant 0 : index
    %c0_102 = arith.constant 0 : index
    %139 = vector.load %arg4[%c3_100, %c0_101, %c0_102] : memref<8x32x4xf32, #tpu.memory_space<vmem>>, vector<1x32x4xf32>
    %140 = vector.shape_cast %139 : vector<1x32x4xf32> to vector<32x4xf32>
    %cst_103 = arith.constant dense<0.000000e+00> : vector<16x4xf32>
    %141 = tpu.matmul %1, %140, %cst_103 {dimension_numbers = #tpu.dot_dimension_numbers<[1], [0], [0], [1], [0, 0, 1, 1], [], []>} : vector<16x32xf32>, vector<32x4xf32>, vector<16x4xf32> -> vector<16x4xf32>
    %c3_104 = arith.constant 3 : index
    %c0_105 = arith.constant 0 : index
    %c0_106 = arith.constant 0 : index
    %142 = vector.load %arg7[%c3_104, %c0_105, %c0_106] : memref<8x1x4xf32, #tpu.memory_space<vmem>>, vector<1x1x4xf32>
    %143 = vector.shape_cast %142 : vector<1x1x4xf32> to vector<1x4xf32>
    %144 = vector.broadcast %143 : vector<1x4xf32> to vector<16x4xf32>
    %145 = arith.addf %141, %144 : vector<16x4xf32>
    %146 = vector.shape_cast %145 : vector<16x4xf32> to vector<2x8x4xf32>
    "tpu.trace_start"() <{level = 10 : i32, message = "bnd,bmd->bnm"}> : () -> ()
    %cst_107 = arith.constant dense<0.000000e+00> : vector<2x8x8xf32>
    %147 = tpu.matmul %130, %138, %cst_107 {dimension_numbers = #tpu.dot_dimension_numbers<[2], [2], [1], [1], [0, 0, 0, 1, 1, 1], [0], [0]>} : vector<2x8x4xf32>, vector<2x8x4xf32>, vector<2x8x8xf32> -> vector<2x8x8xf32>
    "tpu.trace_stop"() : () -> ()
    %cst_108 = arith.constant dense<0xFF800000> : vector<2x8xf32>
    %148 = vector.multi_reduction <maximumf>, %147, %cst_108 [2] : vector<2x8x8xf32> to vector<2x8xf32>
    %149 = vector.shape_cast %148 : vector<2x8xf32> to vector<2x8x1xf32>
    %150 = vector.broadcast %149 : vector<2x8x1xf32> to vector<2x8x8xf32>
    %151 = arith.subf %147, %150 : vector<2x8x8xf32>
    %152 = math.exp %151 : vector<2x8x8xf32>
    %cst_109 = arith.constant dense<0.000000e+00> : vector<2x8xf32>
    %153 = vector.multi_reduction <add>, %152, %cst_109 [2] : vector<2x8x8xf32> to vector<2x8xf32>
    %154 = vector.shape_cast %153 : vector<2x8xf32> to vector<2x8x1xf32>
    "tpu.trace_start"() <{level = 10 : i32, message = "bnm,bmd->bnd"}> : () -> ()
    %cst_110 = arith.constant dense<0.000000e+00> : vector<2x8x4xf32>
    %155 = tpu.matmul %152, %146, %cst_110 {dimension_numbers = #tpu.dot_dimension_numbers<[2], [1], [1], [2], [0, 0, 0, 1, 1, 2], [0], [0]>} : vector<2x8x8xf32>, vector<2x8x4xf32>, vector<2x8x4xf32> -> vector<2x8x4xf32>
    "tpu.trace_stop"() : () -> ()
    %156 = vector.broadcast %154 : vector<2x8x1xf32> to vector<2x8x4xf32>
    %157 = arith.divf %155, %156 : vector<2x8x4xf32>
    %158 = vector.shape_cast %157 : vector<2x8x4xf32> to vector<16x4xf32>
    %c3_111 = arith.constant 3 : index
    %c0_112 = arith.constant 0 : index
    %c0_113 = arith.constant 0 : index
    %159 = vector.load %arg8[%c3_111, %c0_112, %c0_113] : memref<8x4x32xf32, #tpu.memory_space<vmem>>, vector<1x4x32xf32>
    %160 = vector.shape_cast %159 : vector<1x4x32xf32> to vector<4x32xf32>
    %cst_114 = arith.constant dense<0.000000e+00> : vector<16x32xf32>
    %161 = tpu.matmul %158, %160, %cst_114 {dimension_numbers = #tpu.dot_dimension_numbers<[1], [0], [0], [1], [0, 0, 1, 1], [], []>} : vector<16x4xf32>, vector<4x32xf32>, vector<16x32xf32> -> vector<16x32xf32>
    %162 = arith.addf %122, %161 : vector<16x32xf32>
    %c4 = arith.constant 4 : index
    %c0_115 = arith.constant 0 : index
    %c0_116 = arith.constant 0 : index
    %163 = vector.load %arg2[%c4, %c0_115, %c0_116] : memref<8x32x4xf32, #tpu.memory_space<vmem>>, vector<1x32x4xf32>
    %164 = vector.shape_cast %163 : vector<1x32x4xf32> to vector<32x4xf32>
    %cst_117 = arith.constant dense<0.000000e+00> : vector<16x4xf32>
    %165 = tpu.matmul %1, %164, %cst_117 {dimension_numbers = #tpu.dot_dimension_numbers<[1], [0], [0], [1], [0, 0, 1, 1], [], []>} : vector<16x32xf32>, vector<32x4xf32>, vector<16x4xf32> -> vector<16x4xf32>
    %c4_118 = arith.constant 4 : index
    %c0_119 = arith.constant 0 : index
    %c0_120 = arith.constant 0 : index
    %166 = vector.load %arg5[%c4_118, %c0_119, %c0_120] : memref<8x1x4xf32, #tpu.memory_space<vmem>>, vector<1x1x4xf32>
    %167 = vector.shape_cast %166 : vector<1x1x4xf32> to vector<1x4xf32>
    %168 = vector.broadcast %167 : vector<1x4xf32> to vector<16x4xf32>
    %169 = arith.addf %165, %168 : vector<16x4xf32>
    %170 = vector.shape_cast %169 : vector<16x4xf32> to vector<2x8x4xf32>
    %c4_121 = arith.constant 4 : index
    %c0_122 = arith.constant 0 : index
    %c0_123 = arith.constant 0 : index
    %171 = vector.load %arg3[%c4_121, %c0_122, %c0_123] : memref<8x32x4xf32, #tpu.memory_space<vmem>>, vector<1x32x4xf32>
    %172 = vector.shape_cast %171 : vector<1x32x4xf32> to vector<32x4xf32>
    %cst_124 = arith.constant dense<0.000000e+00> : vector<16x4xf32>
    %173 = tpu.matmul %1, %172, %cst_124 {dimension_numbers = #tpu.dot_dimension_numbers<[1], [0], [0], [1], [0, 0, 1, 1], [], []>} : vector<16x32xf32>, vector<32x4xf32>, vector<16x4xf32> -> vector<16x4xf32>
    %c4_125 = arith.constant 4 : index
    %c0_126 = arith.constant 0 : index
    %c0_127 = arith.constant 0 : index
    %174 = vector.load %arg6[%c4_125, %c0_126, %c0_127] : memref<8x1x4xf32, #tpu.memory_space<vmem>>, vector<1x1x4xf32>
    %175 = vector.shape_cast %174 : vector<1x1x4xf32> to vector<1x4xf32>
    %176 = vector.broadcast %175 : vector<1x4xf32> to vector<16x4xf32>
    %177 = arith.addf %173, %176 : vector<16x4xf32>
    %178 = vector.shape_cast %177 : vector<16x4xf32> to vector<2x8x4xf32>
    %c4_128 = arith.constant 4 : index
    %c0_129 = arith.constant 0 : index
    %c0_130 = arith.constant 0 : index
    %179 = vector.load %arg4[%c4_128, %c0_129, %c0_130] : memref<8x32x4xf32, #tpu.memory_space<vmem>>, vector<1x32x4xf32>
    %180 = vector.shape_cast %179 : vector<1x32x4xf32> to vector<32x4xf32>
    %cst_131 = arith.constant dense<0.000000e+00> : vector<16x4xf32>
    %181 = tpu.matmul %1, %180, %cst_131 {dimension_numbers = #tpu.dot_dimension_numbers<[1], [0], [0], [1], [0, 0, 1, 1], [], []>} : vector<16x32xf32>, vector<32x4xf32>, vector<16x4xf32> -> vector<16x4xf32>
    %c4_132 = arith.constant 4 : index
    %c0_133 = arith.constant 0 : index
    %c0_134 = arith.constant 0 : index
    %182 = vector.load %arg7[%c4_132, %c0_133, %c0_134] : memref<8x1x4xf32, #tpu.memory_space<vmem>>, vector<1x1x4xf32>
    %183 = vector.shape_cast %182 : vector<1x1x4xf32> to vector<1x4xf32>
    %184 = vector.broadcast %183 : vector<1x4xf32> to vector<16x4xf32>
    %185 = arith.addf %181, %184 : vector<16x4xf32>
    %186 = vector.shape_cast %185 : vector<16x4xf32> to vector<2x8x4xf32>
    "tpu.trace_start"() <{level = 10 : i32, message = "bnd,bmd->bnm"}> : () -> ()
    %cst_135 = arith.constant dense<0.000000e+00> : vector<2x8x8xf32>
    %187 = tpu.matmul %170, %178, %cst_135 {dimension_numbers = #tpu.dot_dimension_numbers<[2], [2], [1], [1], [0, 0, 0, 1, 1, 1], [0], [0]>} : vector<2x8x4xf32>, vector<2x8x4xf32>, vector<2x8x8xf32> -> vector<2x8x8xf32>
    "tpu.trace_stop"() : () -> ()
    %cst_136 = arith.constant dense<0xFF800000> : vector<2x8xf32>
    %188 = vector.multi_reduction <maximumf>, %187, %cst_136 [2] : vector<2x8x8xf32> to vector<2x8xf32>
    %189 = vector.shape_cast %188 : vector<2x8xf32> to vector<2x8x1xf32>
    %190 = vector.broadcast %189 : vector<2x8x1xf32> to vector<2x8x8xf32>
    %191 = arith.subf %187, %190 : vector<2x8x8xf32>
    %192 = math.exp %191 : vector<2x8x8xf32>
    %cst_137 = arith.constant dense<0.000000e+00> : vector<2x8xf32>
    %193 = vector.multi_reduction <add>, %192, %cst_137 [2] : vector<2x8x8xf32> to vector<2x8xf32>
    %194 = vector.shape_cast %193 : vector<2x8xf32> to vector<2x8x1xf32>
    "tpu.trace_start"() <{level = 10 : i32, message = "bnm,bmd->bnd"}> : () -> ()
    %cst_138 = arith.constant dense<0.000000e+00> : vector<2x8x4xf32>
    %195 = tpu.matmul %192, %186, %cst_138 {dimension_numbers = #tpu.dot_dimension_numbers<[2], [1], [1], [2], [0, 0, 0, 1, 1, 2], [0], [0]>} : vector<2x8x8xf32>, vector<2x8x4xf32>, vector<2x8x4xf32> -> vector<2x8x4xf32>
    "tpu.trace_stop"() : () -> ()
    %196 = vector.broadcast %194 : vector<2x8x1xf32> to vector<2x8x4xf32>
    %197 = arith.divf %195, %196 : vector<2x8x4xf32>
    %198 = vector.shape_cast %197 : vector<2x8x4xf32> to vector<16x4xf32>
    %c4_139 = arith.constant 4 : index
    %c0_140 = arith.constant 0 : index
    %c0_141 = arith.constant 0 : index
    %199 = vector.load %arg8[%c4_139, %c0_140, %c0_141] : memref<8x4x32xf32, #tpu.memory_space<vmem>>, vector<1x4x32xf32>
    %200 = vector.shape_cast %199 : vector<1x4x32xf32> to vector<4x32xf32>
    %cst_142 = arith.constant dense<0.000000e+00> : vector<16x32xf32>
    %201 = tpu.matmul %198, %200, %cst_142 {dimension_numbers = #tpu.dot_dimension_numbers<[1], [0], [0], [1], [0, 0, 1, 1], [], []>} : vector<16x4xf32>, vector<4x32xf32>, vector<16x32xf32> -> vector<16x32xf32>
    %202 = arith.addf %162, %201 : vector<16x32xf32>
    %c5 = arith.constant 5 : index
    %c0_143 = arith.constant 0 : index
    %c0_144 = arith.constant 0 : index
    %203 = vector.load %arg2[%c5, %c0_143, %c0_144] : memref<8x32x4xf32, #tpu.memory_space<vmem>>, vector<1x32x4xf32>
    %204 = vector.shape_cast %203 : vector<1x32x4xf32> to vector<32x4xf32>
    %cst_145 = arith.constant dense<0.000000e+00> : vector<16x4xf32>
    %205 = tpu.matmul %1, %204, %cst_145 {dimension_numbers = #tpu.dot_dimension_numbers<[1], [0], [0], [1], [0, 0, 1, 1], [], []>} : vector<16x32xf32>, vector<32x4xf32>, vector<16x4xf32> -> vector<16x4xf32>
    %c5_146 = arith.constant 5 : index
    %c0_147 = arith.constant 0 : index
    %c0_148 = arith.constant 0 : index
    %206 = vector.load %arg5[%c5_146, %c0_147, %c0_148] : memref<8x1x4xf32, #tpu.memory_space<vmem>>, vector<1x1x4xf32>
    %207 = vector.shape_cast %206 : vector<1x1x4xf32> to vector<1x4xf32>
    %208 = vector.broadcast %207 : vector<1x4xf32> to vector<16x4xf32>
    %209 = arith.addf %205, %208 : vector<16x4xf32>
    %210 = vector.shape_cast %209 : vector<16x4xf32> to vector<2x8x4xf32>
    %c5_149 = arith.constant 5 : index
    %c0_150 = arith.constant 0 : index
    %c0_151 = arith.constant 0 : index
    %211 = vector.load %arg3[%c5_149, %c0_150, %c0_151] : memref<8x32x4xf32, #tpu.memory_space<vmem>>, vector<1x32x4xf32>
    %212 = vector.shape_cast %211 : vector<1x32x4xf32> to vector<32x4xf32>
    %cst_152 = arith.constant dense<0.000000e+00> : vector<16x4xf32>
    %213 = tpu.matmul %1, %212, %cst_152 {dimension_numbers = #tpu.dot_dimension_numbers<[1], [0], [0], [1], [0, 0, 1, 1], [], []>} : vector<16x32xf32>, vector<32x4xf32>, vector<16x4xf32> -> vector<16x4xf32>
    %c5_153 = arith.constant 5 : index
    %c0_154 = arith.constant 0 : index
    %c0_155 = arith.constant 0 : index
    %214 = vector.load %arg6[%c5_153, %c0_154, %c0_155] : memref<8x1x4xf32, #tpu.memory_space<vmem>>, vector<1x1x4xf32>
    %215 = vector.shape_cast %214 : vector<1x1x4xf32> to vector<1x4xf32>
    %216 = vector.broadcast %215 : vector<1x4xf32> to vector<16x4xf32>
    %217 = arith.addf %213, %216 : vector<16x4xf32>
    %218 = vector.shape_cast %217 : vector<16x4xf32> to vector<2x8x4xf32>
    %c5_156 = arith.constant 5 : index
    %c0_157 = arith.constant 0 : index
    %c0_158 = arith.constant 0 : index
    %219 = vector.load %arg4[%c5_156, %c0_157, %c0_158] : memref<8x32x4xf32, #tpu.memory_space<vmem>>, vector<1x32x4xf32>
    %220 = vector.shape_cast %219 : vector<1x32x4xf32> to vector<32x4xf32>
    %cst_159 = arith.constant dense<0.000000e+00> : vector<16x4xf32>
    %221 = tpu.matmul %1, %220, %cst_159 {dimension_numbers = #tpu.dot_dimension_numbers<[1], [0], [0], [1], [0, 0, 1, 1], [], []>} : vector<16x32xf32>, vector<32x4xf32>, vector<16x4xf32> -> vector<16x4xf32>
    %c5_160 = arith.constant 5 : index
    %c0_161 = arith.constant 0 : index
    %c0_162 = arith.constant 0 : index
    %222 = vector.load %arg7[%c5_160, %c0_161, %c0_162] : memref<8x1x4xf32, #tpu.memory_space<vmem>>, vector<1x1x4xf32>
    %223 = vector.shape_cast %222 : vector<1x1x4xf32> to vector<1x4xf32>
    %224 = vector.broadcast %223 : vector<1x4xf32> to vector<16x4xf32>
    %225 = arith.addf %221, %224 : vector<16x4xf32>
    %226 = vector.shape_cast %225 : vector<16x4xf32> to vector<2x8x4xf32>
    "tpu.trace_start"() <{level = 10 : i32, message = "bnd,bmd->bnm"}> : () -> ()
    %cst_163 = arith.constant dense<0.000000e+00> : vector<2x8x8xf32>
    %227 = tpu.matmul %210, %218, %cst_163 {dimension_numbers = #tpu.dot_dimension_numbers<[2], [2], [1], [1], [0, 0, 0, 1, 1, 1], [0], [0]>} : vector<2x8x4xf32>, vector<2x8x4xf32>, vector<2x8x8xf32> -> vector<2x8x8xf32>
    "tpu.trace_stop"() : () -> ()
    %cst_164 = arith.constant dense<0xFF800000> : vector<2x8xf32>
    %228 = vector.multi_reduction <maximumf>, %227, %cst_164 [2] : vector<2x8x8xf32> to vector<2x8xf32>
    %229 = vector.shape_cast %228 : vector<2x8xf32> to vector<2x8x1xf32>
    %230 = vector.broadcast %229 : vector<2x8x1xf32> to vector<2x8x8xf32>
    %231 = arith.subf %227, %230 : vector<2x8x8xf32>
    %232 = math.exp %231 : vector<2x8x8xf32>
    %cst_165 = arith.constant dense<0.000000e+00> : vector<2x8xf32>
    %233 = vector.multi_reduction <add>, %232, %cst_165 [2] : vector<2x8x8xf32> to vector<2x8xf32>
    %234 = vector.shape_cast %233 : vector<2x8xf32> to vector<2x8x1xf32>
    "tpu.trace_start"() <{level = 10 : i32, message = "bnm,bmd->bnd"}> : () -> ()
    %cst_166 = arith.constant dense<0.000000e+00> : vector<2x8x4xf32>
    %235 = tpu.matmul %232, %226, %cst_166 {dimension_numbers = #tpu.dot_dimension_numbers<[2], [1], [1], [2], [0, 0, 0, 1, 1, 2], [0], [0]>} : vector<2x8x8xf32>, vector<2x8x4xf32>, vector<2x8x4xf32> -> vector<2x8x4xf32>
    "tpu.trace_stop"() : () -> ()
    %236 = vector.broadcast %234 : vector<2x8x1xf32> to vector<2x8x4xf32>
    %237 = arith.divf %235, %236 : vector<2x8x4xf32>
    %238 = vector.shape_cast %237 : vector<2x8x4xf32> to vector<16x4xf32>
    %c5_167 = arith.constant 5 : index
    %c0_168 = arith.constant 0 : index
    %c0_169 = arith.constant 0 : index
    %239 = vector.load %arg8[%c5_167, %c0_168, %c0_169] : memref<8x4x32xf32, #tpu.memory_space<vmem>>, vector<1x4x32xf32>
    %240 = vector.shape_cast %239 : vector<1x4x32xf32> to vector<4x32xf32>
    %cst_170 = arith.constant dense<0.000000e+00> : vector<16x32xf32>
    %241 = tpu.matmul %238, %240, %cst_170 {dimension_numbers = #tpu.dot_dimension_numbers<[1], [0], [0], [1], [0, 0, 1, 1], [], []>} : vector<16x4xf32>, vector<4x32xf32>, vector<16x32xf32> -> vector<16x32xf32>
    %242 = arith.addf %202, %241 : vector<16x32xf32>
    %c6 = arith.constant 6 : index
    %c0_171 = arith.constant 0 : index
    %c0_172 = arith.constant 0 : index
    %243 = vector.load %arg2[%c6, %c0_171, %c0_172] : memref<8x32x4xf32, #tpu.memory_space<vmem>>, vector<1x32x4xf32>
    %244 = vector.shape_cast %243 : vector<1x32x4xf32> to vector<32x4xf32>
    %cst_173 = arith.constant dense<0.000000e+00> : vector<16x4xf32>
    %245 = tpu.matmul %1, %244, %cst_173 {dimension_numbers = #tpu.dot_dimension_numbers<[1], [0], [0], [1], [0, 0, 1, 1], [], []>} : vector<16x32xf32>, vector<32x4xf32>, vector<16x4xf32> -> vector<16x4xf32>
    %c6_174 = arith.constant 6 : index
    %c0_175 = arith.constant 0 : index
    %c0_176 = arith.constant 0 : index
    %246 = vector.load %arg5[%c6_174, %c0_175, %c0_176] : memref<8x1x4xf32, #tpu.memory_space<vmem>>, vector<1x1x4xf32>
    %247 = vector.shape_cast %246 : vector<1x1x4xf32> to vector<1x4xf32>
    %248 = vector.broadcast %247 : vector<1x4xf32> to vector<16x4xf32>
    %249 = arith.addf %245, %248 : vector<16x4xf32>
    %250 = vector.shape_cast %249 : vector<16x4xf32> to vector<2x8x4xf32>
    %c6_177 = arith.constant 6 : index
    %c0_178 = arith.constant 0 : index
    %c0_179 = arith.constant 0 : index
    %251 = vector.load %arg3[%c6_177, %c0_178, %c0_179] : memref<8x32x4xf32, #tpu.memory_space<vmem>>, vector<1x32x4xf32>
    %252 = vector.shape_cast %251 : vector<1x32x4xf32> to vector<32x4xf32>
    %cst_180 = arith.constant dense<0.000000e+00> : vector<16x4xf32>
    %253 = tpu.matmul %1, %252, %cst_180 {dimension_numbers = #tpu.dot_dimension_numbers<[1], [0], [0], [1], [0, 0, 1, 1], [], []>} : vector<16x32xf32>, vector<32x4xf32>, vector<16x4xf32> -> vector<16x4xf32>
    %c6_181 = arith.constant 6 : index
    %c0_182 = arith.constant 0 : index
    %c0_183 = arith.constant 0 : index
    %254 = vector.load %arg6[%c6_181, %c0_182, %c0_183] : memref<8x1x4xf32, #tpu.memory_space<vmem>>, vector<1x1x4xf32>
    %255 = vector.shape_cast %254 : vector<1x1x4xf32> to vector<1x4xf32>
    %256 = vector.broadcast %255 : vector<1x4xf32> to vector<16x4xf32>
    %257 = arith.addf %253, %256 : vector<16x4xf32>
    %258 = vector.shape_cast %257 : vector<16x4xf32> to vector<2x8x4xf32>
    %c6_184 = arith.constant 6 : index
    %c0_185 = arith.constant 0 : index
    %c0_186 = arith.constant 0 : index
    %259 = vector.load %arg4[%c6_184, %c0_185, %c0_186] : memref<8x32x4xf32, #tpu.memory_space<vmem>>, vector<1x32x4xf32>
    %260 = vector.shape_cast %259 : vector<1x32x4xf32> to vector<32x4xf32>
    %cst_187 = arith.constant dense<0.000000e+00> : vector<16x4xf32>
    %261 = tpu.matmul %1, %260, %cst_187 {dimension_numbers = #tpu.dot_dimension_numbers<[1], [0], [0], [1], [0, 0, 1, 1], [], []>} : vector<16x32xf32>, vector<32x4xf32>, vector<16x4xf32> -> vector<16x4xf32>
    %c6_188 = arith.constant 6 : index
    %c0_189 = arith.constant 0 : index
    %c0_190 = arith.constant 0 : index
    %262 = vector.load %arg7[%c6_188, %c0_189, %c0_190] : memref<8x1x4xf32, #tpu.memory_space<vmem>>, vector<1x1x4xf32>
    %263 = vector.shape_cast %262 : vector<1x1x4xf32> to vector<1x4xf32>
    %264 = vector.broadcast %263 : vector<1x4xf32> to vector<16x4xf32>
    %265 = arith.addf %261, %264 : vector<16x4xf32>
    %266 = vector.shape_cast %265 : vector<16x4xf32> to vector<2x8x4xf32>
    "tpu.trace_start"() <{level = 10 : i32, message = "bnd,bmd->bnm"}> : () -> ()
    %cst_191 = arith.constant dense<0.000000e+00> : vector<2x8x8xf32>
    %267 = tpu.matmul %250, %258, %cst_191 {dimension_numbers = #tpu.dot_dimension_numbers<[2], [2], [1], [1], [0, 0, 0, 1, 1, 1], [0], [0]>} : vector<2x8x4xf32>, vector<2x8x4xf32>, vector<2x8x8xf32> -> vector<2x8x8xf32>
    "tpu.trace_stop"() : () -> ()
    %cst_192 = arith.constant dense<0xFF800000> : vector<2x8xf32>
    %268 = vector.multi_reduction <maximumf>, %267, %cst_192 [2] : vector<2x8x8xf32> to vector<2x8xf32>
    %269 = vector.shape_cast %268 : vector<2x8xf32> to vector<2x8x1xf32>
    %270 = vector.broadcast %269 : vector<2x8x1xf32> to vector<2x8x8xf32>
    %271 = arith.subf %267, %270 : vector<2x8x8xf32>
    %272 = math.exp %271 : vector<2x8x8xf32>
    %cst_193 = arith.constant dense<0.000000e+00> : vector<2x8xf32>
    %273 = vector.multi_reduction <add>, %272, %cst_193 [2] : vector<2x8x8xf32> to vector<2x8xf32>
    %274 = vector.shape_cast %273 : vector<2x8xf32> to vector<2x8x1xf32>
    "tpu.trace_start"() <{level = 10 : i32, message = "bnm,bmd->bnd"}> : () -> ()
    %cst_194 = arith.constant dense<0.000000e+00> : vector<2x8x4xf32>
    %275 = tpu.matmul %272, %266, %cst_194 {dimension_numbers = #tpu.dot_dimension_numbers<[2], [1], [1], [2], [0, 0, 0, 1, 1, 2], [0], [0]>} : vector<2x8x8xf32>, vector<2x8x4xf32>, vector<2x8x4xf32> -> vector<2x8x4xf32>
    "tpu.trace_stop"() : () -> ()
    %276 = vector.broadcast %274 : vector<2x8x1xf32> to vector<2x8x4xf32>
    %277 = arith.divf %275, %276 : vector<2x8x4xf32>
    %278 = vector.shape_cast %277 : vector<2x8x4xf32> to vector<16x4xf32>
    %c6_195 = arith.constant 6 : index
    %c0_196 = arith.constant 0 : index
    %c0_197 = arith.constant 0 : index
    %279 = vector.load %arg8[%c6_195, %c0_196, %c0_197] : memref<8x4x32xf32, #tpu.memory_space<vmem>>, vector<1x4x32xf32>
    %280 = vector.shape_cast %279 : vector<1x4x32xf32> to vector<4x32xf32>
    %cst_198 = arith.constant dense<0.000000e+00> : vector<16x32xf32>
    %281 = tpu.matmul %278, %280, %cst_198 {dimension_numbers = #tpu.dot_dimension_numbers<[1], [0], [0], [1], [0, 0, 1, 1], [], []>} : vector<16x4xf32>, vector<4x32xf32>, vector<16x32xf32> -> vector<16x32xf32>
    %282 = arith.addf %242, %281 : vector<16x32xf32>
    %c7 = arith.constant 7 : index
    %c0_199 = arith.constant 0 : index
    %c0_200 = arith.constant 0 : index
    %283 = vector.load %arg2[%c7, %c0_199, %c0_200] : memref<8x32x4xf32, #tpu.memory_space<vmem>>, vector<1x32x4xf32>
    %284 = vector.shape_cast %283 : vector<1x32x4xf32> to vector<32x4xf32>
    %cst_201 = arith.constant dense<0.000000e+00> : vector<16x4xf32>
    %285 = tpu.matmul %1, %284, %cst_201 {dimension_numbers = #tpu.dot_dimension_numbers<[1], [0], [0], [1], [0, 0, 1, 1], [], []>} : vector<16x32xf32>, vector<32x4xf32>, vector<16x4xf32> -> vector<16x4xf32>
    %c7_202 = arith.constant 7 : index
    %c0_203 = arith.constant 0 : index
    %c0_204 = arith.constant 0 : index
    %286 = vector.load %arg5[%c7_202, %c0_203, %c0_204] : memref<8x1x4xf32, #tpu.memory_space<vmem>>, vector<1x1x4xf32>
    %287 = vector.shape_cast %286 : vector<1x1x4xf32> to vector<1x4xf32>
    %288 = vector.broadcast %287 : vector<1x4xf32> to vector<16x4xf32>
    %289 = arith.addf %285, %288 : vector<16x4xf32>
    %290 = vector.shape_cast %289 : vector<16x4xf32> to vector<2x8x4xf32>
    %c7_205 = arith.constant 7 : index
    %c0_206 = arith.constant 0 : index
    %c0_207 = arith.constant 0 : index
    %291 = vector.load %arg3[%c7_205, %c0_206, %c0_207] : memref<8x32x4xf32, #tpu.memory_space<vmem>>, vector<1x32x4xf32>
    %292 = vector.shape_cast %291 : vector<1x32x4xf32> to vector<32x4xf32>
    %cst_208 = arith.constant dense<0.000000e+00> : vector<16x4xf32>
    %293 = tpu.matmul %1, %292, %cst_208 {dimension_numbers = #tpu.dot_dimension_numbers<[1], [0], [0], [1], [0, 0, 1, 1], [], []>} : vector<16x32xf32>, vector<32x4xf32>, vector<16x4xf32> -> vector<16x4xf32>
    %c7_209 = arith.constant 7 : index
    %c0_210 = arith.constant 0 : index
    %c0_211 = arith.constant 0 : index
    %294 = vector.load %arg6[%c7_209, %c0_210, %c0_211] : memref<8x1x4xf32, #tpu.memory_space<vmem>>, vector<1x1x4xf32>
    %295 = vector.shape_cast %294 : vector<1x1x4xf32> to vector<1x4xf32>
    %296 = vector.broadcast %295 : vector<1x4xf32> to vector<16x4xf32>
    %297 = arith.addf %293, %296 : vector<16x4xf32>
    %298 = vector.shape_cast %297 : vector<16x4xf32> to vector<2x8x4xf32>
    %c7_212 = arith.constant 7 : index
    %c0_213 = arith.constant 0 : index
    %c0_214 = arith.constant 0 : index
    %299 = vector.load %arg4[%c7_212, %c0_213, %c0_214] : memref<8x32x4xf32, #tpu.memory_space<vmem>>, vector<1x32x4xf32>
    %300 = vector.shape_cast %299 : vector<1x32x4xf32> to vector<32x4xf32>
    %cst_215 = arith.constant dense<0.000000e+00> : vector<16x4xf32>
    %301 = tpu.matmul %1, %300, %cst_215 {dimension_numbers = #tpu.dot_dimension_numbers<[1], [0], [0], [1], [0, 0, 1, 1], [], []>} : vector<16x32xf32>, vector<32x4xf32>, vector<16x4xf32> -> vector<16x4xf32>
    %c7_216 = arith.constant 7 : index
    %c0_217 = arith.constant 0 : index
    %c0_218 = arith.constant 0 : index
    %302 = vector.load %arg7[%c7_216, %c0_217, %c0_218] : memref<8x1x4xf32, #tpu.memory_space<vmem>>, vector<1x1x4xf32>
    %303 = vector.shape_cast %302 : vector<1x1x4xf32> to vector<1x4xf32>
    %304 = vector.broadcast %303 : vector<1x4xf32> to vector<16x4xf32>
    %305 = arith.addf %301, %304 : vector<16x4xf32>
    %306 = vector.shape_cast %305 : vector<16x4xf32> to vector<2x8x4xf32>
    "tpu.trace_start"() <{level = 10 : i32, message = "bnd,bmd->bnm"}> : () -> ()
    %cst_219 = arith.constant dense<0.000000e+00> : vector<2x8x8xf32>
    %307 = tpu.matmul %290, %298, %cst_219 {dimension_numbers = #tpu.dot_dimension_numbers<[2], [2], [1], [1], [0, 0, 0, 1, 1, 1], [0], [0]>} : vector<2x8x4xf32>, vector<2x8x4xf32>, vector<2x8x8xf32> -> vector<2x8x8xf32>
    "tpu.trace_stop"() : () -> ()
    %cst_220 = arith.constant dense<0xFF800000> : vector<2x8xf32>
    %308 = vector.multi_reduction <maximumf>, %307, %cst_220 [2] : vector<2x8x8xf32> to vector<2x8xf32>
    %309 = vector.shape_cast %308 : vector<2x8xf32> to vector<2x8x1xf32>
    %310 = vector.broadcast %309 : vector<2x8x1xf32> to vector<2x8x8xf32>
    %311 = arith.subf %307, %310 : vector<2x8x8xf32>
    %312 = math.exp %311 : vector<2x8x8xf32>
    %cst_221 = arith.constant dense<0.000000e+00> : vector<2x8xf32>
    %313 = vector.multi_reduction <add>, %312, %cst_221 [2] : vector<2x8x8xf32> to vector<2x8xf32>
    %314 = vector.shape_cast %313 : vector<2x8xf32> to vector<2x8x1xf32>
    "tpu.trace_start"() <{level = 10 : i32, message = "bnm,bmd->bnd"}> : () -> ()
    %cst_222 = arith.constant dense<0.000000e+00> : vector<2x8x4xf32>
    %315 = tpu.matmul %312, %306, %cst_222 {dimension_numbers = #tpu.dot_dimension_numbers<[2], [1], [1], [2], [0, 0, 0, 1, 1, 2], [0], [0]>} : vector<2x8x8xf32>, vector<2x8x4xf32>, vector<2x8x4xf32> -> vector<2x8x4xf32>
    "tpu.trace_stop"() : () -> ()
    %316 = vector.broadcast %314 : vector<2x8x1xf32> to vector<2x8x4xf32>
    %317 = arith.divf %315, %316 : vector<2x8x4xf32>
    %318 = vector.shape_cast %317 : vector<2x8x4xf32> to vector<16x4xf32>
    %c7_223 = arith.constant 7 : index
    %c0_224 = arith.constant 0 : index
    %c0_225 = arith.constant 0 : index
    %319 = vector.load %arg8[%c7_223, %c0_224, %c0_225] : memref<8x4x32xf32, #tpu.memory_space<vmem>>, vector<1x4x32xf32>
    %320 = vector.shape_cast %319 : vector<1x4x32xf32> to vector<4x32xf32>
    %cst_226 = arith.constant dense<0.000000e+00> : vector<16x32xf32>
    %321 = tpu.matmul %318, %320, %cst_226 {dimension_numbers = #tpu.dot_dimension_numbers<[1], [0], [0], [1], [0, 0, 1, 1], [], []>} : vector<16x4xf32>, vector<4x32xf32>, vector<16x32xf32> -> vector<16x32xf32>
    %322 = arith.addf %282, %321 : vector<16x32xf32>
    %c0_227 = arith.constant 0 : index
    %c0_228 = arith.constant 0 : index
    %323 = vector.load %arg9[%c0_227, %c0_228] : memref<1x32xf32, #tpu.memory_space<vmem>>, vector<1x32xf32>
    %324 = vector.broadcast %323 : vector<1x32xf32> to vector<16x32xf32>
    %325 = arith.addf %322, %324 : vector<16x32xf32>
    %326 = vector.shape_cast %325 : vector<16x32xf32> to vector<2x8x32xf32>
    %c0_229 = arith.constant 0 : index
    %c0_230 = arith.constant 0 : index
    %c0_231 = arith.constant 0 : index
    %327 = vector.load %arg10[%c0_229, %c0_230, %c0_231] : memref<2x8x32xf32, #tpu.memory_space<vmem>>, vector<2x8x32xf32>
    tpu.vector_store %arg10[%c0_229, %c0_230, %c0_231], %326 {strides = array<i32>} : memref<2x8x32xf32, #tpu.memory_space<vmem>>, vector<2x8x32xf32>,
    return
  }
  func.func @transform_0(%arg0: i32) -> (i32, i32, i32) {
    %c0_i32 = arith.constant 0 : i32
    %c0_i32_0 = arith.constant 0 : i32
    %c0_i32_1 = arith.constant 0 : i32
    %c0_i32_2 = arith.constant 0 : i32
    return %c0_i32, %c0_i32_0, %c0_i32_1 : i32, i32, i32
  }
  func.func @transform_1(%arg0: i32) -> (i32, i32, i32) {
    %c0_i32 = arith.constant 0 : i32
    %c0_i32_0 = arith.constant 0 : i32
    %c0_i32_1 = arith.constant 0 : i32
    %c0_i32_2 = arith.constant 0 : i32
    return %c0_i32, %c0_i32_0, %c0_i32_1 : i32, i32, i32
  }
  func.func @transform_2(%arg0: i32) -> (i32, i32, i32) {
    %c0_i32 = arith.constant 0 : i32
    %c0_i32_0 = arith.constant 0 : i32
    %c0_i32_1 = arith.constant 0 : i32
    %c0_i32_2 = arith.constant 0 : i32
    return %c0_i32, %c0_i32_0, %c0_i32_1 : i32, i32, i32
  }
  func.func @transform_3(%arg0: i32) -> (i32, i32, i32) {
    %c0_i32 = arith.constant 0 : i32
    %c0_i32_0 = arith.constant 0 : i32
    %c0_i32_1 = arith.constant 0 : i32
    %c0_i32_2 = arith.constant 0 : i32
    return %c0_i32, %c0_i32_0, %c0_i32_1 : i32, i32, i32
  }
  func.func @transform_4(%arg0: i32) -> (i32, i32, i32) {
    %c0_i32 = arith.constant 0 : i32
    %c0_i32_0 = arith.constant 0 : i32
    %c0_i32_1 = arith.constant 0 : i32
    %c0_i32_2 = arith.constant 0 : i32
    return %c0_i32, %c0_i32_0, %c0_i32_1 : i32, i32, i32
  }
  func.func @transform_5(%arg0: i32) -> (i32, i32, i32) {
    %c0_i32 = arith.constant 0 : i32
    %c0_i32_0 = arith.constant 0 : i32
    %c0_i32_1 = arith.constant 0 : i32
    %c0_i32_2 = arith.constant 0 : i32
    return %c0_i32, %c0_i32_0, %c0_i32_1 : i32, i32, i32
  }
  func.func @transform_6(%arg0: i32) -> (i32, i32, i32) {
    %c0_i32 = arith.constant 0 : i32
    %c0_i32_0 = arith.constant 0 : i32
    %c0_i32_1 = arith.constant 0 : i32
    %c0_i32_2 = arith.constant 0 : i32
    return %c0_i32, %c0_i32_0, %c0_i32_1 : i32, i32, i32
  }
  func.func @transform_7(%arg0: i32) -> (i32, i32, i32) {
    %c0_i32 = arith.constant 0 : i32
    %c0_i32_0 = arith.constant 0 : i32
    %c0_i32_1 = arith.constant 0 : i32
    %c0_i32_2 = arith.constant 0 : i32
    return %c0_i32, %c0_i32_0, %c0_i32_1 : i32, i32, i32
  }
  func.func @transform_8(%arg0: i32) -> (i32, i32) {
    %c0_i32 = arith.constant 0 : i32
    %c0_i32_0 = arith.constant 0 : i32
    %c0_i32_1 = arith.constant 0 : i32
    return %c0_i32, %c0_i32_0 : i32, i32
  }
  func.func @transform_9(%arg0: i32) -> (i32, i32, i32) {
    %c0_i32 = arith.constant 0 : i32
    %c0_i32_0 = arith.constant 0 : i32
    %c0_i32_1 = arith.constant 0 : i32
    %c0_i32_2 = arith.constant 0 : i32
    return %c0_i32, %c0_i32_0, %c0_i32_1 : i32, i32, i32
  }
}

</mosaic_0001>

<llo_original>
// kernel: tpu_custom_call.1
$region0: #{tpu_custom_call.1}
  #allocation0 [shape = 'u32[]', space=smem, size = 0x4, offset = 0x4, fixed_abs, tag = 'smem constant byte address 0x4 - core index']
  #allocation1 [shape = 'u32[144,128]{1,0:T(1,128)}', space=vmem, size = 0x12000, scoped, tag = 'internal scratch']
  %s0 = inlined_call_operand.vmem [shape: f32[2,8,32], index: 0, kind: input, shape index: {}]
  %s1 = inlined_call_operand.vmem [shape: f32[8,32,4], index: 1, kind: input, shape index: {}]
  %s2 = inlined_call_operand.vmem [shape: f32[8,32,4], index: 2, kind: input, shape index: {}]
  %s3 = inlined_call_operand.vmem [shape: f32[8,32,4], index: 3, kind: input, shape index: {}]
  %s4 = inlined_call_operand.vmem [shape: f32[8,1,4], index: 4, kind: input, shape index: {}]
  %s5 = inlined_call_operand.vmem [shape: f32[8,1,4], index: 5, kind: input, shape index: {}]
  %s6 = inlined_call_operand.vmem [shape: f32[8,1,4], index: 6, kind: input, shape index: {}]
  %s7 = inlined_call_operand.vmem [shape: f32[8,4,32], index: 7, kind: input, shape index: {}]
  %s8 = inlined_call_operand.vmem [shape: f32[1,32], index: 8, kind: input, shape index: {}]
  %s9 = inlined_call_operand.hbm [shape: f32[2,8,32], index: 9, kind: output, shape index: {}]
  %s10 = sld [smem:[#allocation0]]
  $region46: #{tpu_custom_call.1} parent=0
    _
  %s12 = ssub.s32 1, %s10
  %s13 = scalar_select 0, %s12, %s10
  $region1: #{tpu_custom_call.1} parent=0
    #allocation2 [shape = 'u8[8192]{0}', space=vmem, size = 0x2000, scoped, tag = 'output window, operand 0, single buffered']
    #allocation3 [shape = 's32[1]{0}', space=sflag, size = 0x4, scoped, tag = 'scoped memory for tpu_custom_call.1']
    %14 = vsyncpa [#allocation3], 0
    // Predicated region
    $region2: #{tpu_custom_call.1} parent=1 // pred_check
      _
    $region3: #{tpu_custom_call.1} parent=1 // pred_check_branch
      %16 = sbr.rel (0) target = $region5
    $region4: #{tpu_custom_call.1} parent=1 // pred_region
      _
    $region5: #{tpu_custom_call.1} parent=1 // pred_fallthru
      _
    // Predicated region
    $region6: #{tpu_custom_call.1} parent=1 // pred_check
      _
    $region7: #{tpu_custom_call.1} parent=1 // pred_check_branch
      %18 = sbr.rel (0) target = $region9
    $region8: #{tpu_custom_call.1} parent=1 // pred_region
      _
    $region9: #{tpu_custom_call.1} parent=1 // pred_fallthru
      _
    // Predicated region
    $region10: #{tpu_custom_call.1} parent=1 // pred_check
      _
    $region11: #{tpu_custom_call.1} parent=1 // pred_check_branch
      %20 = sbr.rel (0) target = $region13
    $region12: #{tpu_custom_call.1} parent=1 // pred_region
      _
    $region13: #{tpu_custom_call.1} parent=1 // pred_fallthru
      _
    // Predicated region
    $region14: #{tpu_custom_call.1} parent=1 // pred_check
      _
    $region15: #{tpu_custom_call.1} parent=1 // pred_check_branch
      %22 = sbr.rel (0) target = $region17
    $region16: #{tpu_custom_call.1} parent=1 // pred_region
      _
    $region17: #{tpu_custom_call.1} parent=1 // pred_fallthru
      _
    // Predicated region
    $region18: #{tpu_custom_call.1} parent=1 // pred_check
      _
    $region19: #{tpu_custom_call.1} parent=1 // pred_check_branch
      %24 = sbr.rel (0) target = $region21
    $region20: #{tpu_custom_call.1} parent=1 // pred_region
      _
    $region21: #{tpu_custom_call.1} parent=1 // pred_fallthru
      _
    // Predicated region
    $region22: #{tpu_custom_call.1} parent=1 // pred_check
      _
    $region23: #{tpu_custom_call.1} parent=1 // pred_check_branch
      %26 = sbr.rel (0) target = $region25
    $region24: #{tpu_custom_call.1} parent=1 // pred_region
      _
    $region25: #{tpu_custom_call.1} parent=1 // pred_fallthru
      _
    // Predicated region
    $region26: #{tpu_custom_call.1} parent=1 // pred_check
      _
    $region27: #{tpu_custom_call.1} parent=1 // pred_check_branch
      %28 = sbr.rel (0) target = $region29
    $region28: #{tpu_custom_call.1} parent=1 // pred_region
      _
    $region29: #{tpu_custom_call.1} parent=1 // pred_fallthru
      _
    // Predicated region
    $region30: #{tpu_custom_call.1} parent=1 // pred_check
      _
    $region31: #{tpu_custom_call.1} parent=1 // pred_check_branch
      %30 = sbr.rel (0) target = $region33
    $region32: #{tpu_custom_call.1} parent=1 // pred_region
      _
    $region33: #{tpu_custom_call.1} parent=1 // pred_fallthru
      _
    // Predicated region
    $region34: #{tpu_custom_call.1} parent=1 // pred_check
      _
    $region35: #{tpu_custom_call.1} parent=1 // pred_check_branch
      %32 = sbr.rel (0) target = $region37
    $region36: #{tpu_custom_call.1} parent=1 // pred_region
      _
    $region37: #{tpu_custom_call.1} parent=1 // pred_fallthru
      _
    %v33 = vld [vmem:[%s0] sm:$0xff]
    %v34 = vld [vmem:[%s0 + $0x8] sm:$0xff]
    %v35 = vld [vmem:[%s1] sm:$0xff]
    %v36 = vld [vmem:[%s1 + $0x8] sm:$0xff]
    %v37 = vld [vmem:[%s1 + $0x10] sm:$0xff]
    %v38 = vld [vmem:[%s1 + $0x18] sm:$0xff]
    %v39 = vld [vmem:[%s4] sm:$0x1]
    %v41 = vlaneseq
    %v42 = vshrl.u32 %v41, 7
    %v43 = vsub.s32 0, %v42
    %v44 = vrot.slane %v39, %v43
    %vm46 = vcmask 261120
    %v48 = vsel %vm46, %v33, 0
    %v51 = vsel %vm46, %v34, 0
    %53 = vmatprep.subr.mxu0 0.0
    %54 = vmatpush1.msra.mxu0 0.0
    %55 = vmatprep.subr.mxu0 0.0
    %56 = vmatpush1.msra.mxu0 0.0
    %57 = vmatprep.subr.mxu0 0.0
    %58 = vmatpush1.msra.mxu0 0.0
    %59 = vmatprep.subr.mxu0 0.0
    %60 = vmatpush1.msra.mxu0 0.0
    %61 = vmatprep.subr.mxu0 0.0
    %62 = vmatpush1.msra.mxu0 0.0
    %63 = vmatprep.subr.mxu0 0.0
    %64 = vmatpush1.msra.mxu0 0.0
    %65 = vmatprep.subr.mxu0 0.0
    %66 = vmatpush1.msra.mxu0 0.0
    %67 = vmatprep.subr.mxu0 0.0
    %68 = vmatpush1.msra.mxu0 0.0
    %69 = vmatprep.subr.mxu0 0.0
    %70 = vmatpush1.msra.mxu0 0.0
    %71 = vmatprep.subr.mxu0 0.0
    %72 = vmatpush1.msra.mxu0 0.0
    %73 = vmatprep.subr.mxu0 0.0
    %74 = vmatpush1.msra.mxu0 0.0
    %75 = vmatprep.subr.mxu0 0.0
    %76 = vmatpush1.msra.mxu0 0.0
    %77 = vmatprep.subr.mxu0 0.0
    %78 = vmatpush1.msra.mxu0 %v38
    %79 = vmatprep.subr.mxu0 0.0
    %80 = vmatpush1.msra.mxu0 %v37
    %81 = vmatprep.subr.mxu0 0.0
    %82 = vmatpush1.msra.mxu0 %v36
    %83 = vmatprep.subr.mxu0 0.0
    %84 = vmatpush1.msra.mxu0 %v35
    %85 = vmatprep.subr.mxu0 0.0
    %86 = vmatpush2.msra.mxu0 0.0
    %87 = vmatprep.subr.mxu0 0.0
    %88 = vmatpush2.msra.mxu0 0.0
    %89 = vmatprep.subr.mxu0 0.0
    %90 = vmatpush2.msra.mxu0 0.0
    %91 = vmatprep.subr.mxu0 0.0
    %92 = vmatpush2.msra.mxu0 0.0
    %93 = vmatprep.subr.mxu0 0.0
    %94 = vmatpush2.msra.mxu0 0.0
    %95 = vmatprep.subr.mxu0 0.0
    %96 = vmatpush2.msra.mxu0 0.0
    %97 = vmatprep.subr.mxu0 0.0
    %98 = vmatpush2.msra.mxu0 0.0
    %99 = vmatprep.subr.mxu0 0.0
    %100 = vmatpush2.msra.mxu0 0.0
    %101 = vmatprep.subr.mxu0 0.0
    %102 = vmatpush2.msra.mxu0 0.0
    %103 = vmatprep.subr.mxu0 0.0
    %104 = vmatpush2.msra.mxu0 0.0
    %105 = vmatprep.subr.mxu0 0.0
    %106 = vmatpush2.msra.mxu0 0.0
    %107 = vmatprep.subr.mxu0 0.0
    %108 = vmatpush2.msra.mxu0 0.0
    %109 = vmatprep.subr.mxu0 0.0
    %110 = vmatpush2.msra.mxu0 0.0
    %111 = vmatprep.subr.mxu0 0.0
    %112 = vmatpush2.msra.mxu0 0.0
    %113 = vmatprep.subr.mxu0 0.0
    %114 = vmatpush2.msra.mxu0 0.0
    %115 = vmatprep.subr.mxu0 0.0
    %116 = vmatpush2.msra.mxu0 0.0
    %117 = vmatprep.mubr.f32.mxu0 0.0
    %118 = vmatmul.mubr.f32.gmra.mxu0 %v48
    %v119 = vpop.f32.mrf.mxu0
    %v120 = vadd.f32 %v44, %v119
    %v121 = vpop.f32.mrf.mxu0
    %122 = vmatprep.mubr.f32.mxu0 0.0
    %123 = vmatmul.mubr.f32.gmra.mxu0 %v51
    %v124 = vpop.f32.mrf.mxu0
    %v125 = vadd.f32 %v44, %v124
    %v126 = vpop.f32.mrf.mxu0
    %127 = vdwg.mxu0
    %v128 = vld [vmem:[%s2] sm:$0xff]
    %v129 = vld [vmem:[%s2 + $0x8] sm:$0xff]
    %v130 = vld [vmem:[%s2 + $0x10] sm:$0xff]
    %v131 = vld [vmem:[%s2 + $0x18] sm:$0xff]
    %v132 = vld [vmem:[%s5] sm:$0x1]
    %v134 = vlaneseq
    %v135 = vshrl.u32 %v134, 7
    %v136 = vsub.s32 0, %v135
    %v137 = vrot.slane %v132, %v136
    %139 = vmatprep.subr.mxu0 0.0
    %140 = vmatpush1.msra.mxu0 0.0
    %141 = vmatprep.subr.mxu0 0.0
    %142 = vmatpush1.msra.mxu0 0.0
    %143 = vmatprep.subr.mxu0 0.0
    %144 = vmatpush1.msra.mxu0 0.0
    %145 = vmatprep.subr.mxu0 0.0
    %146 = vmatpush1.msra.mxu0 0.0
    %147 = vmatprep.subr.mxu0 0.0
    %148 = vmatpush1.msra.mxu0 0.0
    %149 = vmatprep.subr.mxu0 0.0
    %150 = vmatpush1.msra.mxu0 0.0
    %151 = vmatprep.subr.mxu0 0.0
    %152 = vmatpush1.msra.mxu0 0.0
    %153 = vmatprep.subr.mxu0 0.0
    %154 = vmatpush1.msra.mxu0 0.0
    %155 = vmatprep.subr.mxu0 0.0
    %156 = vmatpush1.msra.mxu0 0.0
    %157 = vmatprep.subr.mxu0 0.0
    %158 = vmatpush1.msra.mxu0 0.0
    %159 = vmatprep.subr.mxu0 0.0
    %160 = vmatpush1.msra.mxu0 0.0
    %161 = vmatprep.subr.mxu0 0.0
    %162 = vmatpush1.msra.mxu0 0.0
    %163 = vmatprep.subr.mxu0 0.0
    %164 = vmatpush1.msra.mxu0 %v131
    %165 = vmatprep.subr.mxu0 0.0
    %166 = vmatpush1.msra.mxu0 %v130
    %167 = vmatprep.subr.mxu0 0.0
    %168 = vmatpush1.msra.mxu0 %v129
    %169 = vmatprep.subr.mxu0 0.0
    %170 = vmatpush1.msra.mxu0 %v128
    %171 = vmatprep.subr.mxu0 0.0
    %172 = vmatpush2.msra.mxu0 0.0
    %173 = vmatprep.subr.mxu0 0.0
    %174 = vmatpush2.msra.mxu0 0.0
    %175 = vmatprep.subr.mxu0 0.0
    %176 = vmatpush2.msra.mxu0 0.0
    %177 = vmatprep.subr.mxu0 0.0
    %178 = vmatpush2.msra.mxu0 0.0
    %179 = vmatprep.subr.mxu0 0.0
    %180 = vmatpush2.msra.mxu0 0.0
    %181 = vmatprep.subr.mxu0 0.0
    %182 = vmatpush2.msra.mxu0 0.0
    %183 = vmatprep.subr.mxu0 0.0
    %184 = vmatpush2.msra.mxu0 0.0
    %185 = vmatprep.subr.mxu0 0.0
    %186 = vmatpush2.msra.mxu0 0.0
    %187 = vmatprep.subr.mxu0 0.0
    %188 = vmatpush2.msra.mxu0 0.0
    %189 = vmatprep.subr.mxu0 0.0
    %190 = vmatpush2.msra.mxu0 0.0
    %191 = vmatprep.subr.mxu0 0.0
    %192 = vmatpush2.msra.mxu0 0.0
    %193 = vmatprep.subr.mxu0 0.0
    %194 = vmatpush2.msra.mxu0 0.0
    %195 = vmatprep.subr.mxu0 0.0
    %196 = vmatpush2.msra.mxu0 0.0
    %197 = vmatprep.subr.mxu0 0.0
    %198 = vmatpush2.msra.mxu0 0.0
    %199 = vmatprep.subr.mxu0 0.0
    %200 = vmatpush2.msra.mxu0 0.0
    %201 = vmatprep.subr.mxu0 0.0
    %202 = vmatpush2.msra.mxu0 0.0
    %203 = vmatprep.mubr.f32.mxu0 0.0
    %204 = vmatmul.mubr.f32.gmra.mxu0 %v48
    %v205 = vpop.f32.mrf.mxu0
    %v206 = vadd.f32 %v137, %v205
    %v207 = vpop.f32.mrf.mxu0
    %208 = vmatprep.mubr.f32.mxu0 0.0
    %209 = vmatmul.mubr.f32.gmra.mxu0 %v51
    %v210 = vpop.f32.mrf.mxu0
    %v211 = vadd.f32 %v137, %v210
    %v212 = vpop.f32.mrf.mxu0
    %213 = vdwg.mxu0
    %v214 = vld [vmem:[%s3] sm:$0xff]
    %v215 = vld [vmem:[%s3 + $0x8] sm:$0xff]
    %v216 = vld [vmem:[%s3 + $0x10] sm:$0xff]
    %v217 = vld [vmem:[%s3 + $0x18] sm:$0xff]
    %v218 = vld [vmem:[%s6] sm:$0x1]
    %v220 = vlaneseq
    %v221 = vshrl.u32 %v220, 7
    %v222 = vsub.s32 0, %v221
    %v223 = vrot.slane %v218, %v222
    %225 = vmatprep.subr.mxu0 0.0
    %226 = vmatpush1.msra.mxu0 0.0
    %227 = vmatprep.subr.mxu0 0.0
    %228 = vmatpush1.msra.mxu0 0.0
    %229 = vmatprep.subr.mxu0 0.0
    %230 = vmatpush1.msra.mxu0 0.0
    %231 = vmatprep.subr.mxu0 0.0
    %232 = vmatpush1.msra.mxu0 0.0
    %233 = vmatprep.subr.mxu0 0.0
    %234 = vmatpush1.msra.mxu0 0.0
    %235 = vmatprep.subr.mxu0 0.0
    %236 = vmatpush1.msra.mxu0 0.0
    %237 = vmatprep.subr.mxu0 0.0
    %238 = vmatpush1.msra.mxu0 0.0
    %239 = vmatprep.subr.mxu0 0.0
    %240 = vmatpush1.msra.mxu0 0.0
    %241 = vmatprep.subr.mxu0 0.0
    %242 = vmatpush1.msra.mxu0 0.0
    %243 = vmatprep.subr.mxu0 0.0
    %244 = vmatpush1.msra.mxu0 0.0
    %245 = vmatprep.subr.mxu0 0.0
    %246 = vmatpush1.msra.mxu0 0.0
    %247 = vmatprep.subr.mxu0 0.0
    %248 = vmatpush1.msra.mxu0 0.0
    %249 = vmatprep.subr.mxu0 0.0
    %250 = vmatpush1.msra.mxu0 %v217
    %251 = vmatprep.subr.mxu0 0.0
    %252 = vmatpush1.msra.mxu0 %v216
    %253 = vmatprep.subr.mxu0 0.0
    %254 = vmatpush1.msra.mxu0 %v215
    %255 = vmatprep.subr.mxu0 0.0
    %256 = vmatpush1.msra.mxu0 %v214
    %257 = vmatprep.subr.mxu0 0.0
    %258 = vmatpush2.msra.mxu0 0.0
    %259 = vmatprep.subr.mxu0 0.0
    %260 = vmatpush2.msra.mxu0 0.0
    %261 = vmatprep.subr.mxu0 0.0
    %262 = vmatpush2.msra.mxu0 0.0
    %263 = vmatprep.subr.mxu0 0.0
    %264 = vmatpush2.msra.mxu0 0.0
    %265 = vmatprep.subr.mxu0 0.0
    %266 = vmatpush2.msra.mxu0 0.0
    %267 = vmatprep.subr.mxu0 0.0
    %268 = vmatpush2.msra.mxu0 0.0
    %269 = vmatprep.subr.mxu0 0.0
    %270 = vmatpush2.msra.mxu0 0.0
    %271 = vmatprep.subr.mxu0 0.0
    %272 = vmatpush2.msra.mxu0 0.0
    %273 = vmatprep.subr.mxu0 0.0
    %274 = vmatpush2.msra.mxu0 0.0
    %275 = vmatprep.subr.mxu0 0.0
    %276 = vmatpush2.msra.mxu0 0.0
    %277 = vmatprep.subr.mxu0 0.0
    %278 = vmatpush2.msra.mxu0 0.0
    %279 = vmatprep.subr.mxu0 0.0
    %280 = vmatpush2.msra.mxu0 0.0
    %281 = vmatprep.subr.mxu0 0.0
    %282 = vmatpush2.msra.mxu0 0.0
    %283 = vmatprep.subr.mxu0 0.0
    %284 = vmatpush2.msra.mxu0 0.0
    %285 = vmatprep.subr.mxu0 0.0
    %286 = vmatpush2.msra.mxu0 0.0
    %287 = vmatprep.subr.mxu0 0.0
    %288 = vmatpush2.msra.mxu0 0.0
    %289 = vmatprep.mubr.f32.mxu0 0.0
    %290 = vmatmul.mubr.f32.gmra.mxu0 %v48
    %v291 = vpop.f32.mrf.mxu0
    %v292 = vadd.f32 %v223, %v291
    %v293 = vpop.f32.mrf.mxu0
    %294 = vmatprep.mubr.f32.mxu0 0.0
    %295 = vmatmul.mubr.f32.gmra.mxu0 %v51
    %v296 = vpop.f32.mrf.mxu0
    %v297 = vadd.f32 %v223, %v296
    %v298 = vpop.f32.mrf.mxu0
    %299 = vdwg.mxu0
    %vm300 = vcmask 31744
    %v302 = vsel %vm300, %v120, 0
    %v305 = vsel %vm300, %v206, 0
    %307 = vmatprep.subr.mxu0 0.0
    %308 = vmatpush1.xpose.msra.mxu0 0.0
    %309 = vmatprep.subr.mxu0 0.0
    %310 = vmatpush1.xpose.msra.mxu0 0.0
    %311 = vmatprep.subr.mxu0 0.0
    %312 = vmatpush1.xpose.msra.mxu0 0.0
    %313 = vmatprep.subr.mxu0 0.0
    %314 = vmatpush1.xpose.msra.mxu0 0.0
    %315 = vmatprep.subr.mxu0 0.0
    %316 = vmatpush1.xpose.msra.mxu0 0.0
    %317 = vmatprep.subr.mxu0 0.0
    %318 = vmatpush1.xpose.msra.mxu0 0.0
    %319 = vmatprep.subr.mxu0 0.0
    %320 = vmatpush1.xpose.msra.mxu0 0.0
    %321 = vmatprep.subr.mxu0 0.0
    %322 = vmatpush1.xpose.msra.mxu0 0.0
    %323 = vmatprep.subr.mxu0 0.0
    %324 = vmatpush1.xpose.msra.mxu0 0.0
    %325 = vmatprep.subr.mxu0 0.0
    %326 = vmatpush1.xpose.msra.mxu0 0.0
    %327 = vmatprep.subr.mxu0 0.0
    %328 = vmatpush1.xpose.msra.mxu0 0.0
    %329 = vmatprep.subr.mxu0 0.0
    %330 = vmatpush1.xpose.msra.mxu0 0.0
    %331 = vmatprep.subr.mxu0 0.0
    %332 = vmatpush1.xpose.msra.mxu0 0.0
    %333 = vmatprep.subr.mxu0 0.0
    %334 = vmatpush1.xpose.msra.mxu0 0.0
    %335 = vmatprep.subr.mxu0 0.0
    %336 = vmatpush1.xpose.msra.mxu0 0.0
    %337 = vmatprep.subr.mxu0 0.0
    %338 = vmatpush1.xpose.msra.mxu0 %v305
    %339 = vmatprep.subr.mxu0 0.0
    %340 = vmatpush2.xpose.msra.mxu0 0.0
    %341 = vmatprep.subr.mxu0 0.0
    %342 = vmatpush2.xpose.msra.mxu0 0.0
    %343 = vmatprep.subr.mxu0 0.0
    %344 = vmatpush2.xpose.msra.mxu0 0.0
    %345 = vmatprep.subr.mxu0 0.0
    %346 = vmatpush2.xpose.msra.mxu0 0.0
    %347 = vmatprep.subr.mxu0 0.0
    %348 = vmatpush2.xpose.msra.mxu0 0.0
    %349 = vmatprep.subr.mxu0 0.0
    %350 = vmatpush2.xpose.msra.mxu0 0.0
    %351 = vmatprep.subr.mxu0 0.0
    %352 = vmatpush2.xpose.msra.mxu0 0.0
    %353 = vmatprep.subr.mxu0 0.0
    %354 = vmatpush2.xpose.msra.mxu0 0.0
    %355 = vmatprep.subr.mxu0 0.0
    %356 = vmatpush2.xpose.msra.mxu0 0.0
    %357 = vmatprep.subr.mxu0 0.0
    %358 = vmatpush2.xpose.msra.mxu0 0.0
    %359 = vmatprep.subr.mxu0 0.0
    %360 = vmatpush2.xpose.msra.mxu0 0.0
    %361 = vmatprep.subr.mxu0 0.0
    %362 = vmatpush2.xpose.msra.mxu0 0.0
    %363 = vmatprep.subr.mxu0 0.0
    %364 = vmatpush2.xpose.msra.mxu0 0.0
    %365 = vmatprep.subr.mxu0 0.0
    %366 = vmatpush2.xpose.msra.mxu0 0.0
    %367 = vmatprep.subr.mxu0 0.0
    %368 = vmatpush2.xpose.msra.mxu0 0.0
    %369 = vmatprep.subr.mxu0 0.0
    %370 = vmatpush2.xpose.msra.mxu0 0.0
    %371 = vmatprep.mubr.f32.mxu0 0.0
    %372 = vmatmul.mubr.f32.gmra.mxu0 %v302
    %v373 = vpop.f32.mrf.mxu0
    %v374 = vadd.f32 0.0, %v373
    %v375 = vpop.f32.mrf.mxu0
    %376 = vdwg.mxu0
    %v378 = vsel %vm300, %v125, 0
    %v381 = vsel %vm300, %v211, 0
    %383 = vmatprep.subr.mxu0 0.0
    %384 = vmatpush1.xpose.msra.mxu0 0.0
    %385 = vmatprep.subr.mxu0 0.0
    %386 = vmatpush1.xpose.msra.mxu0 0.0
    %387 = vmatprep.subr.mxu0 0.0
    %388 = vmatpush1.xpose.msra.mxu0 0.0
    %389 = vmatprep.subr.mxu0 0.0
    %390 = vmatpush1.xpose.msra.mxu0 0.0
    %391 = vmatprep.subr.mxu0 0.0
    %392 = vmatpush1.xpose.msra.mxu0 0.0
    %393 = vmatprep.subr.mxu0 0.0
    %394 = vmatpush1.xpose.msra.mxu0 0.0
    %395 = vmatprep.subr.mxu0 0.0
    %396 = vmatpush1.xpose.msra.mxu0 0.0
    %397 = vmatprep.subr.mxu0 0.0
    %398 = vmatpush1.xpose.msra.mxu0 0.0
    %399 = vmatprep.subr.mxu0 0.0
    %400 = vmatpush1.xpose.msra.mxu0 0.0
    %401 = vmatprep.subr.mxu0 0.0
    %402 = vmatpush1.xpose.msra.mxu0 0.0
    %403 = vmatprep.subr.mxu0 0.0
    %404 = vmatpush1.xpose.msra.mxu0 0.0
    %405 = vmatprep.subr.mxu0 0.0
    %406 = vmatpush1.xpose.msra.mxu0 0.0
    %407 = vmatprep.subr.mxu0 0.0
    %408 = vmatpush1.xpose.msra.mxu0 0.0
    %409 = vmatprep.subr.mxu0 0.0
    %410 = vmatpush1.xpose.msra.mxu0 0.0
    %411 = vmatprep.subr.mxu0 0.0
    %412 = vmatpush1.xpose.msra.mxu0 0.0
    %413 = vmatprep.subr.mxu0 0.0
    %414 = vmatpush1.xpose.msra.mxu0 %v381
    %415 = vmatprep.subr.mxu0 0.0
    %416 = vmatpush2.xpose.msra.mxu0 0.0
    %417 = vmatprep.subr.mxu0 0.0
    %418 = vmatpush2.xpose.msra.mxu0 0.0
    %419 = vmatprep.subr.mxu0 0.0
    %420 = vmatpush2.xpose.msra.mxu0 0.0
    %421 = vmatprep.subr.mxu0 0.0
    %422 = vmatpush2.xpose.msra.mxu0 0.0
    %423 = vmatprep.subr.mxu0 0.0
    %424 = vmatpush2.xpose.msra.mxu0 0.0
    %425 = vmatprep.subr.mxu0 0.0
    %426 = vmatpush2.xpose.msra.mxu0 0.0
    %427 = vmatprep.subr.mxu0 0.0
    %428 = vmatpush2.xpose.msra.mxu0 0.0
    %429 = vmatprep.subr.mxu0 0.0
    %430 = vmatpush2.xpose.msra.mxu0 0.0
    %431 = vmatprep.subr.mxu0 0.0
    %432 = vmatpush2.xpose.msra.mxu0 0.0
    %433 = vmatprep.subr.mxu0 0.0
    %434 = vmatpush2.xpose.msra.mxu0 0.0
    %435 = vmatprep.subr.mxu0 0.0
    %436 = vmatpush2.xpose.msra.mxu0 0.0
    %437 = vmatprep.subr.mxu0 0.0
    %438 = vmatpush2.xpose.msra.mxu0 0.0
    %439 = vmatprep.subr.mxu0 0.0
    %440 = vmatpush2.xpose.msra.mxu0 0.0
    %441 = vmatprep.subr.mxu0 0.0
    %442 = vmatpush2.xpose.msra.mxu0 0.0
    %443 = vmatprep.subr.mxu0 0.0
    %444 = vmatpush2.xpose.msra.mxu0 0.0
    %445 = vmatprep.subr.mxu0 0.0
    %446 = vmatpush2.xpose.msra.mxu0 0.0
    %447 = vmatprep.mubr.f32.mxu0 0.0
    %448 = vmatmul.mubr.f32.gmra.mxu0 %v378
    %v449 = vpop.f32.mrf.mxu0
    %v450 = vadd.f32 0.0, %v449
    %v451 = vpop.f32.mrf.mxu0
    %452 = vdwg.mxu0
    %vm453 = vcmask 64512
    %v454 = vsel %vm453, %v374, -inf
    %455 = vmax.xlane.f32.xlu0 %v454
    %v456 = vpop.xlane.xlu0 %455
    %v457 = vsel %vm453, %v450, -inf
    %458 = vmax.xlane.f32.xlu0 %v457
    %v459 = vpop.xlane.xlu0 %458
    %v460 = vsub.f32 %v374, %v456
    %v461 = vsub.f32 %v450, %v459
    %v462 = vmul.f32 %v460, 1.442695
    %v463 = vpow.pop %v462
    %v464 = vmul.f32 %v461, 1.442695
    %v465 = vpow.pop %v464
    %v466 = vsel %vm453, %v463, 0.0
    %467 = vadd.xlane.f32.xlu0 %v466
    %v468 = vpop.xlane.xlu0 %467
    %v469 = vsel %vm453, %v465, 0.0
    %470 = vadd.xlane.f32.xlu0 %v469
    %v471 = vpop.xlane.xlu0 %470
    %v473 = vsel %vm453, %v463, 0
    %475 = vmatprep.subr.mxu0 0.0
    %476 = vmatpush1.msra.mxu0 0.0
    %477 = vmatprep.subr.mxu0 0.0
    %478 = vmatpush1.msra.mxu0 0.0
    %479 = vmatprep.subr.mxu0 0.0
    %480 = vmatpush1.msra.mxu0 0.0
    %481 = vmatprep.subr.mxu0 0.0
    %482 = vmatpush1.msra.mxu0 0.0
    %483 = vmatprep.subr.mxu0 0.0
    %484 = vmatpush1.msra.mxu0 0.0
    %485 = vmatprep.subr.mxu0 0.0
    %486 = vmatpush1.msra.mxu0 0.0
    %487 = vmatprep.subr.mxu0 0.0
    %488 = vmatpush1.msra.mxu0 0.0
    %489 = vmatprep.subr.mxu0 0.0
    %490 = vmatpush1.msra.mxu0 0.0
    %491 = vmatprep.subr.mxu0 0.0
    %492 = vmatpush1.msra.mxu0 0.0
    %493 = vmatprep.subr.mxu0 0.0
    %494 = vmatpush1.msra.mxu0 0.0
    %495 = vmatprep.subr.mxu0 0.0
    %496 = vmatpush1.msra.mxu0 0.0
    %497 = vmatprep.subr.mxu0 0.0
    %498 = vmatpush1.msra.mxu0 0.0
    %499 = vmatprep.subr.mxu0 0.0
    %500 = vmatpush1.msra.mxu0 0.0
    %501 = vmatprep.subr.mxu0 0.0
    %502 = vmatpush1.msra.mxu0 0.0
    %503 = vmatprep.subr.mxu0 0.0
    %504 = vmatpush1.msra.mxu0 0.0
    %505 = vmatprep.subr.mxu0 0.0
    %506 = vmatpush1.msra.mxu0 %v292
    %507 = vmatprep.subr.mxu0 0.0
    %508 = vmatpush2.msra.mxu0 0.0
    %509 = vmatprep.subr.mxu0 0.0
    %510 = vmatpush2.msra.mxu0 0.0
    %511 = vmatprep.subr.mxu0 0.0
    %512 = vmatpush2.msra.mxu0 0.0
    %513 = vmatprep.subr.mxu0 0.0
    %514 = vmatpush2.msra.mxu0 0.0
    %515 = vmatprep.subr.mxu0 0.0
    %516 = vmatpush2.msra.mxu0 0.0
    %517 = vmatprep.subr.mxu0 0.0
    %518 = vmatpush2.msra.mxu0 0.0
    %519 = vmatprep.subr.mxu0 0.0
    %520 = vmatpush2.msra.mxu0 0.0
    %521 = vmatprep.subr.mxu0 0.0
    %522 = vmatpush2.msra.mxu0 0.0
    %523 = vmatprep.subr.mxu0 0.0
    %524 = vmatpush2.msra.mxu0 0.0
    %525 = vmatprep.subr.mxu0 0.0
    %526 = vmatpush2.msra.mxu0 0.0
    %527 = vmatprep.subr.mxu0 0.0
    %528 = vmatpush2.msra.mxu0 0.0
    %529 = vmatprep.subr.mxu0 0.0
    %530 = vmatpush2.msra.mxu0 0.0
    %531 = vmatprep.subr.mxu0 0.0
    %532 = vmatpush2.msra.mxu0 0.0
    %533 = vmatprep.subr.mxu0 0.0
    %534 = vmatpush2.msra.mxu0 0.0
    %535 = vmatprep.subr.mxu0 0.0
    %536 = vmatpush2.msra.mxu0 0.0
    %537 = vmatprep.subr.mxu0 0.0
    %538 = vmatpush2.msra.mxu0 0.0
    %539 = vmatprep.mubr.f32.mxu0 0.0
    %540 = vmatmul.mubr.f32.gmra.mxu0 %v473
    %v541 = vpop.f32.mrf.mxu0
    %v542 = vadd.f32 0.0, %v541
    %v543 = vpop.f32.mrf.mxu0
    %544 = vdwg.mxu0
    %v546 = vsel %vm453, %v465, 0
    %548 = vmatprep.subr.mxu0 0.0
    %549 = vmatpush1.msra.mxu0 0.0
    %550 = vmatprep.subr.mxu0 0.0
    %551 = vmatpush1.msra.mxu0 0.0
    %552 = vmatprep.subr.mxu0 0.0
    %553 = vmatpush1.msra.mxu0 0.0
    %554 = vmatprep.subr.mxu0 0.0
    %555 = vmatpush1.msra.mxu0 0.0
    %556 = vmatprep.subr.mxu0 0.0
    %557 = vmatpush1.msra.mxu0 0.0
    %558 = vmatprep.subr.mxu0 0.0
    %559 = vmatpush1.msra.mxu0 0.0
    %560 = vmatprep.subr.mxu0 0.0
    %561 = vmatpush1.msra.mxu0 0.0
    %562 = vmatprep.subr.mxu0 0.0
    %563 = vmatpush1.msra.mxu0 0.0
    %564 = vmatprep.subr.mxu0 0.0
    %565 = vmatpush1.msra.mxu0 0.0
    %566 = vmatprep.subr.mxu0 0.0
    %567 = vmatpush1.msra.mxu0 0.0
    %568 = vmatprep.subr.mxu0 0.0
    %569 = vmatpush1.msra.mxu0 0.0
    %570 = vmatprep.subr.mxu0 0.0
    %571 = vmatpush1.msra.mxu0 0.0
    %572 = vmatprep.subr.mxu0 0.0
    %573 = vmatpush1.msra.mxu0 0.0
    %574 = vmatprep.subr.mxu0 0.0
    %575 = vmatpush1.msra.mxu0 0.0
    %576 = vmatprep.subr.mxu0 0.0
    %577 = vmatpush1.msra.mxu0 0.0
    %578 = vmatprep.subr.mxu0 0.0
    %579 = vmatpush1.msra.mxu0 %v297
    %580 = vmatprep.subr.mxu0 0.0
    %581 = vmatpush2.msra.mxu0 0.0
    %582 = vmatprep.subr.mxu0 0.0
    %583 = vmatpush2.msra.mxu0 0.0
    %584 = vmatprep.subr.mxu0 0.0
    %585 = vmatpush2.msra.mxu0 0.0
    %586 = vmatprep.subr.mxu0 0.0
    %587 = vmatpush2.msra.mxu0 0.0
    %588 = vmatprep.subr.mxu0 0.0
    %589 = vmatpush2.msra.mxu0 0.0
    %590 = vmatprep.subr.mxu0 0.0
    %591 = vmatpush2.msra.mxu0 0.0
    %592 = vmatprep.subr.mxu0 0.0
    %593 = vmatpush2.msra.mxu0 0.0
    %594 = vmatprep.subr.mxu0 0.0
    %595 = vmatpush2.msra.mxu0 0.0
    %596 = vmatprep.subr.mxu0 0.0
    %597 = vmatpush2.msra.mxu0 0.0
    %598 = vmatprep.subr.mxu0 0.0
    %599 = vmatpush2.msra.mxu0 0.0
    %600 = vmatprep.subr.mxu0 0.0
    %601 = vmatpush2.msra.mxu0 0.0
    %602 = vmatprep.subr.mxu0 0.0
    %603 = vmatpush2.msra.mxu0 0.0
    %604 = vmatprep.subr.mxu0 0.0
    %605 = vmatpush2.msra.mxu0 0.0
    %606 = vmatprep.subr.mxu0 0.0
    %607 = vmatpush2.msra.mxu0 0.0
    %608 = vmatprep.subr.mxu0 0.0
    %609 = vmatpush2.msra.mxu0 0.0
    %610 = vmatprep.subr.mxu0 0.0
    %611 = vmatpush2.msra.mxu0 0.0
    %612 = vmatprep.mubr.f32.mxu0 0.0
    %613 = vmatmul.mubr.f32.gmra.mxu0 %v546
    %v614 = vpop.f32.mrf.mxu0
    %v615 = vadd.f32 0.0, %v614
    %v616 = vpop.f32.mrf.mxu0
    %617 = vdwg.mxu0
    %v618 = vrcp.pop %v468
    %v619 = vmul.f32 %v542, %v618
    %v620 = vrcp.pop %v471
    %v621 = vmul.f32 %v615, %v620
    %v622 = vld [vmem:[%s7] sm:$0xf]
    %s623 = scalar_lea.vmem %s1, 32
    %v624 = vld [vmem:[%s623] sm:$0xff]
    %v625 = vld [vmem:[%s623 + $0x8] sm:$0xff]
    %v626 = vld [vmem:[%s623 + $0x10] sm:$0xff]
    %v627 = vld [vmem:[%s623 + $0x18] sm:$0xff]
    %s628 = scalar_lea.vmem %s4, 1
    %v629 = vld [vmem:[%s628] sm:$0x1]
    %v631 = vlaneseq
    %v632 = vshrl.u32 %v631, 7
    %v633 = vsub.s32 0, %v632
    %v634 = vrot.slane %v629, %v633
    %636 = vmatprep.subr.mxu0 0.0
    %637 = vmatpush1.msra.mxu0 0.0
    %638 = vmatprep.subr.mxu0 0.0
    %639 = vmatpush1.msra.mxu0 0.0
    %640 = vmatprep.subr.mxu0 0.0
    %641 = vmatpush1.msra.mxu0 0.0
    %642 = vmatprep.subr.mxu0 0.0
    %643 = vmatpush1.msra.mxu0 0.0
    %644 = vmatprep.subr.mxu0 0.0
    %645 = vmatpush1.msra.mxu0 0.0
    %646 = vmatprep.subr.mxu0 0.0
    %647 = vmatpush1.msra.mxu0 0.0
    %648 = vmatprep.subr.mxu0 0.0
    %649 = vmatpush1.msra.mxu0 0.0
    %650 = vmatprep.subr.mxu0 0.0
    %651 = vmatpush1.msra.mxu0 0.0
    %652 = vmatprep.subr.mxu0 0.0
    %653 = vmatpush1.msra.mxu0 0.0
    %654 = vmatprep.subr.mxu0 0.0
    %655 = vmatpush1.msra.mxu0 0.0
    %656 = vmatprep.subr.mxu0 0.0
    %657 = vmatpush1.msra.mxu0 0.0
    %658 = vmatprep.subr.mxu0 0.0
    %659 = vmatpush1.msra.mxu0 0.0
    %660 = vmatprep.subr.mxu0 0.0
    %661 = vmatpush1.msra.mxu0 %v627
    %662 = vmatprep.subr.mxu0 0.0
    %663 = vmatpush1.msra.mxu0 %v626
    %664 = vmatprep.subr.mxu0 0.0
    %665 = vmatpush1.msra.mxu0 %v625
    %666 = vmatprep.subr.mxu0 0.0
    %667 = vmatpush1.msra.mxu0 %v624
    %668 = vmatprep.subr.mxu0 0.0
    %669 = vmatpush2.msra.mxu0 0.0
    %670 = vmatprep.subr.mxu0 0.0
    %671 = vmatpush2.msra.mxu0 0.0
    %672 = vmatprep.subr.mxu0 0.0
    %673 = vmatpush2.msra.mxu0 0.0
    %674 = vmatprep.subr.mxu0 0.0
    %675 = vmatpush2.msra.mxu0 0.0
    %676 = vmatprep.subr.mxu0 0.0
    %677 = vmatpush2.msra.mxu0 0.0
    %678 = vmatprep.subr.mxu0 0.0
    %679 = vmatpush2.msra.mxu0 0.0
    %680 = vmatprep.subr.mxu0 0.0
    %681 = vmatpush2.msra.mxu0 0.0
    %682 = vmatprep.subr.mxu0 0.0
    %683 = vmatpush2.msra.mxu0 0.0
    %684 = vmatprep.subr.mxu0 0.0
    %685 = vmatpush2.msra.mxu0 0.0
    %686 = vmatprep.subr.mxu0 0.0
    %687 = vmatpush2.msra.mxu0 0.0
    %688 = vmatprep.subr.mxu0 0.0
    %689 = vmatpush2.msra.mxu0 0.0
    %690 = vmatprep.subr.mxu0 0.0
    %691 = vmatpush2.msra.mxu0 0.0
    %692 = vmatprep.subr.mxu0 0.0
    %693 = vmatpush2.msra.mxu0 0.0
    %694 = vmatprep.subr.mxu0 0.0
    %695 = vmatpush2.msra.mxu0 0.0
    %696 = vmatprep.subr.mxu0 0.0
    %697 = vmatpush2.msra.mxu0 0.0
    %698 = vmatprep.subr.mxu0 0.0
    %699 = vmatpush2.msra.mxu0 0.0
    %700 = vmatprep.mubr.f32.mxu0 0.0
    %701 = vmatmul.mubr.f32.gmra.mxu0 %v48
    %v702 = vpop.f32.mrf.mxu0
    %v703 = vadd.f32 %v634, %v702
    %v704 = vpop.f32.mrf.mxu0
    %705 = vmatprep.mubr.f32.mxu0 0.0
    %706 = vmatmul.mubr.f32.gmra.mxu0 %v51
    %v707 = vpop.f32.mrf.mxu0
    %v708 = vadd.f32 %v634, %v707
    %v709 = vpop.f32.mrf.mxu0
    %710 = vdwg.mxu0
    %s711 = scalar_lea.vmem %s2, 32
    %v712 = vld [vmem:[%s711] sm:$0xff]
    %v713 = vld [vmem:[%s711 + $0x8] sm:$0xff]
    %v714 = vld [vmem:[%s711 + $0x10] sm:$0xff]
    %v715 = vld [vmem:[%s711 + $0x18] sm:$0xff]
    %s716 = scalar_lea.vmem %s5, 1
    %v717 = vld [vmem:[%s716] sm:$0x1]
    %v719 = vlaneseq
    %v720 = vshrl.u32 %v719, 7
    %v721 = vsub.s32 0, %v720
    %v722 = vrot.slane %v717, %v721
    %724 = vmatprep.subr.mxu0 0.0
    %725 = vmatpush1.msra.mxu0 0.0
    %726 = vmatprep.subr.mxu0 0.0
    %727 = vmatpush1.msra.mxu0 0.0
    %728 = vmatprep.subr.mxu0 0.0
    %729 = vmatpush1.msra.mxu0 0.0
    %730 = vmatprep.subr.mxu0 0.0
    %731 = vmatpush1.msra.mxu0 0.0
    %732 = vmatprep.subr.mxu0 0.0
    %733 = vmatpush1.msra.mxu0 0.0
    %734 = vmatprep.subr.mxu0 0.0
    %735 = vmatpush1.msra.mxu0 0.0
    %736 = vmatprep.subr.mxu0 0.0
    %737 = vmatpush1.msra.mxu0 0.0
    %738 = vmatprep.subr.mxu0 0.0
    %739 = vmatpush1.msra.mxu0 0.0
    %740 = vmatprep.subr.mxu0 0.0
    %741 = vmatpush1.msra.mxu0 0.0
    %742 = vmatprep.subr.mxu0 0.0
    %743 = vmatpush1.msra.mxu0 0.0
    %744 = vmatprep.subr.mxu0 0.0
    %745 = vmatpush1.msra.mxu0 0.0
    %746 = vmatprep.subr.mxu0 0.0
    %747 = vmatpush1.msra.mxu0 0.0
    %748 = vmatprep.subr.mxu0 0.0
    %749 = vmatpush1.msra.mxu0 %v715
    %750 = vmatprep.subr.mxu0 0.0
    %751 = vmatpush1.msra.mxu0 %v714
    %752 = vmatprep.subr.mxu0 0.0
    %753 = vmatpush1.msra.mxu0 %v713
    %754 = vmatprep.subr.mxu0 0.0
    %755 = vmatpush1.msra.mxu0 %v712
    %756 = vmatprep.subr.mxu0 0.0
    %757 = vmatpush2.msra.mxu0 0.0
    %758 = vmatprep.subr.mxu0 0.0
    %759 = vmatpush2.msra.mxu0 0.0
    %760 = vmatprep.subr.mxu0 0.0
    %761 = vmatpush2.msra.mxu0 0.0
    %762 = vmatprep.subr.mxu0 0.0
    %763 = vmatpush2.msra.mxu0 0.0
    %764 = vmatprep.subr.mxu0 0.0
    %765 = vmatpush2.msra.mxu0 0.0
    %766 = vmatprep.subr.mxu0 0.0
    %767 = vmatpush2.msra.mxu0 0.0
    %768 = vmatprep.subr.mxu0 0.0
    %769 = vmatpush2.msra.mxu0 0.0
    %770 = vmatprep.subr.mxu0 0.0
    %771 = vmatpush2.msra.mxu0 0.0
    %772 = vmatprep.subr.mxu0 0.0
    %773 = vmatpush2.msra.mxu0 0.0
    %774 = vmatprep.subr.mxu0 0.0
    %775 = vmatpush2.msra.mxu0 0.0
    %776 = vmatprep.subr.mxu0 0.0
    %777 = vmatpush2.msra.mxu0 0.0
    %778 = vmatprep.subr.mxu0 0.0
    %779 = vmatpush2.msra.mxu0 0.0
    %780 = vmatprep.subr.mxu0 0.0
    %781 = vmatpush2.msra.mxu0 0.0
    %782 = vmatprep.subr.mxu0 0.0
    %783 = vmatpush2.msra.mxu0 0.0
    %784 = vmatprep.subr.mxu0 0.0
    %785 = vmatpush2.msra.mxu0 0.0
    %786 = vmatprep.subr.mxu0 0.0
    %787 = vmatpush2.msra.mxu0 0.0
    %788 = vmatprep.mubr.f32.mxu0 0.0
    %789 = vmatmul.mubr.f32.gmra.mxu0 %v48
    %v790 = vpop.f32.mrf.mxu0
    %v791 = vadd.f32 %v722, %v790
    %v792 = vpop.f32.mrf.mxu0
    %793 = vmatprep.mubr.f32.mxu0 0.0
    %794 = vmatmul.mubr.f32.gmra.mxu0 %v51
    %v795 = vpop.f32.mrf.mxu0
    %v796 = vadd.f32 %v722, %v795
    %v797 = vpop.f32.mrf.mxu0
    %798 = vdwg.mxu0
    %s799 = scalar_lea.vmem %s3, 32
    %v800 = vld [vmem:[%s799] sm:$0xff]
    %v801 = vld [vmem:[%s799 + $0x8] sm:$0xff]
    %v802 = vld [vmem:[%s799 + $0x10] sm:$0xff]
    %v803 = vld [vmem:[%s799 + $0x18] sm:$0xff]
    %s804 = scalar_lea.vmem %s6, 1
    %v805 = vld [vmem:[%s804] sm:$0x1]
    %v807 = vlaneseq
    %v808 = vshrl.u32 %v807, 7
    %v809 = vsub.s32 0, %v808
    %v810 = vrot.slane %v805, %v809
    %812 = vmatprep.subr.mxu0 0.0
    %813 = vmatpush1.msra.mxu0 0.0
    %814 = vmatprep.subr.mxu0 0.0
    %815 = vmatpush1.msra.mxu0 0.0
    %816 = vmatprep.subr.mxu0 0.0
    %817 = vmatpush1.msra.mxu0 0.0
    %818 = vmatprep.subr.mxu0 0.0
    %819 = vmatpush1.msra.mxu0 0.0
    %820 = vmatprep.subr.mxu0 0.0
    %821 = vmatpush1.msra.mxu0 0.0
    %822 = vmatprep.subr.mxu0 0.0
    %823 = vmatpush1.msra.mxu0 0.0
    %824 = vmatprep.subr.mxu0 0.0
    %825 = vmatpush1.msra.mxu0 0.0
    %826 = vmatprep.subr.mxu0 0.0
    %827 = vmatpush1.msra.mxu0 0.0
    %828 = vmatprep.subr.mxu0 0.0
    %829 = vmatpush1.msra.mxu0 0.0
    %830 = vmatprep.subr.mxu0 0.0
    %831 = vmatpush1.msra.mxu0 0.0
    %832 = vmatprep.subr.mxu0 0.0
    %833 = vmatpush1.msra.mxu0 0.0
    %834 = vmatprep.subr.mxu0 0.0
    %835 = vmatpush1.msra.mxu0 0.0
    %836 = vmatprep.subr.mxu0 0.0
    %837 = vmatpush1.msra.mxu0 %v803
    %838 = vmatprep.subr.mxu0 0.0
    %839 = vmatpush1.msra.mxu0 %v802
    %840 = vmatprep.subr.mxu0 0.0
    %841 = vmatpush1.msra.mxu0 %v801
    %842 = vmatprep.subr.mxu0 0.0
    %843 = vmatpush1.msra.mxu0 %v800
    %844 = vmatprep.subr.mxu0 0.0
    %845 = vmatpush2.msra.mxu0 0.0
    %846 = vmatprep.subr.mxu0 0.0
    %847 = vmatpush2.msra.mxu0 0.0
    %848 = vmatprep.subr.mxu0 0.0
    %849 = vmatpush2.msra.mxu0 0.0
    %850 = vmatprep.subr.mxu0 0.0
    %851 = vmatpush2.msra.mxu0 0.0
    %852 = vmatprep.subr.mxu0 0.0
    %853 = vmatpush2.msra.mxu0 0.0
    %854 = vmatprep.subr.mxu0 0.0
    %855 = vmatpush2.msra.mxu0 0.0
    %856 = vmatprep.subr.mxu0 0.0
    %857 = vmatpush2.msra.mxu0 0.0
    %858 = vmatprep.subr.mxu0 0.0
    %859 = vmatpush2.msra.mxu0 0.0
    %860 = vmatprep.subr.mxu0 0.0
    %861 = vmatpush2.msra.mxu0 0.0
    %862 = vmatprep.subr.mxu0 0.0
    %863 = vmatpush2.msra.mxu0 0.0
    %864 = vmatprep.subr.mxu0 0.0
    %865 = vmatpush2.msra.mxu0 0.0
    %866 = vmatprep.subr.mxu0 0.0
    %867 = vmatpush2.msra.mxu0 0.0
    %868 = vmatprep.subr.mxu0 0.0
    %869 = vmatpush2.msra.mxu0 0.0
    %870 = vmatprep.subr.mxu0 0.0
    %871 = vmatpush2.msra.mxu0 0.0
    %872 = vmatprep.subr.mxu0 0.0
    %873 = vmatpush2.msra.mxu0 0.0
    %874 = vmatprep.subr.mxu0 0.0
    %875 = vmatpush2.msra.mxu0 0.0
    %876 = vmatprep.mubr.f32.mxu0 0.0
    %877 = vmatmul.mubr.f32.gmra.mxu0 %v48
    %v878 = vpop.f32.mrf.mxu0
    %v879 = vadd.f32 %v810, %v878
    %v880 = vpop.f32.mrf.mxu0
    %881 = vmatprep.mubr.f32.mxu0 0.0
    %882 = vmatmul.mubr.f32.gmra.mxu0 %v51
    %v883 = vpop.f32.mrf.mxu0
    %v884 = vadd.f32 %v810, %v883
    %v885 = vpop.f32.mrf.mxu0
    %886 = vdwg.mxu0
    %v888 = vsel %vm300, %v703, 0
    %v891 = vsel %vm300, %v791, 0
    %893 = vmatprep.subr.mxu0 0.0
    %894 = vmatpush1.xpose.msra.mxu0 0.0
    %895 = vmatprep.subr.mxu0 0.0
    %896 = vmatpush1.xpose.msra.mxu0 0.0
    %897 = vmatprep.subr.mxu0 0.0
    %898 = vmatpush1.xpose.msra.mxu0 0.0
    %899 = vmatprep.subr.mxu0 0.0
    %900 = vmatpush1.xpose.msra.mxu0 0.0
    %901 = vmatprep.subr.mxu0 0.0
    %902 = vmatpush1.xpose.msra.mxu0 0.0
    %903 = vmatprep.subr.mxu0 0.0
    %904 = vmatpush1.xpose.msra.mxu0 0.0
    %905 = vmatprep.subr.mxu0 0.0
    %906 = vmatpush1.xpose.msra.mxu0 0.0
    %907 = vmatprep.subr.mxu0 0.0
    %908 = vmatpush1.xpose.msra.mxu0 0.0
    %909 = vmatprep.subr.mxu0 0.0
    %910 = vmatpush1.xpose.msra.mxu0 0.0
    %911 = vmatprep.subr.mxu0 0.0
    %912 = vmatpush1.xpose.msra.mxu0 0.0
    %913 = vmatprep.subr.mxu0 0.0
    %914 = vmatpush1.xpose.msra.mxu0 0.0
    %915 = vmatprep.subr.mxu0 0.0
    %916 = vmatpush1.xpose.msra.mxu0 0.0
    %917 = vmatprep.subr.mxu0 0.0
    %918 = vmatpush1.xpose.msra.mxu0 0.0
    %919 = vmatprep.subr.mxu0 0.0
    %920 = vmatpush1.xpose.msra.mxu0 0.0
    %921 = vmatprep.subr.mxu0 0.0
    %922 = vmatpush1.xpose.msra.mxu0 0.0
    %923 = vmatprep.subr.mxu0 0.0
    %924 = vmatpush1.xpose.msra.mxu0 %v891
    %925 = vmatprep.subr.mxu0 0.0
    %926 = vmatpush2.xpose.msra.mxu0 0.0
    %927 = vmatprep.subr.mxu0 0.0
    %928 = vmatpush2.xpose.msra.mxu0 0.0
    %929 = vmatprep.subr.mxu0 0.0
    %930 = vmatpush2.xpose.msra.mxu0 0.0
    %931 = vmatprep.subr.mxu0 0.0
    %932 = vmatpush2.xpose.msra.mxu0 0.0
    %933 = vmatprep.subr.mxu0 0.0
    %934 = vmatpush2.xpose.msra.mxu0 0.0
    %935 = vmatprep.subr.mxu0 0.0
    %936 = vmatpush2.xpose.msra.mxu0 0.0
    %937 = vmatprep.subr.mxu0 0.0
    %938 = vmatpush2.xpose.msra.mxu0 0.0
    %939 = vmatprep.subr.mxu0 0.0
    %940 = vmatpush2.xpose.msra.mxu0 0.0
    %941 = vmatprep.subr.mxu0 0.0
    %942 = vmatpush2.xpose.msra.mxu0 0.0
    %943 = vmatprep.subr.mxu0 0.0
    %944 = vmatpush2.xpose.msra.mxu0 0.0
    %945 = vmatprep.subr.mxu0 0.0
    %946 = vmatpush2.xpose.msra.mxu0 0.0
    %947 = vmatprep.subr.mxu0 0.0
    %948 = vmatpush2.xpose.msra.mxu0 0.0
    %949 = vmatprep.subr.mxu0 0.0
    %950 = vmatpush2.xpose.msra.mxu0 0.0
    %951 = vmatprep.subr.mxu0 0.0
    %952 = vmatpush2.xpose.msra.mxu0 0.0
    %953 = vmatprep.subr.mxu0 0.0
    %954 = vmatpush2.xpose.msra.mxu0 0.0
    %955 = vmatprep.subr.mxu0 0.0
    %956 = vmatpush2.xpose.msra.mxu0 0.0
    %957 = vmatprep.mubr.f32.mxu0 0.0
    %958 = vmatmul.mubr.f32.gmra.mxu0 %v888
    %v959 = vpop.f32.mrf.mxu0
    %v960 = vadd.f32 0.0, %v959
    %v961 = vpop.f32.mrf.mxu0
    %962 = vdwg.mxu0
    %v964 = vsel %vm300, %v708, 0
    %v967 = vsel %vm300, %v796, 0
    %969 = vmatprep.subr.mxu0 0.0
    %970 = vmatpush1.xpose.msra.mxu0 0.0
    %971 = vmatprep.subr.mxu0 0.0
    %972 = vmatpush1.xpose.msra.mxu0 0.0
    %973 = vmatprep.subr.mxu0 0.0
    %974 = vmatpush1.xpose.msra.mxu0 0.0
    %975 = vmatprep.subr.mxu0 0.0
    %976 = vmatpush1.xpose.msra.mxu0 0.0
    %977 = vmatprep.subr.mxu0 0.0
    %978 = vmatpush1.xpose.msra.mxu0 0.0
    %979 = vmatprep.subr.mxu0 0.0
    %980 = vmatpush1.xpose.msra.mxu0 0.0
    %981 = vmatprep.subr.mxu0 0.0
    %982 = vmatpush1.xpose.msra.mxu0 0.0
    %983 = vmatprep.subr.mxu0 0.0
    %984 = vmatpush1.xpose.msra.mxu0 0.0
    %985 = vmatprep.subr.mxu0 0.0
    %986 = vmatpush1.xpose.msra.mxu0 0.0
    %987 = vmatprep.subr.mxu0 0.0
    %988 = vmatpush1.xpose.msra.mxu0 0.0
    %989 = vmatprep.subr.mxu0 0.0
    %990 = vmatpush1.xpose.msra.mxu0 0.0
    %991 = vmatprep.subr.mxu0 0.0
    %992 = vmatpush1.xpose.msra.mxu0 0.0
    %993 = vmatprep.subr.mxu0 0.0
    %994 = vmatpush1.xpose.msra.mxu0 0.0
    %995 = vmatprep.subr.mxu0 0.0
    %996 = vmatpush1.xpose.msra.mxu0 0.0
    %997 = vmatprep.subr.mxu0 0.0
    %998 = vmatpush1.xpose.msra.mxu0 0.0
    %999 = vmatprep.subr.mxu0 0.0
    %1000 = vmatpush1.xpose.msra.mxu0 %v967
    %1001 = vmatprep.subr.mxu0 0.0
    %1002 = vmatpush2.xpose.msra.mxu0 0.0
    %1003 = vmatprep.subr.mxu0 0.0
    %1004 = vmatpush2.xpose.msra.mxu0 0.0
    %1005 = vmatprep.subr.mxu0 0.0
    %1006 = vmatpush2.xpose.msra.mxu0 0.0
    %1007 = vmatprep.subr.mxu0 0.0
    %1008 = vmatpush2.xpose.msra.mxu0 0.0
    %1009 = vmatprep.subr.mxu0 0.0
    %1010 = vmatpush2.xpose.msra.mxu0 0.0
    %1011 = vmatprep.subr.mxu0 0.0
    %1012 = vmatpush2.xpose.msra.mxu0 0.0
    %1013 = vmatprep.subr.mxu0 0.0
    %1014 = vmatpush2.xpose.msra.mxu0 0.0
    %1015 = vmatprep.subr.mxu0 0.0
    %1016 = vmatpush2.xpose.msra.mxu0 0.0
    %1017 = vmatprep.subr.mxu0 0.0
    %1018 = vmatpush2.xpose.msra.mxu0 0.0
    %1019 = vmatprep.subr.mxu0 0.0
    %1020 = vmatpush2.xpose.msra.mxu0 0.0
    %1021 = vmatprep.subr.mxu0 0.0
    %1022 = vmatpush2.xpose.msra.mxu0 0.0
    %1023 = vmatprep.subr.mxu0 0.0
    %1024 = vmatpush2.xpose.msra.mxu0 0.0
    %1025 = vmatprep.subr.mxu0 0.0
    %1026 = vmatpush2.xpose.msra.mxu0 0.0
    %1027 = vmatprep.subr.mxu0 0.0
    %1028 = vmatpush2.xpose.msra.mxu0 0.0
    %1029 = vmatprep.subr.mxu0 0.0
    %1030 = vmatpush2.xpose.msra.mxu0 0.0
    %1031 = vmatprep.subr.mxu0 0.0
    %1032 = vmatpush2.xpose.msra.mxu0 0.0
    %1033 = vmatprep.mubr.f32.mxu0 0.0
    %1034 = vmatmul.mubr.f32.gmra.mxu0 %v964
    %v1035 = vpop.f32.mrf.mxu0
    %v1036 = vadd.f32 0.0, %v1035
    %v1037 = vpop.f32.mrf.mxu0
    %1038 = vdwg.mxu0
    %v1039 = vsel %vm453, %v960, -inf
    %1040 = vmax.xlane.f32.xlu0 %v1039
    %v1041 = vpop.xlane.xlu0 %1040
    %v1042 = vsel %vm453, %v1036, -inf
    %1043 = vmax.xlane.f32.xlu0 %v1042
    %v1044 = vpop.xlane.xlu0 %1043
    %v1045 = vsub.f32 %v960, %v1041
    %v1046 = vsub.f32 %v1036, %v1044
    %v1047 = vmul.f32 %v1045, 1.442695
    %v1048 = vpow.pop %v1047
    %v1049 = vmul.f32 %v1046, 1.442695
    %v1050 = vpow.pop %v1049
    %v1051 = vsel %vm453, %v1048, 0.0
    %1052 = vadd.xlane.f32.xlu0 %v1051
    %v1053 = vpop.xlane.xlu0 %1052
    %v1054 = vsel %vm453, %v1050, 0.0
    %1055 = vadd.xlane.f32.xlu0 %v1054
    %v1056 = vpop.xlane.xlu0 %1055
    %v1058 = vsel %vm453, %v1048, 0
    %1060 = vmatprep.subr.mxu0 0.0
    %1061 = vmatpush1.msra.mxu0 0.0
    %1062 = vmatprep.subr.mxu0 0.0
    %1063 = vmatpush1.msra.mxu0 0.0
    %1064 = vmatprep.subr.mxu0 0.0
    %1065 = vmatpush1.msra.mxu0 0.0
    %1066 = vmatprep.subr.mxu0 0.0
    %1067 = vmatpush1.msra.mxu0 0.0
    %1068 = vmatprep.subr.mxu0 0.0
    %1069 = vmatpush1.msra.mxu0 0.0
    %1070 = vmatprep.subr.mxu0 0.0
    %1071 = vmatpush1.msra.mxu0 0.0
    %1072 = vmatprep.subr.mxu0 0.0
    %1073 = vmatpush1.msra.mxu0 0.0
    %1074 = vmatprep.subr.mxu0 0.0
    %1075 = vmatpush1.msra.mxu0 0.0
    %1076 = vmatprep.subr.mxu0 0.0
    %1077 = vmatpush1.msra.mxu0 0.0
    %1078 = vmatprep.subr.mxu0 0.0
    %1079 = vmatpush1.msra.mxu0 0.0
    %1080 = vmatprep.subr.mxu0 0.0
    %1081 = vmatpush1.msra.mxu0 0.0
    %1082 = vmatprep.subr.mxu0 0.0
    %1083 = vmatpush1.msra.mxu0 0.0
    %1084 = vmatprep.subr.mxu0 0.0
    %1085 = vmatpush1.msra.mxu0 0.0
    %1086 = vmatprep.subr.mxu0 0.0
    %1087 = vmatpush1.msra.mxu0 0.0
    %1088 = vmatprep.subr.mxu0 0.0
    %1089 = vmatpush1.msra.mxu0 0.0
    %1090 = vmatprep.subr.mxu0 0.0
    %1091 = vmatpush1.msra.mxu0 %v879
    %1092 = vmatprep.subr.mxu0 0.0
    %1093 = vmatpush2.msra.mxu0 0.0
    %1094 = vmatprep.subr.mxu0 0.0
    %1095 = vmatpush2.msra.mxu0 0.0
    %1096 = vmatprep.subr.mxu0 0.0
    %1097 = vmatpush2.msra.mxu0 0.0
    %1098 = vmatprep.subr.mxu0 0.0
    %1099 = vmatpush2.msra.mxu0 0.0
    %1100 = vmatprep.subr.mxu0 0.0
    %1101 = vmatpush2.msra.mxu0 0.0
    %1102 = vmatprep.subr.mxu0 0.0
    %1103 = vmatpush2.msra.mxu0 0.0
    %1104 = vmatprep.subr.mxu0 0.0
    %1105 = vmatpush2.msra.mxu0 0.0
    %1106 = vmatprep.subr.mxu0 0.0
    %1107 = vmatpush2.msra.mxu0 0.0
    %1108 = vmatprep.subr.mxu0 0.0
    %1109 = vmatpush2.msra.mxu0 0.0
    %1110 = vmatprep.subr.mxu0 0.0
    %1111 = vmatpush2.msra.mxu0 0.0
    %1112 = vmatprep.subr.mxu0 0.0
    %1113 = vmatpush2.msra.mxu0 0.0
    %1114 = vmatprep.subr.mxu0 0.0
    %1115 = vmatpush2.msra.mxu0 0.0
    %1116 = vmatprep.subr.mxu0 0.0
    %1117 = vmatpush2.msra.mxu0 0.0
    %1118 = vmatprep.subr.mxu0 0.0
    %1119 = vmatpush2.msra.mxu0 0.0
    %1120 = vmatprep.subr.mxu0 0.0
    %1121 = vmatpush2.msra.mxu0 0.0
    %1122 = vmatprep.subr.mxu0 0.0
    %1123 = vmatpush2.msra.mxu0 0.0
    %1124 = vmatprep.mubr.f32.mxu0 0.0
    %1125 = vmatmul.mubr.f32.gmra.mxu0 %v1058
    %v1126 = vpop.f32.mrf.mxu0
    %v1127 = vadd.f32 0.0, %v1126
    %v1128 = vpop.f32.mrf.mxu0
    %1129 = vdwg.mxu0
    %v1131 = vsel %vm453, %v1050, 0
    %1133 = vmatprep.subr.mxu0 0.0
    %1134 = vmatpush1.msra.mxu0 0.0
    %1135 = vmatprep.subr.mxu0 0.0
    %1136 = vmatpush1.msra.mxu0 0.0
    %1137 = vmatprep.subr.mxu0 0.0
    %1138 = vmatpush1.msra.mxu0 0.0
    %1139 = vmatprep.subr.mxu0 0.0
    %1140 = vmatpush1.msra.mxu0 0.0
    %1141 = vmatprep.subr.mxu0 0.0
    %1142 = vmatpush1.msra.mxu0 0.0
    %1143 = vmatprep.subr.mxu0 0.0
    %1144 = vmatpush1.msra.mxu0 0.0
    %1145 = vmatprep.subr.mxu0 0.0
    %1146 = vmatpush1.msra.mxu0 0.0
    %1147 = vmatprep.subr.mxu0 0.0
    %1148 = vmatpush1.msra.mxu0 0.0
    %1149 = vmatprep.subr.mxu0 0.0
    %1150 = vmatpush1.msra.mxu0 0.0
    %1151 = vmatprep.subr.mxu0 0.0
    %1152 = vmatpush1.msra.mxu0 0.0
    %1153 = vmatprep.subr.mxu0 0.0
    %1154 = vmatpush1.msra.mxu0 0.0
    %1155 = vmatprep.subr.mxu0 0.0
    %1156 = vmatpush1.msra.mxu0 0.0
    %1157 = vmatprep.subr.mxu0 0.0
    %1158 = vmatpush1.msra.mxu0 0.0
    %1159 = vmatprep.subr.mxu0 0.0
    %1160 = vmatpush1.msra.mxu0 0.0
    %1161 = vmatprep.subr.mxu0 0.0
    %1162 = vmatpush1.msra.mxu0 0.0
    %1163 = vmatprep.subr.mxu0 0.0
    %1164 = vmatpush1.msra.mxu0 %v884
    %1165 = vmatprep.subr.mxu0 0.0
    %1166 = vmatpush2.msra.mxu0 0.0
    %1167 = vmatprep.subr.mxu0 0.0
    %1168 = vmatpush2.msra.mxu0 0.0
    %1169 = vmatprep.subr.mxu0 0.0
    %1170 = vmatpush2.msra.mxu0 0.0
    %1171 = vmatprep.subr.mxu0 0.0
    %1172 = vmatpush2.msra.mxu0 0.0
    %1173 = vmatprep.subr.mxu0 0.0
    %1174 = vmatpush2.msra.mxu0 0.0
    %1175 = vmatprep.subr.mxu0 0.0
    %1176 = vmatpush2.msra.mxu0 0.0
    %1177 = vmatprep.subr.mxu0 0.0
    %1178 = vmatpush2.msra.mxu0 0.0
    %1179 = vmatprep.subr.mxu0 0.0
    %1180 = vmatpush2.msra.mxu0 0.0
    %1181 = vmatprep.subr.mxu0 0.0
    %1182 = vmatpush2.msra.mxu0 0.0
    %1183 = vmatprep.subr.mxu0 0.0
    %1184 = vmatpush2.msra.mxu0 0.0
    %1185 = vmatprep.subr.mxu0 0.0
    %1186 = vmatpush2.msra.mxu0 0.0
    %1187 = vmatprep.subr.mxu0 0.0
    %1188 = vmatpush2.msra.mxu0 0.0
    %1189 = vmatprep.subr.mxu0 0.0
    %1190 = vmatpush2.msra.mxu0 0.0
    %1191 = vmatprep.subr.mxu0 0.0
    %1192 = vmatpush2.msra.mxu0 0.0
    %1193 = vmatprep.subr.mxu0 0.0
    %1194 = vmatpush2.msra.mxu0 0.0
    %1195 = vmatprep.subr.mxu0 0.0
    %1196 = vmatpush2.msra.mxu0 0.0
    %1197 = vmatprep.mubr.f32.mxu0 0.0
    %1198 = vmatmul.mubr.f32.gmra.mxu0 %v1131
    %v1199 = vpop.f32.mrf.mxu0
    %v1200 = vadd.f32 0.0, %v1199
    %v1201 = vpop.f32.mrf.mxu0
    %1202 = vdwg.mxu0
    %v1203 = vrcp.pop %v1053
    %v1204 = vmul.f32 %v1127, %v1203
    %v1205 = vrcp.pop %v1056
    %v1206 = vmul.f32 %v1200, %v1205
    %s1207 = scalar_lea.vmem %s7, 4
    %v1208 = vld [vmem:[%s1207] sm:$0xf]
    %v1210 = vsel %vm300, %v1204, 0
    %v1213 = vsel %vm300, %v1206, 0
    %vm1215 = vcmask 1043456
    %v1217 = vsel %vm1215, %v1208, 0
    %1219 = vmatprep.subr.mxu0 0.0
    %1220 = vmatpush1.msra.mxu0 0.0
    %1221 = vmatprep.subr.mxu0 0.0
    %1222 = vmatpush1.msra.mxu0 0.0
    %1223 = vmatprep.subr.mxu0 0.0
    %1224 = vmatpush1.msra.mxu0 0.0
    %1225 = vmatprep.subr.mxu0 0.0
    %1226 = vmatpush1.msra.mxu0 0.0
    %1227 = vmatprep.subr.mxu0 0.0
    %1228 = vmatpush1.msra.mxu0 0.0
    %1229 = vmatprep.subr.mxu0 0.0
    %1230 = vmatpush1.msra.mxu0 0.0
    %1231 = vmatprep.subr.mxu0 0.0
    %1232 = vmatpush1.msra.mxu0 0.0
    %1233 = vmatprep.subr.mxu0 0.0
    %1234 = vmatpush1.msra.mxu0 0.0
    %1235 = vmatprep.subr.mxu0 0.0
    %1236 = vmatpush1.msra.mxu0 0.0
    %1237 = vmatprep.subr.mxu0 0.0
    %1238 = vmatpush1.msra.mxu0 0.0
    %1239 = vmatprep.subr.mxu0 0.0
    %1240 = vmatpush1.msra.mxu0 0.0
    %1241 = vmatprep.subr.mxu0 0.0
    %1242 = vmatpush1.msra.mxu0 0.0
    %1243 = vmatprep.subr.mxu0 0.0
    %1244 = vmatpush1.msra.mxu0 0.0
    %1245 = vmatprep.subr.mxu0 0.0
    %1246 = vmatpush1.msra.mxu0 0.0
    %1247 = vmatprep.subr.mxu0 0.0
    %1248 = vmatpush1.msra.mxu0 0.0
    %1249 = vmatprep.subr.mxu0 0.0
    %1250 = vmatpush1.msra.mxu0 %v1217
    %1251 = vmatprep.subr.mxu0 0.0
    %1252 = vmatpush2.msra.mxu0 0.0
    %1253 = vmatprep.subr.mxu0 0.0
    %1254 = vmatpush2.msra.mxu0 0.0
    %1255 = vmatprep.subr.mxu0 0.0
    %1256 = vmatpush2.msra.mxu0 0.0
    %1257 = vmatprep.subr.mxu0 0.0
    %1258 = vmatpush2.msra.mxu0 0.0
    %1259 = vmatprep.subr.mxu0 0.0
    %1260 = vmatpush2.msra.mxu0 0.0
    %1261 = vmatprep.subr.mxu0 0.0
    %1262 = vmatpush2.msra.mxu0 0.0
    %1263 = vmatprep.subr.mxu0 0.0
    %1264 = vmatpush2.msra.mxu0 0.0
    %1265 = vmatprep.subr.mxu0 0.0
    %1266 = vmatpush2.msra.mxu0 0.0
    %1267 = vmatprep.subr.mxu0 0.0
    %1268 = vmatpush2.msra.mxu0 0.0
    %1269 = vmatprep.subr.mxu0 0.0
    %1270 = vmatpush2.msra.mxu0 0.0
    %1271 = vmatprep.subr.mxu0 0.0
    %1272 = vmatpush2.msra.mxu0 0.0
    %1273 = vmatprep.subr.mxu0 0.0
    %1274 = vmatpush2.msra.mxu0 0.0
    %1275 = vmatprep.subr.mxu0 0.0
    %1276 = vmatpush2.msra.mxu0 0.0
    %1277 = vmatprep.subr.mxu0 0.0
    %1278 = vmatpush2.msra.mxu0 0.0
    %1279 = vmatprep.subr.mxu0 0.0
    %1280 = vmatpush2.msra.mxu0 0.0
    %1281 = vmatprep.subr.mxu0 0.0
    %1282 = vmatpush2.msra.mxu0 0.0
    %1283 = vmatprep.mubr.f32.mxu0 0.0
    %1284 = vmatmul.mubr.f32.gmra.mxu0 %v1210
    %v1285 = vpop.f32.mrf.mxu0
    %v1286 = vadd.f32 0.0, %v1285
    %v1287 = vpop.f32.mrf.mxu0
    %1288 = vmatprep.mubr.f32.mxu0 0.0
    %1289 = vmatmul.mubr.f32.gmra.mxu0 %v1213
    %v1290 = vpop.f32.mrf.mxu0
    %v1291 = vadd.f32 0.0, %v1290
    %v1292 = vpop.f32.mrf.mxu0
    %1293 = vdwg.mxu0
    %v1295 = vsel %vm300, %v619, 0
    %v1298 = vsel %vm300, %v621, 0
    %v1301 = vsel %vm1215, %v622, 0
    %1303 = vmatprep.subr.mxu0 0.0
    %1304 = vmatpush1.msra.mxu0 0.0
    %1305 = vmatprep.subr.mxu0 0.0
    %1306 = vmatpush1.msra.mxu0 0.0
    %1307 = vmatprep.subr.mxu0 0.0
    %1308 = vmatpush1.msra.mxu0 0.0
    %1309 = vmatprep.subr.mxu0 0.0
    %1310 = vmatpush1.msra.mxu0 0.0
    %1311 = vmatprep.subr.mxu0 0.0
    %1312 = vmatpush1.msra.mxu0 0.0
    %1313 = vmatprep.subr.mxu0 0.0
    %1314 = vmatpush1.msra.mxu0 0.0
    %1315 = vmatprep.subr.mxu0 0.0
    %1316 = vmatpush1.msra.mxu0 0.0
    %1317 = vmatprep.subr.mxu0 0.0
    %1318 = vmatpush1.msra.mxu0 0.0
    %1319 = vmatprep.subr.mxu0 0.0
    %1320 = vmatpush1.msra.mxu0 0.0
    %1321 = vmatprep.subr.mxu0 0.0
    %1322 = vmatpush1.msra.mxu0 0.0
    %1323 = vmatprep.subr.mxu0 0.0
    %1324 = vmatpush1.msra.mxu0 0.0
    %1325 = vmatprep.subr.mxu0 0.0
    %1326 = vmatpush1.msra.mxu0 0.0
    %1327 = vmatprep.subr.mxu0 0.0
    %1328 = vmatpush1.msra.mxu0 0.0
    %1329 = vmatprep.subr.mxu0 0.0
    %1330 = vmatpush1.msra.mxu0 0.0
    %1331 = vmatprep.subr.mxu0 0.0
    %1332 = vmatpush1.msra.mxu0 0.0
    %1333 = vmatprep.subr.mxu0 0.0
    %1334 = vmatpush1.msra.mxu0 %v1301
    %1335 = vmatprep.subr.mxu0 0.0
    %1336 = vmatpush2.msra.mxu0 0.0
    %1337 = vmatprep.subr.mxu0 0.0
    %1338 = vmatpush2.msra.mxu0 0.0
    %1339 = vmatprep.subr.mxu0 0.0
    %1340 = vmatpush2.msra.mxu0 0.0
    %1341 = vmatprep.subr.mxu0 0.0
    %1342 = vmatpush2.msra.mxu0 0.0
    %1343 = vmatprep.subr.mxu0 0.0
    %1344 = vmatpush2.msra.mxu0 0.0
    %1345 = vmatprep.subr.mxu0 0.0
    %1346 = vmatpush2.msra.mxu0 0.0
    %1347 = vmatprep.subr.mxu0 0.0
    %1348 = vmatpush2.msra.mxu0 0.0
    %1349 = vmatprep.subr.mxu0 0.0
    %1350 = vmatpush2.msra.mxu0 0.0
    %1351 = vmatprep.subr.mxu0 0.0
    %1352 = vmatpush2.msra.mxu0 0.0
    %1353 = vmatprep.subr.mxu0 0.0
    %1354 = vmatpush2.msra.mxu0 0.0
    %1355 = vmatprep.subr.mxu0 0.0
    %1356 = vmatpush2.msra.mxu0 0.0
    %1357 = vmatprep.subr.mxu0 0.0
    %1358 = vmatpush2.msra.mxu0 0.0
    %1359 = vmatprep.subr.mxu0 0.0
    %1360 = vmatpush2.msra.mxu0 0.0
    %1361 = vmatprep.subr.mxu0 0.0
    %1362 = vmatpush2.msra.mxu0 0.0
    %1363 = vmatprep.subr.mxu0 0.0
    %1364 = vmatpush2.msra.mxu0 0.0
    %1365 = vmatprep.subr.mxu0 0.0
    %1366 = vmatpush2.msra.mxu0 0.0
    %1367 = vmatprep.mubr.f32.mxu0 0.0
    %1368 = vmatmul.mubr.f32.gmra.mxu0 %v1295
    %v1369 = vpop.f32.mrf.mxu0
    %v1370 = vadd.f32 %v1286, %v1369
    %v1371 = vpop.f32.mrf.mxu0
    %1372 = vmatprep.mubr.f32.mxu0 0.0
    %1373 = vmatmul.mubr.f32.gmra.mxu0 %v1298
    %v1374 = vpop.f32.mrf.mxu0
    %v1375 = vadd.f32 %v1291, %v1374
    %v1376 = vpop.f32.mrf.mxu0
    %1377 = vdwg.mxu0
    %s1378 = scalar_lea.vmem %s1, 64
    %v1379 = vld [vmem:[%s1378] sm:$0xff]
    %v1380 = vld [vmem:[%s1378 + $0x8] sm:$0xff]
    %v1381 = vld [vmem:[%s1378 + $0x10] sm:$0xff]
    %v1382 = vld [vmem:[%s1378 + $0x18] sm:$0xff]
    %s1383 = scalar_lea.vmem %s4, 2
    %v1384 = vld [vmem:[%s1383] sm:$0x1]
    %v1386 = vlaneseq
    %v1387 = vshrl.u32 %v1386, 7
    %v1388 = vsub.s32 0, %v1387
    %v1389 = vrot.slane %v1384, %v1388
    %1391 = vmatprep.subr.mxu0 0.0
    %1392 = vmatpush1.msra.mxu0 0.0
    %1393 = vmatprep.subr.mxu0 0.0
    %1394 = vmatpush1.msra.mxu0 0.0
    %1395 = vmatprep.subr.mxu0 0.0
    %1396 = vmatpush1.msra.mxu0 0.0
    %1397 = vmatprep.subr.mxu0 0.0
    %1398 = vmatpush1.msra.mxu0 0.0
    %1399 = vmatprep.subr.mxu0 0.0
    %1400 = vmatpush1.msra.mxu0 0.0
    %1401 = vmatprep.subr.mxu0 0.0
    %1402 = vmatpush1.msra.mxu0 0.0
    %1403 = vmatprep.subr.mxu0 0.0
    %1404 = vmatpush1.msra.mxu0 0.0
    %1405 = vmatprep.subr.mxu0 0.0
    %1406 = vmatpush1.msra.mxu0 0.0
    %1407 = vmatprep.subr.mxu0 0.0
    %1408 = vmatpush1.msra.mxu0 0.0
    %1409 = vmatprep.subr.mxu0 0.0
    %1410 = vmatpush1.msra.mxu0 0.0
    %1411 = vmatprep.subr.mxu0 0.0
    %1412 = vmatpush1.msra.mxu0 0.0
    %1413 = vmatprep.subr.mxu0 0.0
    %1414 = vmatpush1.msra.mxu0 0.0
    %1415 = vmatprep.subr.mxu0 0.0
    %1416 = vmatpush1.msra.mxu0 %v1382
    %1417 = vmatprep.subr.mxu0 0.0
    %1418 = vmatpush1.msra.mxu0 %v1381
    %1419 = vmatprep.subr.mxu0 0.0
    %1420 = vmatpush1.msra.mxu0 %v1380
    %1421 = vmatprep.subr.mxu0 0.0
    %1422 = vmatpush1.msra.mxu0 %v1379
    %1423 = vmatprep.subr.mxu0 0.0
    %1424 = vmatpush2.msra.mxu0 0.0
    %1425 = vmatprep.subr.mxu0 0.0
    %1426 = vmatpush2.msra.mxu0 0.0
    %1427 = vmatprep.subr.mxu0 0.0
    %1428 = vmatpush2.msra.mxu0 0.0
    %1429 = vmatprep.subr.mxu0 0.0
    %1430 = vmatpush2.msra.mxu0 0.0
    %1431 = vmatprep.subr.mxu0 0.0
    %1432 = vmatpush2.msra.mxu0 0.0
    %1433 = vmatprep.subr.mxu0 0.0
    %1434 = vmatpush2.msra.mxu0 0.0
    %1435 = vmatprep.subr.mxu0 0.0
    %1436 = vmatpush2.msra.mxu0 0.0
    %1437 = vmatprep.subr.mxu0 0.0
    %1438 = vmatpush2.msra.mxu0 0.0
    %1439 = vmatprep.subr.mxu0 0.0
    %1440 = vmatpush2.msra.mxu0 0.0
    %1441 = vmatprep.subr.mxu0 0.0
    %1442 = vmatpush2.msra.mxu0 0.0
    %1443 = vmatprep.subr.mxu0 0.0
    %1444 = vmatpush2.msra.mxu0 0.0
    %1445 = vmatprep.subr.mxu0 0.0
    %1446 = vmatpush2.msra.mxu0 0.0
    %1447 = vmatprep.subr.mxu0 0.0
    %1448 = vmatpush2.msra.mxu0 0.0
    %1449 = vmatprep.subr.mxu0 0.0
    %1450 = vmatpush2.msra.mxu0 0.0
    %1451 = vmatprep.subr.mxu0 0.0
    %1452 = vmatpush2.msra.mxu0 0.0
    %1453 = vmatprep.subr.mxu0 0.0
    %1454 = vmatpush2.msra.mxu0 0.0
    %1455 = vmatprep.mubr.f32.mxu0 0.0
    %1456 = vmatmul.mubr.f32.gmra.mxu0 %v48
    %v1457 = vpop.f32.mrf.mxu0
    %v1458 = vadd.f32 %v1389, %v1457
    %v1459 = vpop.f32.mrf.mxu0
    %1460 = vmatprep.mubr.f32.mxu0 0.0
    %1461 = vmatmul.mubr.f32.gmra.mxu0 %v51
    %v1462 = vpop.f32.mrf.mxu0
    %v1463 = vadd.f32 %v1389, %v1462
    %v1464 = vpop.f32.mrf.mxu0
    %1465 = vdwg.mxu0
    %s1466 = scalar_lea.vmem %s2, 64
    %v1467 = vld [vmem:[%s1466] sm:$0xff]
    %v1468 = vld [vmem:[%s1466 + $0x8] sm:$0xff]
    %v1469 = vld [vmem:[%s1466 + $0x10] sm:$0xff]
    %v1470 = vld [vmem:[%s1466 + $0x18] sm:$0xff]
    %s1471 = scalar_lea.vmem %s5, 2
    %v1472 = vld [vmem:[%s1471] sm:$0x1]
    %v1474 = vlaneseq
    %v1475 = vshrl.u32 %v1474, 7
    %v1476 = vsub.s32 0, %v1475
    %v1477 = vrot.slane %v1472, %v1476
    %1479 = vmatprep.subr.mxu0 0.0
    %1480 = vmatpush1.msra.mxu0 0.0
    %1481 = vmatprep.subr.mxu0 0.0
    %1482 = vmatpush1.msra.mxu0 0.0
    %1483 = vmatprep.subr.mxu0 0.0
    %1484 = vmatpush1.msra.mxu0 0.0
    %1485 = vmatprep.subr.mxu0 0.0
    %1486 = vmatpush1.msra.mxu0 0.0
    %1487 = vmatprep.subr.mxu0 0.0
    %1488 = vmatpush1.msra.mxu0 0.0
    %1489 = vmatprep.subr.mxu0 0.0
    %1490 = vmatpush1.msra.mxu0 0.0
    %1491 = vmatprep.subr.mxu0 0.0
    %1492 = vmatpush1.msra.mxu0 0.0
    %1493 = vmatprep.subr.mxu0 0.0
    %1494 = vmatpush1.msra.mxu0 0.0
    %1495 = vmatprep.subr.mxu0 0.0
    %1496 = vmatpush1.msra.mxu0 0.0
    %1497 = vmatprep.subr.mxu0 0.0
    %1498 = vmatpush1.msra.mxu0 0.0
    %1499 = vmatprep.subr.mxu0 0.0
    %1500 = vmatpush1.msra.mxu0 0.0
    %1501 = vmatprep.subr.mxu0 0.0
    %1502 = vmatpush1.msra.mxu0 0.0
    %1503 = vmatprep.subr.mxu0 0.0
    %1504 = vmatpush1.msra.mxu0 %v1470
    %1505 = vmatprep.subr.mxu0 0.0
    %1506 = vmatpush1.msra.mxu0 %v1469
    %1507 = vmatprep.subr.mxu0 0.0
    %1508 = vmatpush1.msra.mxu0 %v1468
    %1509 = vmatprep.subr.mxu0 0.0
    %1510 = vmatpush1.msra.mxu0 %v1467
    %1511 = vmatprep.subr.mxu0 0.0
    %1512 = vmatpush2.msra.mxu0 0.0
    %1513 = vmatprep.subr.mxu0 0.0
    %1514 = vmatpush2.msra.mxu0 0.0
    %1515 = vmatprep.subr.mxu0 0.0
    %1516 = vmatpush2.msra.mxu0 0.0
    %1517 = vmatprep.subr.mxu0 0.0
    %1518 = vmatpush2.msra.mxu0 0.0
    %1519 = vmatprep.subr.mxu0 0.0
    %1520 = vmatpush2.msra.mxu0 0.0
    %1521 = vmatprep.subr.mxu0 0.0
    %1522 = vmatpush2.msra.mxu0 0.0
    %1523 = vmatprep.subr.mxu0 0.0
    %1524 = vmatpush2.msra.mxu0 0.0
    %1525 = vmatprep.subr.mxu0 0.0
    %1526 = vmatpush2.msra.mxu0 0.0
    %1527 = vmatprep.subr.mxu0 0.0
    %1528 = vmatpush2.msra.mxu0 0.0
    %1529 = vmatprep.subr.mxu0 0.0
    %1530 = vmatpush2.msra.mxu0 0.0
    %1531 = vmatprep.subr.mxu0 0.0
    %1532 = vmatpush2.msra.mxu0 0.0
    %1533 = vmatprep.subr.mxu0 0.0
    %1534 = vmatpush2.msra.mxu0 0.0
    %1535 = vmatprep.subr.mxu0 0.0
    %1536 = vmatpush2.msra.mxu0 0.0
    %1537 = vmatprep.subr.mxu0 0.0
    %1538 = vmatpush2.msra.mxu0 0.0
    %1539 = vmatprep.subr.mxu0 0.0
    %1540 = vmatpush2.msra.mxu0 0.0
    %1541 = vmatprep.subr.mxu0 0.0
    %1542 = vmatpush2.msra.mxu0 0.0
    %1543 = vmatprep.mubr.f32.mxu0 0.0
    %1544 = vmatmul.mubr.f32.gmra.mxu0 %v48
    %v1545 = vpop.f32.mrf.mxu0
    %v1546 = vadd.f32 %v1477, %v1545
    %v1547 = vpop.f32.mrf.mxu0
    %1548 = vmatprep.mubr.f32.mxu0 0.0
    %1549 = vmatmul.mubr.f32.gmra.mxu0 %v51
    %v1550 = vpop.f32.mrf.mxu0
    %v1551 = vadd.f32 %v1477, %v1550
    %v1552 = vpop.f32.mrf.mxu0
    %1553 = vdwg.mxu0
    %s1554 = scalar_lea.vmem %s3, 64
    %v1555 = vld [vmem:[%s1554] sm:$0xff]
    %v1556 = vld [vmem:[%s1554 + $0x8] sm:$0xff]
    %v1557 = vld [vmem:[%s1554 + $0x10] sm:$0xff]
    %v1558 = vld [vmem:[%s1554 + $0x18] sm:$0xff]
    %s1559 = scalar_lea.vmem %s6, 2
    %v1560 = vld [vmem:[%s1559] sm:$0x1]
    %v1562 = vlaneseq
    %v1563 = vshrl.u32 %v1562, 7
    %v1564 = vsub.s32 0, %v1563
    %v1565 = vrot.slane %v1560, %v1564
    %1567 = vmatprep.subr.mxu0 0.0
    %1568 = vmatpush1.msra.mxu0 0.0
    %1569 = vmatprep.subr.mxu0 0.0
    %1570 = vmatpush1.msra.mxu0 0.0
    %1571 = vmatprep.subr.mxu0 0.0
    %1572 = vmatpush1.msra.mxu0 0.0
    %1573 = vmatprep.subr.mxu0 0.0
    %1574 = vmatpush1.msra.mxu0 0.0
    %1575 = vmatprep.subr.mxu0 0.0
    %1576 = vmatpush1.msra.mxu0 0.0
    %1577 = vmatprep.subr.mxu0 0.0
    %1578 = vmatpush1.msra.mxu0 0.0
    %1579 = vmatprep.subr.mxu0 0.0
    %1580 = vmatpush1.msra.mxu0 0.0
    %1581 = vmatprep.subr.mxu0 0.0
    %1582 = vmatpush1.msra.mxu0 0.0
    %1583 = vmatprep.subr.mxu0 0.0
    %1584 = vmatpush1.msra.mxu0 0.0
    %1585 = vmatprep.subr.mxu0 0.0
    %1586 = vmatpush1.msra.mxu0 0.0
    %1587 = vmatprep.subr.mxu0 0.0
    %1588 = vmatpush1.msra.mxu0 0.0
    %1589 = vmatprep.subr.mxu0 0.0
    %1590 = vmatpush1.msra.mxu0 0.0
    %1591 = vmatprep.subr.mxu0 0.0
    %1592 = vmatpush1.msra.mxu0 %v1558
    %1593 = vmatprep.subr.mxu0 0.0
    %1594 = vmatpush1.msra.mxu0 %v1557
    %1595 = vmatprep.subr.mxu0 0.0
    %1596 = vmatpush1.msra.mxu0 %v1556
    %1597 = vmatprep.subr.mxu0 0.0
    %1598 = vmatpush1.msra.mxu0 %v1555
    %1599 = vmatprep.subr.mxu0 0.0
    %1600 = vmatpush2.msra.mxu0 0.0
    %1601 = vmatprep.subr.mxu0 0.0
    %1602 = vmatpush2.msra.mxu0 0.0
    %1603 = vmatprep.subr.mxu0 0.0
    %1604 = vmatpush2.msra.mxu0 0.0
    %1605 = vmatprep.subr.mxu0 0.0
    %1606 = vmatpush2.msra.mxu0 0.0
    %1607 = vmatprep.subr.mxu0 0.0
    %1608 = vmatpush2.msra.mxu0 0.0
    %1609 = vmatprep.subr.mxu0 0.0
    %1610 = vmatpush2.msra.mxu0 0.0
    %1611 = vmatprep.subr.mxu0 0.0
    %1612 = vmatpush2.msra.mxu0 0.0
    %1613 = vmatprep.subr.mxu0 0.0
    %1614 = vmatpush2.msra.mxu0 0.0
    %1615 = vmatprep.subr.mxu0 0.0
    %1616 = vmatpush2.msra.mxu0 0.0
    %1617 = vmatprep.subr.mxu0 0.0
    %1618 = vmatpush2.msra.mxu0 0.0
    %1619 = vmatprep.subr.mxu0 0.0
    %1620 = vmatpush2.msra.mxu0 0.0
    %1621 = vmatprep.subr.mxu0 0.0
    %1622 = vmatpush2.msra.mxu0 0.0
    %1623 = vmatprep.subr.mxu0 0.0
    %1624 = vmatpush2.msra.mxu0 0.0
    %1625 = vmatprep.subr.mxu0 0.0
    %1626 = vmatpush2.msra.mxu0 0.0
    %1627 = vmatprep.subr.mxu0 0.0
    %1628 = vmatpush2.msra.mxu0 0.0
    %1629 = vmatprep.subr.mxu0 0.0
    %1630 = vmatpush2.msra.mxu0 0.0
    %1631 = vmatprep.mubr.f32.mxu0 0.0
    %1632 = vmatmul.mubr.f32.gmra.mxu0 %v48
    %v1633 = vpop.f32.mrf.mxu0
    %v1634 = vadd.f32 %v1565, %v1633
    %v1635 = vpop.f32.mrf.mxu0
    %1636 = vmatprep.mubr.f32.mxu0 0.0
    %1637 = vmatmul.mubr.f32.gmra.mxu0 %v51
    %v1638 = vpop.f32.mrf.mxu0
    %v1639 = vadd.f32 %v1565, %v1638
    %v1640 = vpop.f32.mrf.mxu0
    %1641 = vdwg.mxu0
    %v1643 = vsel %vm300, %v1458, 0
    %v1646 = vsel %vm300, %v1546, 0
    %1648 = vmatprep.subr.mxu0 0.0
    %1649 = vmatpush1.xpose.msra.mxu0 0.0
    %1650 = vmatprep.subr.mxu0 0.0
    %1651 = vmatpush1.xpose.msra.mxu0 0.0
    %1652 = vmatprep.subr.mxu0 0.0
    %1653 = vmatpush1.xpose.msra.mxu0 0.0
    %1654 = vmatprep.subr.mxu0 0.0
    %1655 = vmatpush1.xpose.msra.mxu0 0.0
    %1656 = vmatprep.subr.mxu0 0.0
    %1657 = vmatpush1.xpose.msra.mxu0 0.0
    %1658 = vmatprep.subr.mxu0 0.0
    %1659 = vmatpush1.xpose.msra.mxu0 0.0
    %1660 = vmatprep.subr.mxu0 0.0
    %1661 = vmatpush1.xpose.msra.mxu0 0.0
    %1662 = vmatprep.subr.mxu0 0.0
    %1663 = vmatpush1.xpose.msra.mxu0 0.0
    %1664 = vmatprep.subr.mxu0 0.0
    %1665 = vmatpush1.xpose.msra.mxu0 0.0
    %1666 = vmatprep.subr.mxu0 0.0
    %1667 = vmatpush1.xpose.msra.mxu0 0.0
    %1668 = vmatprep.subr.mxu0 0.0
    %1669 = vmatpush1.xpose.msra.mxu0 0.0
    %1670 = vmatprep.subr.mxu0 0.0
    %1671 = vmatpush1.xpose.msra.mxu0 0.0
    %1672 = vmatprep.subr.mxu0 0.0
    %1673 = vmatpush1.xpose.msra.mxu0 0.0
    %1674 = vmatprep.subr.mxu0 0.0
    %1675 = vmatpush1.xpose.msra.mxu0 0.0
    %1676 = vmatprep.subr.mxu0 0.0
    %1677 = vmatpush1.xpose.msra.mxu0 0.0
    %1678 = vmatprep.subr.mxu0 0.0
    %1679 = vmatpush1.xpose.msra.mxu0 %v1646
    %1680 = vmatprep.subr.mxu0 0.0
    %1681 = vmatpush2.xpose.msra.mxu0 0.0
    %1682 = vmatprep.subr.mxu0 0.0
    %1683 = vmatpush2.xpose.msra.mxu0 0.0
    %1684 = vmatprep.subr.mxu0 0.0
    %1685 = vmatpush2.xpose.msra.mxu0 0.0
    %1686 = vmatprep.subr.mxu0 0.0
    %1687 = vmatpush2.xpose.msra.mxu0 0.0
    %1688 = vmatprep.subr.mxu0 0.0
    %1689 = vmatpush2.xpose.msra.mxu0 0.0
    %1690 = vmatprep.subr.mxu0 0.0
    %1691 = vmatpush2.xpose.msra.mxu0 0.0
    %1692 = vmatprep.subr.mxu0 0.0
    %1693 = vmatpush2.xpose.msra.mxu0 0.0
    %1694 = vmatprep.subr.mxu0 0.0
    %1695 = vmatpush2.xpose.msra.mxu0 0.0
    %1696 = vmatprep.subr.mxu0 0.0
    %1697 = vmatpush2.xpose.msra.mxu0 0.0
    %1698 = vmatprep.subr.mxu0 0.0
    %1699 = vmatpush2.xpose.msra.mxu0 0.0
    %1700 = vmatprep.subr.mxu0 0.0
    %1701 = vmatpush2.xpose.msra.mxu0 0.0
    %1702 = vmatprep.subr.mxu0 0.0
    %1703 = vmatpush2.xpose.msra.mxu0 0.0
    %1704 = vmatprep.subr.mxu0 0.0
    %1705 = vmatpush2.xpose.msra.mxu0 0.0
    %1706 = vmatprep.subr.mxu0 0.0
    %1707 = vmatpush2.xpose.msra.mxu0 0.0
    %1708 = vmatprep.subr.mxu0 0.0
    %1709 = vmatpush2.xpose.msra.mxu0 0.0
    %1710 = vmatprep.subr.mxu0 0.0
    %1711 = vmatpush2.xpose.msra.mxu0 0.0
    %1712 = vmatprep.mubr.f32.mxu0 0.0
    %1713 = vmatmul.mubr.f32.gmra.mxu0 %v1643
    %v1714 = vpop.f32.mrf.mxu0
    %v1715 = vadd.f32 0.0, %v1714
    %v1716 = vpop.f32.mrf.mxu0
    %1717 = vdwg.mxu0
    %v1719 = vsel %vm300, %v1463, 0
    %v1722 = vsel %vm300, %v1551, 0
    %1724 = vmatprep.subr.mxu0 0.0
    %1725 = vmatpush1.xpose.msra.mxu0 0.0
    %1726 = vmatprep.subr.mxu0 0.0
    %1727 = vmatpush1.xpose.msra.mxu0 0.0
    %1728 = vmatprep.subr.mxu0 0.0
    %1729 = vmatpush1.xpose.msra.mxu0 0.0
    %1730 = vmatprep.subr.mxu0 0.0
    %1731 = vmatpush1.xpose.msra.mxu0 0.0
    %1732 = vmatprep.subr.mxu0 0.0
    %1733 = vmatpush1.xpose.msra.mxu0 0.0
    %1734 = vmatprep.subr.mxu0 0.0
    %1735 = vmatpush1.xpose.msra.mxu0 0.0
    %1736 = vmatprep.subr.mxu0 0.0
    %1737 = vmatpush1.xpose.msra.mxu0 0.0
    %1738 = vmatprep.subr.mxu0 0.0
    %1739 = vmatpush1.xpose.msra.mxu0 0.0
    %1740 = vmatprep.subr.mxu0 0.0
    %1741 = vmatpush1.xpose.msra.mxu0 0.0
    %1742 = vmatprep.subr.mxu0 0.0
    %1743 = vmatpush1.xpose.msra.mxu0 0.0
    %1744 = vmatprep.subr.mxu0 0.0
    %1745 = vmatpush1.xpose.msra.mxu0 0.0
    %1746 = vmatprep.subr.mxu0 0.0
    %1747 = vmatpush1.xpose.msra.mxu0 0.0
    %1748 = vmatprep.subr.mxu0 0.0
    %1749 = vmatpush1.xpose.msra.mxu0 0.0
    %1750 = vmatprep.subr.mxu0 0.0
    %1751 = vmatpush1.xpose.msra.mxu0 0.0
    %1752 = vmatprep.subr.mxu0 0.0
    %1753 = vmatpush1.xpose.msra.mxu0 0.0
    %1754 = vmatprep.subr.mxu0 0.0
    %1755 = vmatpush1.xpose.msra.mxu0 %v1722
    %1756 = vmatprep.subr.mxu0 0.0
    %1757 = vmatpush2.xpose.msra.mxu0 0.0
    %1758 = vmatprep.subr.mxu0 0.0
    %1759 = vmatpush2.xpose.msra.mxu0 0.0
    %1760 = vmatprep.subr.mxu0 0.0
    %1761 = vmatpush2.xpose.msra.mxu0 0.0
    %1762 = vmatprep.subr.mxu0 0.0
    %1763 = vmatpush2.xpose.msra.mxu0 0.0
    %1764 = vmatprep.subr.mxu0 0.0
    %1765 = vmatpush2.xpose.msra.mxu0 0.0
    %1766 = vmatprep.subr.mxu0 0.0
    %1767 = vmatpush2.xpose.msra.mxu0 0.0
    %1768 = vmatprep.subr.mxu0 0.0
    %1769 = vmatpush2.xpose.msra.mxu0 0.0
    %1770 = vmatprep.subr.mxu0 0.0
    %1771 = vmatpush2.xpose.msra.mxu0 0.0
    %1772 = vmatprep.subr.mxu0 0.0
    %1773 = vmatpush2.xpose.msra.mxu0 0.0
    %1774 = vmatprep.subr.mxu0 0.0
    %1775 = vmatpush2.xpose.msra.mxu0 0.0
    %1776 = vmatprep.subr.mxu0 0.0
    %1777 = vmatpush2.xpose.msra.mxu0 0.0
    %1778 = vmatprep.subr.mxu0 0.0
    %1779 = vmatpush2.xpose.msra.mxu0 0.0
    %1780 = vmatprep.subr.mxu0 0.0
    %1781 = vmatpush2.xpose.msra.mxu0 0.0
    %1782 = vmatprep.subr.mxu0 0.0
    %1783 = vmatpush2.xpose.msra.mxu0 0.0
    %1784 = vmatprep.subr.mxu0 0.0
    %1785 = vmatpush2.xpose.msra.mxu0 0.0
    %1786 = vmatprep.subr.mxu0 0.0
    %1787 = vmatpush2.xpose.msra.mxu0 0.0
    %1788 = vmatprep.mubr.f32.mxu0 0.0
    %1789 = vmatmul.mubr.f32.gmra.mxu0 %v1719
    %v1790 = vpop.f32.mrf.mxu0
    %v1791 = vadd.f32 0.0, %v1790
    %v1792 = vpop.f32.mrf.mxu0
    %1793 = vdwg.mxu0
    %v1794 = vsel %vm453, %v1715, -inf
    %1795 = vmax.xlane.f32.xlu0 %v1794
    %v1796 = vpop.xlane.xlu0 %1795
    %v1797 = vsel %vm453, %v1791, -inf
    %1798 = vmax.xlane.f32.xlu0 %v1797
    %v1799 = vpop.xlane.xlu0 %1798
    %v1800 = vsub.f32 %v1715, %v1796
    %v1801 = vsub.f32 %v1791, %v1799
    %v1802 = vmul.f32 %v1800, 1.442695
    %v1803 = vpow.pop %v1802
    %v1804 = vmul.f32 %v1801, 1.442695
    %v1805 = vpow.pop %v1804
    %v1806 = vsel %vm453, %v1803, 0.0
    %1807 = vadd.xlane.f32.xlu0 %v1806
    %v1808 = vpop.xlane.xlu0 %1807
    %v1809 = vsel %vm453, %v1805, 0.0
    %1810 = vadd.xlane.f32.xlu0 %v1809
    %v1811 = vpop.xlane.xlu0 %1810
    %v1813 = vsel %vm453, %v1803, 0
    %1815 = vmatprep.subr.mxu0 0.0
    %1816 = vmatpush1.msra.mxu0 0.0
    %1817 = vmatprep.subr.mxu0 0.0
    %1818 = vmatpush1.msra.mxu0 0.0
    %1819 = vmatprep.subr.mxu0 0.0
    %1820 = vmatpush1.msra.mxu0 0.0
    %1821 = vmatprep.subr.mxu0 0.0
    %1822 = vmatpush1.msra.mxu0 0.0
    %1823 = vmatprep.subr.mxu0 0.0
    %1824 = vmatpush1.msra.mxu0 0.0
    %1825 = vmatprep.subr.mxu0 0.0
    %1826 = vmatpush1.msra.mxu0 0.0
    %1827 = vmatprep.subr.mxu0 0.0
    %1828 = vmatpush1.msra.mxu0 0.0
    %1829 = vmatprep.subr.mxu0 0.0
    %1830 = vmatpush1.msra.mxu0 0.0
    %1831 = vmatprep.subr.mxu0 0.0
    %1832 = vmatpush1.msra.mxu0 0.0
    %1833 = vmatprep.subr.mxu0 0.0
    %1834 = vmatpush1.msra.mxu0 0.0
    %1835 = vmatprep.subr.mxu0 0.0
    %1836 = vmatpush1.msra.mxu0 0.0
    %1837 = vmatprep.subr.mxu0 0.0
    %1838 = vmatpush1.msra.mxu0 0.0
    %1839 = vmatprep.subr.mxu0 0.0
    %1840 = vmatpush1.msra.mxu0 0.0
    %1841 = vmatprep.subr.mxu0 0.0
    %1842 = vmatpush1.msra.mxu0 0.0
    %1843 = vmatprep.subr.mxu0 0.0
    %1844 = vmatpush1.msra.mxu0 0.0
    %1845 = vmatprep.subr.mxu0 0.0
    %1846 = vmatpush1.msra.mxu0 %v1634
    %1847 = vmatprep.subr.mxu0 0.0
    %1848 = vmatpush2.msra.mxu0 0.0
    %1849 = vmatprep.subr.mxu0 0.0
    %1850 = vmatpush2.msra.mxu0 0.0
    %1851 = vmatprep.subr.mxu0 0.0
    %1852 = vmatpush2.msra.mxu0 0.0
    %1853 = vmatprep.subr.mxu0 0.0
    %1854 = vmatpush2.msra.mxu0 0.0
    %1855 = vmatprep.subr.mxu0 0.0
    %1856 = vmatpush2.msra.mxu0 0.0
    %1857 = vmatprep.subr.mxu0 0.0
    %1858 = vmatpush2.msra.mxu0 0.0
    %1859 = vmatprep.subr.mxu0 0.0
    %1860 = vmatpush2.msra.mxu0 0.0
    %1861 = vmatprep.subr.mxu0 0.0
    %1862 = vmatpush2.msra.mxu0 0.0
    %1863 = vmatprep.subr.mxu0 0.0
    %1864 = vmatpush2.msra.mxu0 0.0
    %1865 = vmatprep.subr.mxu0 0.0
    %1866 = vmatpush2.msra.mxu0 0.0
    %1867 = vmatprep.subr.mxu0 0.0
    %1868 = vmatpush2.msra.mxu0 0.0
    %1869 = vmatprep.subr.mxu0 0.0
    %1870 = vmatpush2.msra.mxu0 0.0
    %1871 = vmatprep.subr.mxu0 0.0
    %1872 = vmatpush2.msra.mxu0 0.0
    %1873 = vmatprep.subr.mxu0 0.0
    %1874 = vmatpush2.msra.mxu0 0.0
    %1875 = vmatprep.subr.mxu0 0.0
    %1876 = vmatpush2.msra.mxu0 0.0
    %1877 = vmatprep.subr.mxu0 0.0
    %1878 = vmatpush2.msra.mxu0 0.0
    %1879 = vmatprep.mubr.f32.mxu0 0.0
    %1880 = vmatmul.mubr.f32.gmra.mxu0 %v1813
    %v1881 = vpop.f32.mrf.mxu0
    %v1882 = vadd.f32 0.0, %v1881
    %v1883 = vpop.f32.mrf.mxu0
    %1884 = vdwg.mxu0
    %v1886 = vsel %vm453, %v1805, 0
    %1888 = vmatprep.subr.mxu0 0.0
    %1889 = vmatpush1.msra.mxu0 0.0
    %1890 = vmatprep.subr.mxu0 0.0
    %1891 = vmatpush1.msra.mxu0 0.0
    %1892 = vmatprep.subr.mxu0 0.0
    %1893 = vmatpush1.msra.mxu0 0.0
    %1894 = vmatprep.subr.mxu0 0.0
    %1895 = vmatpush1.msra.mxu0 0.0
    %1896 = vmatprep.subr.mxu0 0.0
    %1897 = vmatpush1.msra.mxu0 0.0
    %1898 = vmatprep.subr.mxu0 0.0
    %1899 = vmatpush1.msra.mxu0 0.0
    %1900 = vmatprep.subr.mxu0 0.0
    %1901 = vmatpush1.msra.mxu0 0.0
    %1902 = vmatprep.subr.mxu0 0.0
    %1903 = vmatpush1.msra.mxu0 0.0
    %1904 = vmatprep.subr.mxu0 0.0
    %1905 = vmatpush1.msra.mxu0 0.0
    %1906 = vmatprep.subr.mxu0 0.0
    %1907 = vmatpush1.msra.mxu0 0.0
    %1908 = vmatprep.subr.mxu0 0.0
    %1909 = vmatpush1.msra.mxu0 0.0
    %1910 = vmatprep.subr.mxu0 0.0
    %1911 = vmatpush1.msra.mxu0 0.0
    %1912 = vmatprep.subr.mxu0 0.0
    %1913 = vmatpush1.msra.mxu0 0.0
    %1914 = vmatprep.subr.mxu0 0.0
    %1915 = vmatpush1.msra.mxu0 0.0
    %1916 = vmatprep.subr.mxu0 0.0
    %1917 = vmatpush1.msra.mxu0 0.0
    %1918 = vmatprep.subr.mxu0 0.0
    %1919 = vmatpush1.msra.mxu0 %v1639
    %1920 = vmatprep.subr.mxu0 0.0
    %1921 = vmatpush2.msra.mxu0 0.0
    %1922 = vmatprep.subr.mxu0 0.0
    %1923 = vmatpush2.msra.mxu0 0.0
    %1924 = vmatprep.subr.mxu0 0.0
    %1925 = vmatpush2.msra.mxu0 0.0
    %1926 = vmatprep.subr.mxu0 0.0
    %1927 = vmatpush2.msra.mxu0 0.0
    %1928 = vmatprep.subr.mxu0 0.0
    %1929 = vmatpush2.msra.mxu0 0.0
    %1930 = vmatprep.subr.mxu0 0.0
    %1931 = vmatpush2.msra.mxu0 0.0
    %1932 = vmatprep.subr.mxu0 0.0
    %1933 = vmatpush2.msra.mxu0 0.0
    %1934 = vmatprep.subr.mxu0 0.0
    %1935 = vmatpush2.msra.mxu0 0.0
    %1936 = vmatprep.subr.mxu0 0.0
    %1937 = vmatpush2.msra.mxu0 0.0
    %1938 = vmatprep.subr.mxu0 0.0
    %1939 = vmatpush2.msra.mxu0 0.0
    %1940 = vmatprep.subr.mxu0 0.0
    %1941 = vmatpush2.msra.mxu0 0.0
    %1942 = vmatprep.subr.mxu0 0.0
    %1943 = vmatpush2.msra.mxu0 0.0
    %1944 = vmatprep.subr.mxu0 0.0
    %1945 = vmatpush2.msra.mxu0 0.0
    %1946 = vmatprep.subr.mxu0 0.0
    %1947 = vmatpush2.msra.mxu0 0.0
    %1948 = vmatprep.subr.mxu0 0.0
    %1949 = vmatpush2.msra.mxu0 0.0
    %1950 = vmatprep.subr.mxu0 0.0
    %1951 = vmatpush2.msra.mxu0 0.0
    %1952 = vmatprep.mubr.f32.mxu0 0.0
    %1953 = vmatmul.mubr.f32.gmra.mxu0 %v1886
    %v1954 = vpop.f32.mrf.mxu0
    %v1955 = vadd.f32 0.0, %v1954
    %v1956 = vpop.f32.mrf.mxu0
    %1957 = vdwg.mxu0
    %v1958 = vrcp.pop %v1808
    %v1959 = vmul.f32 %v1882, %v1958
    %v1960 = vrcp.pop %v1811
    %v1961 = vmul.f32 %v1955, %v1960
    %s1962 = scalar_lea.vmem %s7, 8
    %v1963 = vld [vmem:[%s1962] sm:$0xf]
    %v1965 = vsel %vm300, %v1959, 0
    %v1968 = vsel %vm300, %v1961, 0
    %v1971 = vsel %vm1215, %v1963, 0
    %1973 = vmatprep.subr.mxu0 0.0
    %1974 = vmatpush1.msra.mxu0 0.0
    %1975 = vmatprep.subr.mxu0 0.0
    %1976 = vmatpush1.msra.mxu0 0.0
    %1977 = vmatprep.subr.mxu0 0.0
    %1978 = vmatpush1.msra.mxu0 0.0
    %1979 = vmatprep.subr.mxu0 0.0
    %1980 = vmatpush1.msra.mxu0 0.0
    %1981 = vmatprep.subr.mxu0 0.0
    %1982 = vmatpush1.msra.mxu0 0.0
    %1983 = vmatprep.subr.mxu0 0.0
    %1984 = vmatpush1.msra.mxu0 0.0
    %1985 = vmatprep.subr.mxu0 0.0
    %1986 = vmatpush1.msra.mxu0 0.0
    %1987 = vmatprep.subr.mxu0 0.0
    %1988 = vmatpush1.msra.mxu0 0.0
    %1989 = vmatprep.subr.mxu0 0.0
    %1990 = vmatpush1.msra.mxu0 0.0
    %1991 = vmatprep.subr.mxu0 0.0
    %1992 = vmatpush1.msra.mxu0 0.0
    %1993 = vmatprep.subr.mxu0 0.0
    %1994 = vmatpush1.msra.mxu0 0.0
    %1995 = vmatprep.subr.mxu0 0.0
    %1996 = vmatpush1.msra.mxu0 0.0
    %1997 = vmatprep.subr.mxu0 0.0
    %1998 = vmatpush1.msra.mxu0 0.0
    %1999 = vmatprep.subr.mxu0 0.0
    %2000 = vmatpush1.msra.mxu0 0.0
    %2001 = vmatprep.subr.mxu0 0.0
    %2002 = vmatpush1.msra.mxu0 0.0
    %2003 = vmatprep.subr.mxu0 0.0
    %2004 = vmatpush1.msra.mxu0 %v1971
    %2005 = vmatprep.subr.mxu0 0.0
    %2006 = vmatpush2.msra.mxu0 0.0
    %2007 = vmatprep.subr.mxu0 0.0
    %2008 = vmatpush2.msra.mxu0 0.0
    %2009 = vmatprep.subr.mxu0 0.0
    %2010 = vmatpush2.msra.mxu0 0.0
    %2011 = vmatprep.subr.mxu0 0.0
    %2012 = vmatpush2.msra.mxu0 0.0
    %2013 = vmatprep.subr.mxu0 0.0
    %2014 = vmatpush2.msra.mxu0 0.0
    %2015 = vmatprep.subr.mxu0 0.0
    %2016 = vmatpush2.msra.mxu0 0.0
    %2017 = vmatprep.subr.mxu0 0.0
    %2018 = vmatpush2.msra.mxu0 0.0
    %2019 = vmatprep.subr.mxu0 0.0
    %2020 = vmatpush2.msra.mxu0 0.0
    %2021 = vmatprep.subr.mxu0 0.0
    %2022 = vmatpush2.msra.mxu0 0.0
    %2023 = vmatprep.subr.mxu0 0.0
    %2024 = vmatpush2.msra.mxu0 0.0
    %2025 = vmatprep.subr.mxu0 0.0
    %2026 = vmatpush2.msra.mxu0 0.0
    %2027 = vmatprep.subr.mxu0 0.0
    %2028 = vmatpush2.msra.mxu0 0.0
    %2029 = vmatprep.subr.mxu0 0.0
    %2030 = vmatpush2.msra.mxu0 0.0
    %2031 = vmatprep.subr.mxu0 0.0
    %2032 = vmatpush2.msra.mxu0 0.0
    %2033 = vmatprep.subr.mxu0 0.0
    %2034 = vmatpush2.msra.mxu0 0.0
    %2035 = vmatprep.subr.mxu0 0.0
    %2036 = vmatpush2.msra.mxu0 0.0
    %2037 = vmatprep.mubr.f32.mxu0 0.0
    %2038 = vmatmul.mubr.f32.gmra.mxu0 %v1965
    %v2039 = vpop.f32.mrf.mxu0
    %v2040 = vadd.f32 0.0, %v2039
    %v2041 = vpop.f32.mrf.mxu0
    %2042 = vmatprep.mubr.f32.mxu0 0.0
    %2043 = vmatmul.mubr.f32.gmra.mxu0 %v1968
    %v2044 = vpop.f32.mrf.mxu0
    %v2045 = vadd.f32 0.0, %v2044
    %v2046 = vpop.f32.mrf.mxu0
    %2047 = vdwg.mxu0
    %v2048 = vadd.f32 %v1370, %v2040
    %v2049 = vadd.f32 %v1375, %v2045
    %s2050 = scalar_lea.vmem %s1, 96
    %v2051 = vld [vmem:[%s2050] sm:$0xff]
    %v2052 = vld [vmem:[%s2050 + $0x8] sm:$0xff]
    %v2053 = vld [vmem:[%s2050 + $0x10] sm:$0xff]
    %v2054 = vld [vmem:[%s2050 + $0x18] sm:$0xff]
    %s2055 = scalar_lea.vmem %s4, 3
    %v2056 = vld [vmem:[%s2055] sm:$0x1]
    %v2058 = vlaneseq
    %v2059 = vshrl.u32 %v2058, 7
    %v2060 = vsub.s32 0, %v2059
    %v2061 = vrot.slane %v2056, %v2060
    %2063 = vmatprep.subr.mxu0 0.0
    %2064 = vmatpush1.msra.mxu0 0.0
    %2065 = vmatprep.subr.mxu0 0.0
    %2066 = vmatpush1.msra.mxu0 0.0
    %2067 = vmatprep.subr.mxu0 0.0
    %2068 = vmatpush1.msra.mxu0 0.0
    %2069 = vmatprep.subr.mxu0 0.0
    %2070 = vmatpush1.msra.mxu0 0.0
    %2071 = vmatprep.subr.mxu0 0.0
    %2072 = vmatpush1.msra.mxu0 0.0
    %2073 = vmatprep.subr.mxu0 0.0
    %2074 = vmatpush1.msra.mxu0 0.0
    %2075 = vmatprep.subr.mxu0 0.0
    %2076 = vmatpush1.msra.mxu0 0.0
    %2077 = vmatprep.subr.mxu0 0.0
    %2078 = vmatpush1.msra.mxu0 0.0
    %2079 = vmatprep.subr.mxu0 0.0
    %2080 = vmatpush1.msra.mxu0 0.0
    %2081 = vmatprep.subr.mxu0 0.0
    %2082 = vmatpush1.msra.mxu0 0.0
    %2083 = vmatprep.subr.mxu0 0.0
    %2084 = vmatpush1.msra.mxu0 0.0
    %2085 = vmatprep.subr.mxu0 0.0
    %2086 = vmatpush1.msra.mxu0 0.0
    %2087 = vmatprep.subr.mxu0 0.0
    %2088 = vmatpush1.msra.mxu0 %v2054
    %2089 = vmatprep.subr.mxu0 0.0
    %2090 = vmatpush1.msra.mxu0 %v2053
    %2091 = vmatprep.subr.mxu0 0.0
    %2092 = vmatpush1.msra.mxu0 %v2052
    %2093 = vmatprep.subr.mxu0 0.0
    %2094 = vmatpush1.msra.mxu0 %v2051
    %2095 = vmatprep.subr.mxu0 0.0
    %2096 = vmatpush2.msra.mxu0 0.0
    %2097 = vmatprep.subr.mxu0 0.0
    %2098 = vmatpush2.msra.mxu0 0.0
    %2099 = vmatprep.subr.mxu0 0.0
    %2100 = vmatpush2.msra.mxu0 0.0
    %2101 = vmatprep.subr.mxu0 0.0
    %2102 = vmatpush2.msra.mxu0 0.0
    %2103 = vmatprep.subr.mxu0 0.0
    %2104 = vmatpush2.msra.mxu0 0.0
    %2105 = vmatprep.subr.mxu0 0.0
    %2106 = vmatpush2.msra.mxu0 0.0
    %2107 = vmatprep.subr.mxu0 0.0
    %2108 = vmatpush2.msra.mxu0 0.0
    %2109 = vmatprep.subr.mxu0 0.0
    %2110 = vmatpush2.msra.mxu0 0.0
    %2111 = vmatprep.subr.mxu0 0.0
    %2112 = vmatpush2.msra.mxu0 0.0
    %2113 = vmatprep.subr.mxu0 0.0
    %2114 = vmatpush2.msra.mxu0 0.0
    %2115 = vmatprep.subr.mxu0 0.0
    %2116 = vmatpush2.msra.mxu0 0.0
    %2117 = vmatprep.subr.mxu0 0.0
    %2118 = vmatpush2.msra.mxu0 0.0
    %2119 = vmatprep.subr.mxu0 0.0
    %2120 = vmatpush2.msra.mxu0 0.0
    %2121 = vmatprep.subr.mxu0 0.0
    %2122 = vmatpush2.msra.mxu0 0.0
    %2123 = vmatprep.subr.mxu0 0.0
    %2124 = vmatpush2.msra.mxu0 0.0
    %2125 = vmatprep.subr.mxu0 0.0
    %2126 = vmatpush2.msra.mxu0 0.0
    %2127 = vmatprep.mubr.f32.mxu0 0.0
    %2128 = vmatmul.mubr.f32.gmra.mxu0 %v48
    %v2129 = vpop.f32.mrf.mxu0
    %v2130 = vadd.f32 %v2061, %v2129
    %v2131 = vpop.f32.mrf.mxu0
    %2132 = vmatprep.mubr.f32.mxu0 0.0
    %2133 = vmatmul.mubr.f32.gmra.mxu0 %v51
    %v2134 = vpop.f32.mrf.mxu0
    %v2135 = vadd.f32 %v2061, %v2134
    %v2136 = vpop.f32.mrf.mxu0
    %2137 = vdwg.mxu0
    %s2138 = scalar_lea.vmem %s2, 96
    %v2139 = vld [vmem:[%s2138] sm:$0xff]
    %v2140 = vld [vmem:[%s2138 + $0x8] sm:$0xff]
    %v2141 = vld [vmem:[%s2138 + $0x10] sm:$0xff]
    %v2142 = vld [vmem:[%s2138 + $0x18] sm:$0xff]
    %s2143 = scalar_lea.vmem %s5, 3
    %v2144 = vld [vmem:[%s2143] sm:$0x1]
    %v2146 = vlaneseq
    %v2147 = vshrl.u32 %v2146, 7
    %v2148 = vsub.s32 0, %v2147
    %v2149 = vrot.slane %v2144, %v2148
    %2151 = vmatprep.subr.mxu0 0.0
    %2152 = vmatpush1.msra.mxu0 0.0
    %2153 = vmatprep.subr.mxu0 0.0
    %2154 = vmatpush1.msra.mxu0 0.0
    %2155 = vmatprep.subr.mxu0 0.0
    %2156 = vmatpush1.msra.mxu0 0.0
    %2157 = vmatprep.subr.mxu0 0.0
    %2158 = vmatpush1.msra.mxu0 0.0
    %2159 = vmatprep.subr.mxu0 0.0
    %2160 = vmatpush1.msra.mxu0 0.0
    %2161 = vmatprep.subr.mxu0 0.0
    %2162 = vmatpush1.msra.mxu0 0.0
    %2163 = vmatprep.subr.mxu0 0.0
    %2164 = vmatpush1.msra.mxu0 0.0
    %2165 = vmatprep.subr.mxu0 0.0
    %2166 = vmatpush1.msra.mxu0 0.0
    %2167 = vmatprep.subr.mxu0 0.0
    %2168 = vmatpush1.msra.mxu0 0.0
    %2169 = vmatprep.subr.mxu0 0.0
    %2170 = vmatpush1.msra.mxu0 0.0
    %2171 = vmatprep.subr.mxu0 0.0
    %2172 = vmatpush1.msra.mxu0 0.0
    %2173 = vmatprep.subr.mxu0 0.0
    %2174 = vmatpush1.msra.mxu0 0.0
    %2175 = vmatprep.subr.mxu0 0.0
    %2176 = vmatpush1.msra.mxu0 %v2142
    %2177 = vmatprep.subr.mxu0 0.0
    %2178 = vmatpush1.msra.mxu0 %v2141
    %2179 = vmatprep.subr.mxu0 0.0
    %2180 = vmatpush1.msra.mxu0 %v2140
    %2181 = vmatprep.subr.mxu0 0.0
    %2182 = vmatpush1.msra.mxu0 %v2139
    %2183 = vmatprep.subr.mxu0 0.0
    %2184 = vmatpush2.msra.mxu0 0.0
    %2185 = vmatprep.subr.mxu0 0.0
    %2186 = vmatpush2.msra.mxu0 0.0
    %2187 = vmatprep.subr.mxu0 0.0
    %2188 = vmatpush2.msra.mxu0 0.0
    %2189 = vmatprep.subr.mxu0 0.0
    %2190 = vmatpush2.msra.mxu0 0.0
    %2191 = vmatprep.subr.mxu0 0.0
    %2192 = vmatpush2.msra.mxu0 0.0
    %2193 = vmatprep.subr.mxu0 0.0
    %2194 = vmatpush2.msra.mxu0 0.0
    %2195 = vmatprep.subr.mxu0 0.0
    %2196 = vmatpush2.msra.mxu0 0.0
    %2197 = vmatprep.subr.mxu0 0.0
    %2198 = vmatpush2.msra.mxu0 0.0
    %2199 = vmatprep.subr.mxu0 0.0
    %2200 = vmatpush2.msra.mxu0 0.0
    %2201 = vmatprep.subr.mxu0 0.0
    %2202 = vmatpush2.msra.mxu0 0.0
    %2203 = vmatprep.subr.mxu0 0.0
    %2204 = vmatpush2.msra.mxu0 0.0
    %2205 = vmatprep.subr.mxu0 0.0
    %2206 = vmatpush2.msra.mxu0 0.0
    %2207 = vmatprep.subr.mxu0 0.0
    %2208 = vmatpush2.msra.mxu0 0.0
    %2209 = vmatprep.subr.mxu0 0.0
    %2210 = vmatpush2.msra.mxu0 0.0
    %2211 = vmatprep.subr.mxu0 0.0
    %2212 = vmatpush2.msra.mxu0 0.0
    %2213 = vmatprep.subr.mxu0 0.0
    %2214 = vmatpush2.msra.mxu0 0.0
    %2215 = vmatprep.mubr.f32.mxu0 0.0
    %2216 = vmatmul.mubr.f32.gmra.mxu0 %v48
    %v2217 = vpop.f32.mrf.mxu0
    %v2218 = vadd.f32 %v2149, %v2217
    %v2219 = vpop.f32.mrf.mxu0
    %2220 = vmatprep.mubr.f32.mxu0 0.0
    %2221 = vmatmul.mubr.f32.gmra.mxu0 %v51
    %v2222 = vpop.f32.mrf.mxu0
    %v2223 = vadd.f32 %v2149, %v2222
    %v2224 = vpop.f32.mrf.mxu0
    %2225 = vdwg.mxu0
    %s2226 = scalar_lea.vmem %s3, 96
    %v2227 = vld [vmem:[%s2226] sm:$0xff]
    %v2228 = vld [vmem:[%s2226 + $0x8] sm:$0xff]
    %v2229 = vld [vmem:[%s2226 + $0x10] sm:$0xff]
    %v2230 = vld [vmem:[%s2226 + $0x18] sm:$0xff]
    %s2231 = scalar_lea.vmem %s6, 3
    %v2232 = vld [vmem:[%s2231] sm:$0x1]
    %v2234 = vlaneseq
    %v2235 = vshrl.u32 %v2234, 7
    %v2236 = vsub.s32 0, %v2235
    %v2237 = vrot.slane %v2232, %v2236
    %2239 = vmatprep.subr.mxu0 0.0
    %2240 = vmatpush1.msra.mxu0 0.0
    %2241 = vmatprep.subr.mxu0 0.0
    %2242 = vmatpush1.msra.mxu0 0.0
    %2243 = vmatprep.subr.mxu0 0.0
    %2244 = vmatpush1.msra.mxu0 0.0
    %2245 = vmatprep.subr.mxu0 0.0
    %2246 = vmatpush1.msra.mxu0 0.0
    %2247 = vmatprep.subr.mxu0 0.0
    %2248 = vmatpush1.msra.mxu0 0.0
    %2249 = vmatprep.subr.mxu0 0.0
    %2250 = vmatpush1.msra.mxu0 0.0
    %2251 = vmatprep.subr.mxu0 0.0
    %2252 = vmatpush1.msra.mxu0 0.0
    %2253 = vmatprep.subr.mxu0 0.0
    %2254 = vmatpush1.msra.mxu0 0.0
    %2255 = vmatprep.subr.mxu0 0.0
    %2256 = vmatpush1.msra.mxu0 0.0
    %2257 = vmatprep.subr.mxu0 0.0
    %2258 = vmatpush1.msra.mxu0 0.0
    %2259 = vmatprep.subr.mxu0 0.0
    %2260 = vmatpush1.msra.mxu0 0.0
    %2261 = vmatprep.subr.mxu0 0.0
    %2262 = vmatpush1.msra.mxu0 0.0
    %2263 = vmatprep.subr.mxu0 0.0
    %2264 = vmatpush1.msra.mxu0 %v2230
    %2265 = vmatprep.subr.mxu0 0.0
    %2266 = vmatpush1.msra.mxu0 %v2229
    %2267 = vmatprep.subr.mxu0 0.0
    %2268 = vmatpush1.msra.mxu0 %v2228
    %2269 = vmatprep.subr.mxu0 0.0
    %2270 = vmatpush1.msra.mxu0 %v2227
    %2271 = vmatprep.subr.mxu0 0.0
    %2272 = vmatpush2.msra.mxu0 0.0
    %2273 = vmatprep.subr.mxu0 0.0
    %2274 = vmatpush2.msra.mxu0 0.0
    %2275 = vmatprep.subr.mxu0 0.0
    %2276 = vmatpush2.msra.mxu0 0.0
    %2277 = vmatprep.subr.mxu0 0.0
    %2278 = vmatpush2.msra.mxu0 0.0
    %2279 = vmatprep.subr.mxu0 0.0
    %2280 = vmatpush2.msra.mxu0 0.0
    %2281 = vmatprep.subr.mxu0 0.0
    %2282 = vmatpush2.msra.mxu0 0.0
    %2283 = vmatprep.subr.mxu0 0.0
    %2284 = vmatpush2.msra.mxu0 0.0
    %2285 = vmatprep.subr.mxu0 0.0
    %2286 = vmatpush2.msra.mxu0 0.0
    %2287 = vmatprep.subr.mxu0 0.0
    %2288 = vmatpush2.msra.mxu0 0.0
    %2289 = vmatprep.subr.mxu0 0.0
    %2290 = vmatpush2.msra.mxu0 0.0
    %2291 = vmatprep.subr.mxu0 0.0
    %2292 = vmatpush2.msra.mxu0 0.0
    %2293 = vmatprep.subr.mxu0 0.0
    %2294 = vmatpush2.msra.mxu0 0.0
    %2295 = vmatprep.subr.mxu0 0.0
    %2296 = vmatpush2.msra.mxu0 0.0
    %2297 = vmatprep.subr.mxu0 0.0
    %2298 = vmatpush2.msra.mxu0 0.0
    %2299 = vmatprep.subr.mxu0 0.0
    %2300 = vmatpush2.msra.mxu0 0.0
    %2301 = vmatprep.subr.mxu0 0.0
    %2302 = vmatpush2.msra.mxu0 0.0
    %2303 = vmatprep.mubr.f32.mxu0 0.0
    %2304 = vmatmul.mubr.f32.gmra.mxu0 %v48
    %v2305 = vpop.f32.mrf.mxu0
    %v2306 = vadd.f32 %v2237, %v2305
    %v2307 = vpop.f32.mrf.mxu0
    %2308 = vmatprep.mubr.f32.mxu0 0.0
    %2309 = vmatmul.mubr.f32.gmra.mxu0 %v51
    %v2310 = vpop.f32.mrf.mxu0
    %v2311 = vadd.f32 %v2237, %v2310
    %v2312 = vpop.f32.mrf.mxu0
    %2313 = vdwg.mxu0
    %v2315 = vsel %vm300, %v2130, 0
    %v2318 = vsel %vm300, %v2218, 0
    %2320 = vmatprep.subr.mxu0 0.0
    %2321 = vmatpush1.xpose.msra.mxu0 0.0
    %2322 = vmatprep.subr.mxu0 0.0
    %2323 = vmatpush1.xpose.msra.mxu0 0.0
    %2324 = vmatprep.subr.mxu0 0.0
    %2325 = vmatpush1.xpose.msra.mxu0 0.0
    %2326 = vmatprep.subr.mxu0 0.0
    %2327 = vmatpush1.xpose.msra.mxu0 0.0
    %2328 = vmatprep.subr.mxu0 0.0
    %2329 = vmatpush1.xpose.msra.mxu0 0.0
    %2330 = vmatprep.subr.mxu0 0.0
    %2331 = vmatpush1.xpose.msra.mxu0 0.0
    %2332 = vmatprep.subr.mxu0 0.0
    %2333 = vmatpush1.xpose.msra.mxu0 0.0
    %2334 = vmatprep.subr.mxu0 0.0
    %2335 = vmatpush1.xpose.msra.mxu0 0.0
    %2336 = vmatprep.subr.mxu0 0.0
    %2337 = vmatpush1.xpose.msra.mxu0 0.0
    %2338 = vmatprep.subr.mxu0 0.0
    %2339 = vmatpush1.xpose.msra.mxu0 0.0
    %2340 = vmatprep.subr.mxu0 0.0
    %2341 = vmatpush1.xpose.msra.mxu0 0.0
    %2342 = vmatprep.subr.mxu0 0.0
    %2343 = vmatpush1.xpose.msra.mxu0 0.0
    %2344 = vmatprep.subr.mxu0 0.0
    %2345 = vmatpush1.xpose.msra.mxu0 0.0
    %2346 = vmatprep.subr.mxu0 0.0
    %2347 = vmatpush1.xpose.msra.mxu0 0.0
    %2348 = vmatprep.subr.mxu0 0.0
    %2349 = vmatpush1.xpose.msra.mxu0 0.0
    %2350 = vmatprep.subr.mxu0 0.0
    %2351 = vmatpush1.xpose.msra.mxu0 %v2318
    %2352 = vmatprep.subr.mxu0 0.0
    %2353 = vmatpush2.xpose.msra.mxu0 0.0
    %2354 = vmatprep.subr.mxu0 0.0
    %2355 = vmatpush2.xpose.msra.mxu0 0.0
    %2356 = vmatprep.subr.mxu0 0.0
    %2357 = vmatpush2.xpose.msra.mxu0 0.0
    %2358 = vmatprep.subr.mxu0 0.0
    %2359 = vmatpush2.xpose.msra.mxu0 0.0
    %2360 = vmatprep.subr.mxu0 0.0
    %2361 = vmatpush2.xpose.msra.mxu0 0.0
    %2362 = vmatprep.subr.mxu0 0.0
    %2363 = vmatpush2.xpose.msra.mxu0 0.0
    %2364 = vmatprep.subr.mxu0 0.0
    %2365 = vmatpush2.xpose.msra.mxu0 0.0
    %2366 = vmatprep.subr.mxu0 0.0
    %2367 = vmatpush2.xpose.msra.mxu0 0.0
    %2368 = vmatprep.subr.mxu0 0.0
    %2369 = vmatpush2.xpose.msra.mxu0 0.0
    %2370 = vmatprep.subr.mxu0 0.0
    %2371 = vmatpush2.xpose.msra.mxu0 0.0
    %2372 = vmatprep.subr.mxu0 0.0
    %2373 = vmatpush2.xpose.msra.mxu0 0.0
    %2374 = vmatprep.subr.mxu0 0.0
    %2375 = vmatpush2.xpose.msra.mxu0 0.0
    %2376 = vmatprep.subr.mxu0 0.0
    %2377 = vmatpush2.xpose.msra.mxu0 0.0
    %2378 = vmatprep.subr.mxu0 0.0
    %2379 = vmatpush2.xpose.msra.mxu0 0.0
    %2380 = vmatprep.subr.mxu0 0.0
    %2381 = vmatpush2.xpose.msra.mxu0 0.0
    %2382 = vmatprep.subr.mxu0 0.0
    %2383 = vmatpush2.xpose.msra.mxu0 0.0
    %2384 = vmatprep.mubr.f32.mxu0 0.0
    %2385 = vmatmul.mubr.f32.gmra.mxu0 %v2315
    %v2386 = vpop.f32.mrf.mxu0
    %v2387 = vadd.f32 0.0, %v2386
    %v2388 = vpop.f32.mrf.mxu0
    %2389 = vdwg.mxu0
    %v2391 = vsel %vm300, %v2135, 0
    %v2394 = vsel %vm300, %v2223, 0
    %2396 = vmatprep.subr.mxu0 0.0
    %2397 = vmatpush1.xpose.msra.mxu0 0.0
    %2398 = vmatprep.subr.mxu0 0.0
    %2399 = vmatpush1.xpose.msra.mxu0 0.0
    %2400 = vmatprep.subr.mxu0 0.0
    %2401 = vmatpush1.xpose.msra.mxu0 0.0
    %2402 = vmatprep.subr.mxu0 0.0
    %2403 = vmatpush1.xpose.msra.mxu0 0.0
    %2404 = vmatprep.subr.mxu0 0.0
    %2405 = vmatpush1.xpose.msra.mxu0 0.0
    %2406 = vmatprep.subr.mxu0 0.0
    %2407 = vmatpush1.xpose.msra.mxu0 0.0
    %2408 = vmatprep.subr.mxu0 0.0
    %2409 = vmatpush1.xpose.msra.mxu0 0.0
    %2410 = vmatprep.subr.mxu0 0.0
    %2411 = vmatpush1.xpose.msra.mxu0 0.0
    %2412 = vmatprep.subr.mxu0 0.0
    %2413 = vmatpush1.xpose.msra.mxu0 0.0
    %2414 = vmatprep.subr.mxu0 0.0
    %2415 = vmatpush1.xpose.msra.mxu0 0.0
    %2416 = vmatprep.subr.mxu0 0.0
    %2417 = vmatpush1.xpose.msra.mxu0 0.0
    %2418 = vmatprep.subr.mxu0 0.0
    %2419 = vmatpush1.xpose.msra.mxu0 0.0
    %2420 = vmatprep.subr.mxu0 0.0
    %2421 = vmatpush1.xpose.msra.mxu0 0.0
    %2422 = vmatprep.subr.mxu0 0.0
    %2423 = vmatpush1.xpose.msra.mxu0 0.0
    %2424 = vmatprep.subr.mxu0 0.0
    %2425 = vmatpush1.xpose.msra.mxu0 0.0
    %2426 = vmatprep.subr.mxu0 0.0
    %2427 = vmatpush1.xpose.msra.mxu0 %v2394
    %2428 = vmatprep.subr.mxu0 0.0
    %2429 = vmatpush2.xpose.msra.mxu0 0.0
    %2430 = vmatprep.subr.mxu0 0.0
    %2431 = vmatpush2.xpose.msra.mxu0 0.0
    %2432 = vmatprep.subr.mxu0 0.0
    %2433 = vmatpush2.xpose.msra.mxu0 0.0
    %2434 = vmatprep.subr.mxu0 0.0
    %2435 = vmatpush2.xpose.msra.mxu0 0.0
    %2436 = vmatprep.subr.mxu0 0.0
    %2437 = vmatpush2.xpose.msra.mxu0 0.0
    %2438 = vmatprep.subr.mxu0 0.0
    %2439 = vmatpush2.xpose.msra.mxu0 0.0
    %2440 = vmatprep.subr.mxu0 0.0
    %2441 = vmatpush2.xpose.msra.mxu0 0.0
    %2442 = vmatprep.subr.mxu0 0.0
    %2443 = vmatpush2.xpose.msra.mxu0 0.0
    %2444 = vmatprep.subr.mxu0 0.0
    %2445 = vmatpush2.xpose.msra.mxu0 0.0
    %2446 = vmatprep.subr.mxu0 0.0
    %2447 = vmatpush2.xpose.msra.mxu0 0.0
    %2448 = vmatprep.subr.mxu0 0.0
    %2449 = vmatpush2.xpose.msra.mxu0 0.0
    %2450 = vmatprep.subr.mxu0 0.0
    %2451 = vmatpush2.xpose.msra.mxu0 0.0
    %2452 = vmatprep.subr.mxu0 0.0
    %2453 = vmatpush2.xpose.msra.mxu0 0.0
    %2454 = vmatprep.subr.mxu0 0.0
    %2455 = vmatpush2.xpose.msra.mxu0 0.0
    %2456 = vmatprep.subr.mxu0 0.0
    %2457 = vmatpush2.xpose.msra.mxu0 0.0
    %2458 = vmatprep.subr.mxu0 0.0
    %2459 = vmatpush2.xpose.msra.mxu0 0.0
    %2460 = vmatprep.mubr.f32.mxu0 0.0
    %2461 = vmatmul.mubr.f32.gmra.mxu0 %v2391
    %v2462 = vpop.f32.mrf.mxu0
    %v2463 = vadd.f32 0.0, %v2462
    %v2464 = vpop.f32.mrf.mxu0
    %2465 = vdwg.mxu0
    %v2466 = vsel %vm453, %v2387, -inf
    %2467 = vmax.xlane.f32.xlu0 %v2466
    %v2468 = vpop.xlane.xlu0 %2467
    %v2469 = vsel %vm453, %v2463, -inf
    %2470 = vmax.xlane.f32.xlu0 %v2469
    %v2471 = vpop.xlane.xlu0 %2470
    %v2472 = vsub.f32 %v2387, %v2468
    %v2473 = vsub.f32 %v2463, %v2471
    %v2474 = vmul.f32 %v2472, 1.442695
    %v2475 = vpow.pop %v2474
    %v2476 = vmul.f32 %v2473, 1.442695
    %v2477 = vpow.pop %v2476
    %v2478 = vsel %vm453, %v2475, 0.0
    %2479 = vadd.xlane.f32.xlu0 %v2478
    %v2480 = vpop.xlane.xlu0 %2479
    %v2481 = vsel %vm453, %v2477, 0.0
    %2482 = vadd.xlane.f32.xlu0 %v2481
    %v2483 = vpop.xlane.xlu0 %2482
    %v2485 = vsel %vm453, %v2475, 0
    %2487 = vmatprep.subr.mxu0 0.0
    %2488 = vmatpush1.msra.mxu0 0.0
    %2489 = vmatprep.subr.mxu0 0.0
    %2490 = vmatpush1.msra.mxu0 0.0
    %2491 = vmatprep.subr.mxu0 0.0
    %2492 = vmatpush1.msra.mxu0 0.0
    %2493 = vmatprep.subr.mxu0 0.0
    %2494 = vmatpush1.msra.mxu0 0.0
    %2495 = vmatprep.subr.mxu0 0.0
    %2496 = vmatpush1.msra.mxu0 0.0
    %2497 = vmatprep.subr.mxu0 0.0
    %2498 = vmatpush1.msra.mxu0 0.0
    %2499 = vmatprep.subr.mxu0 0.0
    %2500 = vmatpush1.msra.mxu0 0.0
    %2501 = vmatprep.subr.mxu0 0.0
    %2502 = vmatpush1.msra.mxu0 0.0
    %2503 = vmatprep.subr.mxu0 0.0
    %2504 = vmatpush1.msra.mxu0 0.0
    %2505 = vmatprep.subr.mxu0 0.0
    %2506 = vmatpush1.msra.mxu0 0.0
    %2507 = vmatprep.subr.mxu0 0.0
    %2508 = vmatpush1.msra.mxu0 0.0
    %2509 = vmatprep.subr.mxu0 0.0
    %2510 = vmatpush1.msra.mxu0 0.0
    %2511 = vmatprep.subr.mxu0 0.0
    %2512 = vmatpush1.msra.mxu0 0.0
    %2513 = vmatprep.subr.mxu0 0.0
    %2514 = vmatpush1.msra.mxu0 0.0
    %2515 = vmatprep.subr.mxu0 0.0
    %2516 = vmatpush1.msra.mxu0 0.0
    %2517 = vmatprep.subr.mxu0 0.0
    %2518 = vmatpush1.msra.mxu0 %v2306
    %2519 = vmatprep.subr.mxu0 0.0
    %2520 = vmatpush2.msra.mxu0 0.0
    %2521 = vmatprep.subr.mxu0 0.0
    %2522 = vmatpush2.msra.mxu0 0.0
    %2523 = vmatprep.subr.mxu0 0.0
    %2524 = vmatpush2.msra.mxu0 0.0
    %2525 = vmatprep.subr.mxu0 0.0
    %2526 = vmatpush2.msra.mxu0 0.0
    %2527 = vmatprep.subr.mxu0 0.0
    %2528 = vmatpush2.msra.mxu0 0.0
    %2529 = vmatprep.subr.mxu0 0.0
    %2530 = vmatpush2.msra.mxu0 0.0
    %2531 = vmatprep.subr.mxu0 0.0
    %2532 = vmatpush2.msra.mxu0 0.0
    %2533 = vmatprep.subr.mxu0 0.0
    %2534 = vmatpush2.msra.mxu0 0.0
    %2535 = vmatprep.subr.mxu0 0.0
    %2536 = vmatpush2.msra.mxu0 0.0
    %2537 = vmatprep.subr.mxu0 0.0
    %2538 = vmatpush2.msra.mxu0 0.0
    %2539 = vmatprep.subr.mxu0 0.0
    %2540 = vmatpush2.msra.mxu0 0.0
    %2541 = vmatprep.subr.mxu0 0.0
    %2542 = vmatpush2.msra.mxu0 0.0
    %2543 = vmatprep.subr.mxu0 0.0
    %2544 = vmatpush2.msra.mxu0 0.0
    %2545 = vmatprep.subr.mxu0 0.0
    %2546 = vmatpush2.msra.mxu0 0.0
    %2547 = vmatprep.subr.mxu0 0.0
    %2548 = vmatpush2.msra.mxu0 0.0
    %2549 = vmatprep.subr.mxu0 0.0
    %2550 = vmatpush2.msra.mxu0 0.0
    %2551 = vmatprep.mubr.f32.mxu0 0.0
    %2552 = vmatmul.mubr.f32.gmra.mxu0 %v2485
    %v2553 = vpop.f32.mrf.mxu0
    %v2554 = vadd.f32 0.0, %v2553
    %v2555 = vpop.f32.mrf.mxu0
    %2556 = vdwg.mxu0
    %v2558 = vsel %vm453, %v2477, 0
    %2560 = vmatprep.subr.mxu0 0.0
    %2561 = vmatpush1.msra.mxu0 0.0
    %2562 = vmatprep.subr.mxu0 0.0
    %2563 = vmatpush1.msra.mxu0 0.0
    %2564 = vmatprep.subr.mxu0 0.0
    %2565 = vmatpush1.msra.mxu0 0.0
    %2566 = vmatprep.subr.mxu0 0.0
    %2567 = vmatpush1.msra.mxu0 0.0
    %2568 = vmatprep.subr.mxu0 0.0
    %2569 = vmatpush1.msra.mxu0 0.0
    %2570 = vmatprep.subr.mxu0 0.0
    %2571 = vmatpush1.msra.mxu0 0.0
    %2572 = vmatprep.subr.mxu0 0.0
    %2573 = vmatpush1.msra.mxu0 0.0
    %2574 = vmatprep.subr.mxu0 0.0
    %2575 = vmatpush1.msra.mxu0 0.0
    %2576 = vmatprep.subr.mxu0 0.0
    %2577 = vmatpush1.msra.mxu0 0.0
    %2578 = vmatprep.subr.mxu0 0.0
    %2579 = vmatpush1.msra.mxu0 0.0
    %2580 = vmatprep.subr.mxu0 0.0
    %2581 = vmatpush1.msra.mxu0 0.0
    %2582 = vmatprep.subr.mxu0 0.0
    %2583 = vmatpush1.msra.mxu0 0.0
    %2584 = vmatprep.subr.mxu0 0.0
    %2585 = vmatpush1.msra.mxu0 0.0
    %2586 = vmatprep.subr.mxu0 0.0
    %2587 = vmatpush1.msra.mxu0 0.0
    %2588 = vmatprep.subr.mxu0 0.0
    %2589 = vmatpush1.msra.mxu0 0.0
    %2590 = vmatprep.subr.mxu0 0.0
    %2591 = vmatpush1.msra.mxu0 %v2311
    %2592 = vmatprep.subr.mxu0 0.0
    %2593 = vmatpush2.msra.mxu0 0.0
    %2594 = vmatprep.subr.mxu0 0.0
    %2595 = vmatpush2.msra.mxu0 0.0
    %2596 = vmatprep.subr.mxu0 0.0
    %2597 = vmatpush2.msra.mxu0 0.0
    %2598 = vmatprep.subr.mxu0 0.0
    %2599 = vmatpush2.msra.mxu0 0.0
    %2600 = vmatprep.subr.mxu0 0.0
    %2601 = vmatpush2.msra.mxu0 0.0
    %2602 = vmatprep.subr.mxu0 0.0
    %2603 = vmatpush2.msra.mxu0 0.0
    %2604 = vmatprep.subr.mxu0 0.0
    %2605 = vmatpush2.msra.mxu0 0.0
    %2606 = vmatprep.subr.mxu0 0.0
    %2607 = vmatpush2.msra.mxu0 0.0
    %2608 = vmatprep.subr.mxu0 0.0
    %2609 = vmatpush2.msra.mxu0 0.0
    %2610 = vmatprep.subr.mxu0 0.0
    %2611 = vmatpush2.msra.mxu0 0.0
    %2612 = vmatprep.subr.mxu0 0.0
    %2613 = vmatpush2.msra.mxu0 0.0
    %2614 = vmatprep.subr.mxu0 0.0
    %2615 = vmatpush2.msra.mxu0 0.0
    %2616 = vmatprep.subr.mxu0 0.0
    %2617 = vmatpush2.msra.mxu0 0.0
    %2618 = vmatprep.subr.mxu0 0.0
    %2619 = vmatpush2.msra.mxu0 0.0
    %2620 = vmatprep.subr.mxu0 0.0
    %2621 = vmatpush2.msra.mxu0 0.0
    %2622 = vmatprep.subr.mxu0 0.0
    %2623 = vmatpush2.msra.mxu0 0.0
    %2624 = vmatprep.mubr.f32.mxu0 0.0
    %2625 = vmatmul.mubr.f32.gmra.mxu0 %v2558
    %v2626 = vpop.f32.mrf.mxu0
    %v2627 = vadd.f32 0.0, %v2626
    %v2628 = vpop.f32.mrf.mxu0
    %2629 = vdwg.mxu0
    %v2630 = vrcp.pop %v2480
    %v2631 = vmul.f32 %v2554, %v2630
    %v2632 = vrcp.pop %v2483
    %v2633 = vmul.f32 %v2627, %v2632
    %s2634 = scalar_lea.vmem %s7, 12
    %v2635 = vld [vmem:[%s2634] sm:$0xf]
    %v2637 = vsel %vm300, %v2631, 0
    %v2640 = vsel %vm300, %v2633, 0
    %v2643 = vsel %vm1215, %v2635, 0
    %2645 = vmatprep.subr.mxu0 0.0
    %2646 = vmatpush1.msra.mxu0 0.0
    %2647 = vmatprep.subr.mxu0 0.0
    %2648 = vmatpush1.msra.mxu0 0.0
    %2649 = vmatprep.subr.mxu0 0.0
    %2650 = vmatpush1.msra.mxu0 0.0
    %2651 = vmatprep.subr.mxu0 0.0
    %2652 = vmatpush1.msra.mxu0 0.0
    %2653 = vmatprep.subr.mxu0 0.0
    %2654 = vmatpush1.msra.mxu0 0.0
    %2655 = vmatprep.subr.mxu0 0.0
    %2656 = vmatpush1.msra.mxu0 0.0
    %2657 = vmatprep.subr.mxu0 0.0
    %2658 = vmatpush1.msra.mxu0 0.0
    %2659 = vmatprep.subr.mxu0 0.0
    %2660 = vmatpush1.msra.mxu0 0.0
    %2661 = vmatprep.subr.mxu0 0.0
    %2662 = vmatpush1.msra.mxu0 0.0
    %2663 = vmatprep.subr.mxu0 0.0
    %2664 = vmatpush1.msra.mxu0 0.0
    %2665 = vmatprep.subr.mxu0 0.0
    %2666 = vmatpush1.msra.mxu0 0.0
    %2667 = vmatprep.subr.mxu0 0.0
    %2668 = vmatpush1.msra.mxu0 0.0
    %2669 = vmatprep.subr.mxu0 0.0
    %2670 = vmatpush1.msra.mxu0 0.0
    %2671 = vmatprep.subr.mxu0 0.0
    %2672 = vmatpush1.msra.mxu0 0.0
    %2673 = vmatprep.subr.mxu0 0.0
    %2674 = vmatpush1.msra.mxu0 0.0
    %2675 = vmatprep.subr.mxu0 0.0
    %2676 = vmatpush1.msra.mxu0 %v2643
    %2677 = vmatprep.subr.mxu0 0.0
    %2678 = vmatpush2.msra.mxu0 0.0
    %2679 = vmatprep.subr.mxu0 0.0
    %2680 = vmatpush2.msra.mxu0 0.0
    %2681 = vmatprep.subr.mxu0 0.0
    %2682 = vmatpush2.msra.mxu0 0.0
    %2683 = vmatprep.subr.mxu0 0.0
    %2684 = vmatpush2.msra.mxu0 0.0
    %2685 = vmatprep.subr.mxu0 0.0
    %2686 = vmatpush2.msra.mxu0 0.0
    %2687 = vmatprep.subr.mxu0 0.0
    %2688 = vmatpush2.msra.mxu0 0.0
    %2689 = vmatprep.subr.mxu0 0.0
    %2690 = vmatpush2.msra.mxu0 0.0
    %2691 = vmatprep.subr.mxu0 0.0
    %2692 = vmatpush2.msra.mxu0 0.0
    %2693 = vmatprep.subr.mxu0 0.0
    %2694 = vmatpush2.msra.mxu0 0.0
    %2695 = vmatprep.subr.mxu0 0.0
    %2696 = vmatpush2.msra.mxu0 0.0
    %2697 = vmatprep.subr.mxu0 0.0
    %2698 = vmatpush2.msra.mxu0 0.0
    %2699 = vmatprep.subr.mxu0 0.0
    %2700 = vmatpush2.msra.mxu0 0.0
    %2701 = vmatprep.subr.mxu0 0.0
    %2702 = vmatpush2.msra.mxu0 0.0
    %2703 = vmatprep.subr.mxu0 0.0
    %2704 = vmatpush2.msra.mxu0 0.0
    %2705 = vmatprep.subr.mxu0 0.0
    %2706 = vmatpush2.msra.mxu0 0.0
    %2707 = vmatprep.subr.mxu0 0.0
    %2708 = vmatpush2.msra.mxu0 0.0
    %2709 = vmatprep.mubr.f32.mxu0 0.0
    %2710 = vmatmul.mubr.f32.gmra.mxu0 %v2637
    %v2711 = vpop.f32.mrf.mxu0
    %v2712 = vadd.f32 0.0, %v2711
    %v2713 = vpop.f32.mrf.mxu0
    %2714 = vmatprep.mubr.f32.mxu0 0.0
    %2715 = vmatmul.mubr.f32.gmra.mxu0 %v2640
    %v2716 = vpop.f32.mrf.mxu0
    %v2717 = vadd.f32 0.0, %v2716
    %v2718 = vpop.f32.mrf.mxu0
    %2719 = vdwg.mxu0
    %v2720 = vadd.f32 %v2048, %v2712
    %v2721 = vadd.f32 %v2049, %v2717
    %s2722 = scalar_lea.vmem %s1, 128
    %v2723 = vld [vmem:[%s2722] sm:$0xff]
    %v2724 = vld [vmem:[%s2722 + $0x8] sm:$0xff]
    %v2725 = vld [vmem:[%s2722 + $0x10] sm:$0xff]
    %v2726 = vld [vmem:[%s2722 + $0x18] sm:$0xff]
    %s2727 = scalar_lea.vmem %s4, 4
    %v2728 = vld [vmem:[%s2727] sm:$0x1]
    %v2730 = vlaneseq
    %v2731 = vshrl.u32 %v2730, 7
    %v2732 = vsub.s32 0, %v2731
    %v2733 = vrot.slane %v2728, %v2732
    %2735 = vmatprep.subr.mxu0 0.0
    %2736 = vmatpush1.msra.mxu0 0.0
    %2737 = vmatprep.subr.mxu0 0.0
    %2738 = vmatpush1.msra.mxu0 0.0
    %2739 = vmatprep.subr.mxu0 0.0
    %2740 = vmatpush1.msra.mxu0 0.0
    %2741 = vmatprep.subr.mxu0 0.0
    %2742 = vmatpush1.msra.mxu0 0.0
    %2743 = vmatprep.subr.mxu0 0.0
    %2744 = vmatpush1.msra.mxu0 0.0
    %2745 = vmatprep.subr.mxu0 0.0
    %2746 = vmatpush1.msra.mxu0 0.0
    %2747 = vmatprep.subr.mxu0 0.0
    %2748 = vmatpush1.msra.mxu0 0.0
    %2749 = vmatprep.subr.mxu0 0.0
    %2750 = vmatpush1.msra.mxu0 0.0
    %2751 = vmatprep.subr.mxu0 0.0
    %2752 = vmatpush1.msra.mxu0 0.0
    %2753 = vmatprep.subr.mxu0 0.0
    %2754 = vmatpush1.msra.mxu0 0.0
    %2755 = vmatprep.subr.mxu0 0.0
    %2756 = vmatpush1.msra.mxu0 0.0
    %2757 = vmatprep.subr.mxu0 0.0
    %2758 = vmatpush1.msra.mxu0 0.0
    %2759 = vmatprep.subr.mxu0 0.0
    %2760 = vmatpush1.msra.mxu0 %v2726
    %2761 = vmatprep.subr.mxu0 0.0
    %2762 = vmatpush1.msra.mxu0 %v2725
    %2763 = vmatprep.subr.mxu0 0.0
    %2764 = vmatpush1.msra.mxu0 %v2724
    %2765 = vmatprep.subr.mxu0 0.0
    %2766 = vmatpush1.msra.mxu0 %v2723
    %2767 = vmatprep.subr.mxu0 0.0
    %2768 = vmatpush2.msra.mxu0 0.0
    %2769 = vmatprep.subr.mxu0 0.0
    %2770 = vmatpush2.msra.mxu0 0.0
    %2771 = vmatprep.subr.mxu0 0.0
    %2772 = vmatpush2.msra.mxu0 0.0
    %2773 = vmatprep.subr.mxu0 0.0
    %2774 = vmatpush2.msra.mxu0 0.0
    %2775 = vmatprep.subr.mxu0 0.0
    %2776 = vmatpush2.msra.mxu0 0.0
    %2777 = vmatprep.subr.mxu0 0.0
    %2778 = vmatpush2.msra.mxu0 0.0
    %2779 = vmatprep.subr.mxu0 0.0
    %2780 = vmatpush2.msra.mxu0 0.0
    %2781 = vmatprep.subr.mxu0 0.0
    %2782 = vmatpush2.msra.mxu0 0.0
    %2783 = vmatprep.subr.mxu0 0.0
    %2784 = vmatpush2.msra.mxu0 0.0
    %2785 = vmatprep.subr.mxu0 0.0
    %2786 = vmatpush2.msra.mxu0 0.0
    %2787 = vmatprep.subr.mxu0 0.0
    %2788 = vmatpush2.msra.mxu0 0.0
    %2789 = vmatprep.subr.mxu0 0.0
    %2790 = vmatpush2.msra.mxu0 0.0
    %2791 = vmatprep.subr.mxu0 0.0
    %2792 = vmatpush2.msra.mxu0 0.0
    %2793 = vmatprep.subr.mxu0 0.0
    %2794 = vmatpush2.msra.mxu0 0.0
    %2795 = vmatprep.subr.mxu0 0.0
    %2796 = vmatpush2.msra.mxu0 0.0
    %2797 = vmatprep.subr.mxu0 0.0
    %2798 = vmatpush2.msra.mxu0 0.0
    %2799 = vmatprep.mubr.f32.mxu0 0.0
    %2800 = vmatmul.mubr.f32.gmra.mxu0 %v48
    %v2801 = vpop.f32.mrf.mxu0
    %v2802 = vadd.f32 %v2733, %v2801
    %v2803 = vpop.f32.mrf.mxu0
    %2804 = vmatprep.mubr.f32.mxu0 0.0
    %2805 = vmatmul.mubr.f32.gmra.mxu0 %v51
    %v2806 = vpop.f32.mrf.mxu0
    %v2807 = vadd.f32 %v2733, %v2806
    %v2808 = vpop.f32.mrf.mxu0
    %2809 = vdwg.mxu0
    %s2810 = scalar_lea.vmem %s2, 128
    %v2811 = vld [vmem:[%s2810] sm:$0xff]
    %v2812 = vld [vmem:[%s2810 + $0x8] sm:$0xff]
    %v2813 = vld [vmem:[%s2810 + $0x10] sm:$0xff]
    %v2814 = vld [vmem:[%s2810 + $0x18] sm:$0xff]
    %s2815 = scalar_lea.vmem %s5, 4
    %v2816 = vld [vmem:[%s2815] sm:$0x1]
    %v2818 = vlaneseq
    %v2819 = vshrl.u32 %v2818, 7
    %v2820 = vsub.s32 0, %v2819
    %v2821 = vrot.slane %v2816, %v2820
    %2823 = vmatprep.subr.mxu0 0.0
    %2824 = vmatpush1.msra.mxu0 0.0
    %2825 = vmatprep.subr.mxu0 0.0
    %2826 = vmatpush1.msra.mxu0 0.0
    %2827 = vmatprep.subr.mxu0 0.0
    %2828 = vmatpush1.msra.mxu0 0.0
    %2829 = vmatprep.subr.mxu0 0.0
    %2830 = vmatpush1.msra.mxu0 0.0
    %2831 = vmatprep.subr.mxu0 0.0
    %2832 = vmatpush1.msra.mxu0 0.0
    %2833 = vmatprep.subr.mxu0 0.0
    %2834 = vmatpush1.msra.mxu0 0.0
    %2835 = vmatprep.subr.mxu0 0.0
    %2836 = vmatpush1.msra.mxu0 0.0
    %2837 = vmatprep.subr.mxu0 0.0
    %2838 = vmatpush1.msra.mxu0 0.0
    %2839 = vmatprep.subr.mxu0 0.0
    %2840 = vmatpush1.msra.mxu0 0.0
    %2841 = vmatprep.subr.mxu0 0.0
    %2842 = vmatpush1.msra.mxu0 0.0
    %2843 = vmatprep.subr.mxu0 0.0
    %2844 = vmatpush1.msra.mxu0 0.0
    %2845 = vmatprep.subr.mxu0 0.0
    %2846 = vmatpush1.msra.mxu0 0.0
    %2847 = vmatprep.subr.mxu0 0.0
    %2848 = vmatpush1.msra.mxu0 %v2814
    %2849 = vmatprep.subr.mxu0 0.0
    %2850 = vmatpush1.msra.mxu0 %v2813
    %2851 = vmatprep.subr.mxu0 0.0
    %2852 = vmatpush1.msra.mxu0 %v2812
    %2853 = vmatprep.subr.mxu0 0.0
    %2854 = vmatpush1.msra.mxu0 %v2811
    %2855 = vmatprep.subr.mxu0 0.0
    %2856 = vmatpush2.msra.mxu0 0.0
    %2857 = vmatprep.subr.mxu0 0.0
    %2858 = vmatpush2.msra.mxu0 0.0
    %2859 = vmatprep.subr.mxu0 0.0
    %2860 = vmatpush2.msra.mxu0 0.0
    %2861 = vmatprep.subr.mxu0 0.0
    %2862 = vmatpush2.msra.mxu0 0.0
    %2863 = vmatprep.subr.mxu0 0.0
    %2864 = vmatpush2.msra.mxu0 0.0
    %2865 = vmatprep.subr.mxu0 0.0
    %2866 = vmatpush2.msra.mxu0 0.0
    %2867 = vmatprep.subr.mxu0 0.0
    %2868 = vmatpush2.msra.mxu0 0.0
    %2869 = vmatprep.subr.mxu0 0.0
    %2870 = vmatpush2.msra.mxu0 0.0
    %2871 = vmatprep.subr.mxu0 0.0
    %2872 = vmatpush2.msra.mxu0 0.0
    %2873 = vmatprep.subr.mxu0 0.0
    %2874 = vmatpush2.msra.mxu0 0.0
    %2875 = vmatprep.subr.mxu0 0.0
    %2876 = vmatpush2.msra.mxu0 0.0
    %2877 = vmatprep.subr.mxu0 0.0
    %2878 = vmatpush2.msra.mxu0 0.0
    %2879 = vmatprep.subr.mxu0 0.0
    %2880 = vmatpush2.msra.mxu0 0.0
    %2881 = vmatprep.subr.mxu0 0.0
    %2882 = vmatpush2.msra.mxu0 0.0
    %2883 = vmatprep.subr.mxu0 0.0
    %2884 = vmatpush2.msra.mxu0 0.0
    %2885 = vmatprep.subr.mxu0 0.0
    %2886 = vmatpush2.msra.mxu0 0.0
    %2887 = vmatprep.mubr.f32.mxu0 0.0
    %2888 = vmatmul.mubr.f32.gmra.mxu0 %v48
    %v2889 = vpop.f32.mrf.mxu0
    %v2890 = vadd.f32 %v2821, %v2889
    %v2891 = vpop.f32.mrf.mxu0
    %2892 = vmatprep.mubr.f32.mxu0 0.0
    %2893 = vmatmul.mubr.f32.gmra.mxu0 %v51
    %v2894 = vpop.f32.mrf.mxu0
    %v2895 = vadd.f32 %v2821, %v2894
    %v2896 = vpop.f32.mrf.mxu0
    %2897 = vdwg.mxu0
    %s2898 = scalar_lea.vmem %s3, 128
    %v2899 = vld [vmem:[%s2898] sm:$0xff]
    %v2900 = vld [vmem:[%s2898 + $0x8] sm:$0xff]
    %v2901 = vld [vmem:[%s2898 + $0x10] sm:$0xff]
    %v2902 = vld [vmem:[%s2898 + $0x18] sm:$0xff]
    %s2903 = scalar_lea.vmem %s6, 4
    %v2904 = vld [vmem:[%s2903] sm:$0x1]
    %v2906 = vlaneseq
    %v2907 = vshrl.u32 %v2906, 7
    %v2908 = vsub.s32 0, %v2907
    %v2909 = vrot.slane %v2904, %v2908
    %2911 = vmatprep.subr.mxu0 0.0
    %2912 = vmatpush1.msra.mxu0 0.0
    %2913 = vmatprep.subr.mxu0 0.0
    %2914 = vmatpush1.msra.mxu0 0.0
    %2915 = vmatprep.subr.mxu0 0.0
    %2916 = vmatpush1.msra.mxu0 0.0
    %2917 = vmatprep.subr.mxu0 0.0
    %2918 = vmatpush1.msra.mxu0 0.0
    %2919 = vmatprep.subr.mxu0 0.0
    %2920 = vmatpush1.msra.mxu0 0.0
    %2921 = vmatprep.subr.mxu0 0.0
    %2922 = vmatpush1.msra.mxu0 0.0
    %2923 = vmatprep.subr.mxu0 0.0
    %2924 = vmatpush1.msra.mxu0 0.0
    %2925 = vmatprep.subr.mxu0 0.0
    %2926 = vmatpush1.msra.mxu0 0.0
    %2927 = vmatprep.subr.mxu0 0.0
    %2928 = vmatpush1.msra.mxu0 0.0
    %2929 = vmatprep.subr.mxu0 0.0
    %2930 = vmatpush1.msra.mxu0 0.0
    %2931 = vmatprep.subr.mxu0 0.0
    %2932 = vmatpush1.msra.mxu0 0.0
    %2933 = vmatprep.subr.mxu0 0.0
    %2934 = vmatpush1.msra.mxu0 0.0
    %2935 = vmatprep.subr.mxu0 0.0
    %2936 = vmatpush1.msra.mxu0 %v2902
    %2937 = vmatprep.subr.mxu0 0.0
    %2938 = vmatpush1.msra.mxu0 %v2901
    %2939 = vmatprep.subr.mxu0 0.0
    %2940 = vmatpush1.msra.mxu0 %v2900
    %2941 = vmatprep.subr.mxu0 0.0
    %2942 = vmatpush1.msra.mxu0 %v2899
    %2943 = vmatprep.subr.mxu0 0.0
    %2944 = vmatpush2.msra.mxu0 0.0
    %2945 = vmatprep.subr.mxu0 0.0
    %2946 = vmatpush2.msra.mxu0 0.0
    %2947 = vmatprep.subr.mxu0 0.0
    %2948 = vmatpush2.msra.mxu0 0.0
    %2949 = vmatprep.subr.mxu0 0.0
    %2950 = vmatpush2.msra.mxu0 0.0
    %2951 = vmatprep.subr.mxu0 0.0
    %2952 = vmatpush2.msra.mxu0 0.0
    %2953 = vmatprep.subr.mxu0 0.0
    %2954 = vmatpush2.msra.mxu0 0.0
    %2955 = vmatprep.subr.mxu0 0.0
    %2956 = vmatpush2.msra.mxu0 0.0
    %2957 = vmatprep.subr.mxu0 0.0
    %2958 = vmatpush2.msra.mxu0 0.0
    %2959 = vmatprep.subr.mxu0 0.0
    %2960 = vmatpush2.msra.mxu0 0.0
    %2961 = vmatprep.subr.mxu0 0.0
    %2962 = vmatpush2.msra.mxu0 0.0
    %2963 = vmatprep.subr.mxu0 0.0
    %2964 = vmatpush2.msra.mxu0 0.0
    %2965 = vmatprep.subr.mxu0 0.0
    %2966 = vmatpush2.msra.mxu0 0.0
    %2967 = vmatprep.subr.mxu0 0.0
    %2968 = vmatpush2.msra.mxu0 0.0
    %2969 = vmatprep.subr.mxu0 0.0
    %2970 = vmatpush2.msra.mxu0 0.0
    %2971 = vmatprep.subr.mxu0 0.0
    %2972 = vmatpush2.msra.mxu0 0.0
    %2973 = vmatprep.subr.mxu0 0.0
    %2974 = vmatpush2.msra.mxu0 0.0
    %2975 = vmatprep.mubr.f32.mxu0 0.0
    %2976 = vmatmul.mubr.f32.gmra.mxu0 %v48
    %v2977 = vpop.f32.mrf.mxu0
    %v2978 = vadd.f32 %v2909, %v2977
    %v2979 = vpop.f32.mrf.mxu0
    %2980 = vmatprep.mubr.f32.mxu0 0.0
    %2981 = vmatmul.mubr.f32.gmra.mxu0 %v51
    %v2982 = vpop.f32.mrf.mxu0
    %v2983 = vadd.f32 %v2909, %v2982
    %v2984 = vpop.f32.mrf.mxu0
    %2985 = vdwg.mxu0
    %v2987 = vsel %vm300, %v2802, 0
    %v2990 = vsel %vm300, %v2890, 0
    %2992 = vmatprep.subr.mxu0 0.0
    %2993 = vmatpush1.xpose.msra.mxu0 0.0
    %2994 = vmatprep.subr.mxu0 0.0
    %2995 = vmatpush1.xpose.msra.mxu0 0.0
    %2996 = vmatprep.subr.mxu0 0.0
    %2997 = vmatpush1.xpose.msra.mxu0 0.0
    %2998 = vmatprep.subr.mxu0 0.0
    %2999 = vmatpush1.xpose.msra.mxu0 0.0
    %3000 = vmatprep.subr.mxu0 0.0
    %3001 = vmatpush1.xpose.msra.mxu0 0.0
    %3002 = vmatprep.subr.mxu0 0.0
    %3003 = vmatpush1.xpose.msra.mxu0 0.0
    %3004 = vmatprep.subr.mxu0 0.0
    %3005 = vmatpush1.xpose.msra.mxu0 0.0
    %3006 = vmatprep.subr.mxu0 0.0
    %3007 = vmatpush1.xpose.msra.mxu0 0.0
    %3008 = vmatprep.subr.mxu0 0.0
    %3009 = vmatpush1.xpose.msra.mxu0 0.0
    %3010 = vmatprep.subr.mxu0 0.0
    %3011 = vmatpush1.xpose.msra.mxu0 0.0
    %3012 = vmatprep.subr.mxu0 0.0
    %3013 = vmatpush1.xpose.msra.mxu0 0.0
    %3014 = vmatprep.subr.mxu0 0.0
    %3015 = vmatpush1.xpose.msra.mxu0 0.0
    %3016 = vmatprep.subr.mxu0 0.0
    %3017 = vmatpush1.xpose.msra.mxu0 0.0
    %3018 = vmatprep.subr.mxu0 0.0
    %3019 = vmatpush1.xpose.msra.mxu0 0.0
    %3020 = vmatprep.subr.mxu0 0.0
    %3021 = vmatpush1.xpose.msra.mxu0 0.0
    %3022 = vmatprep.subr.mxu0 0.0
    %3023 = vmatpush1.xpose.msra.mxu0 %v2990
    %3024 = vmatprep.subr.mxu0 0.0
    %3025 = vmatpush2.xpose.msra.mxu0 0.0
    %3026 = vmatprep.subr.mxu0 0.0
    %3027 = vmatpush2.xpose.msra.mxu0 0.0
    %3028 = vmatprep.subr.mxu0 0.0
    %3029 = vmatpush2.xpose.msra.mxu0 0.0
    %3030 = vmatprep.subr.mxu0 0.0
    %3031 = vmatpush2.xpose.msra.mxu0 0.0
    %3032 = vmatprep.subr.mxu0 0.0
    %3033 = vmatpush2.xpose.msra.mxu0 0.0
    %3034 = vmatprep.subr.mxu0 0.0
    %3035 = vmatpush2.xpose.msra.mxu0 0.0
    %3036 = vmatprep.subr.mxu0 0.0
    %3037 = vmatpush2.xpose.msra.mxu0 0.0
    %3038 = vmatprep.subr.mxu0 0.0
    %3039 = vmatpush2.xpose.msra.mxu0 0.0
    %3040 = vmatprep.subr.mxu0 0.0
    %3041 = vmatpush2.xpose.msra.mxu0 0.0
    %3042 = vmatprep.subr.mxu0 0.0
    %3043 = vmatpush2.xpose.msra.mxu0 0.0
    %3044 = vmatprep.subr.mxu0 0.0
    %3045 = vmatpush2.xpose.msra.mxu0 0.0
    %3046 = vmatprep.subr.mxu0 0.0
    %3047 = vmatpush2.xpose.msra.mxu0 0.0
    %3048 = vmatprep.subr.mxu0 0.0
    %3049 = vmatpush2.xpose.msra.mxu0 0.0
    %3050 = vmatprep.subr.mxu0 0.0
    %3051 = vmatpush2.xpose.msra.mxu0 0.0
    %3052 = vmatprep.subr.mxu0 0.0
    %3053 = vmatpush2.xpose.msra.mxu0 0.0
    %3054 = vmatprep.subr.mxu0 0.0
    %3055 = vmatpush2.xpose.msra.mxu0 0.0
    %3056 = vmatprep.mubr.f32.mxu0 0.0
    %3057 = vmatmul.mubr.f32.gmra.mxu0 %v2987
    %v3058 = vpop.f32.mrf.mxu0
    %v3059 = vadd.f32 0.0, %v3058
    %v3060 = vpop.f32.mrf.mxu0
    %3061 = vdwg.mxu0
    %v3063 = vsel %vm300, %v2807, 0
    %v3066 = vsel %vm300, %v2895, 0
    %3068 = vmatprep.subr.mxu0 0.0
    %3069 = vmatpush1.xpose.msra.mxu0 0.0
    %3070 = vmatprep.subr.mxu0 0.0
    %3071 = vmatpush1.xpose.msra.mxu0 0.0
    %3072 = vmatprep.subr.mxu0 0.0
    %3073 = vmatpush1.xpose.msra.mxu0 0.0
    %3074 = vmatprep.subr.mxu0 0.0
    %3075 = vmatpush1.xpose.msra.mxu0 0.0
    %3076 = vmatprep.subr.mxu0 0.0
    %3077 = vmatpush1.xpose.msra.mxu0 0.0
    %3078 = vmatprep.subr.mxu0 0.0
    %3079 = vmatpush1.xpose.msra.mxu0 0.0
    %3080 = vmatprep.subr.mxu0 0.0
    %3081 = vmatpush1.xpose.msra.mxu0 0.0
    %3082 = vmatprep.subr.mxu0 0.0
    %3083 = vmatpush1.xpose.msra.mxu0 0.0
    %3084 = vmatprep.subr.mxu0 0.0
    %3085 = vmatpush1.xpose.msra.mxu0 0.0
    %3086 = vmatprep.subr.mxu0 0.0
    %3087 = vmatpush1.xpose.msra.mxu0 0.0
    %3088 = vmatprep.subr.mxu0 0.0
    %3089 = vmatpush1.xpose.msra.mxu0 0.0
    %3090 = vmatprep.subr.mxu0 0.0
    %3091 = vmatpush1.xpose.msra.mxu0 0.0
    %3092 = vmatprep.subr.mxu0 0.0
    %3093 = vmatpush1.xpose.msra.mxu0 0.0
    %3094 = vmatprep.subr.mxu0 0.0
    %3095 = vmatpush1.xpose.msra.mxu0 0.0
    %3096 = vmatprep.subr.mxu0 0.0
    %3097 = vmatpush1.xpose.msra.mxu0 0.0
    %3098 = vmatprep.subr.mxu0 0.0
    %3099 = vmatpush1.xpose.msra.mxu0 %v3066
    %3100 = vmatprep.subr.mxu0 0.0
    %3101 = vmatpush2.xpose.msra.mxu0 0.0
    %3102 = vmatprep.subr.mxu0 0.0
    %3103 = vmatpush2.xpose.msra.mxu0 0.0
    %3104 = vmatprep.subr.mxu0 0.0
    %3105 = vmatpush2.xpose.msra.mxu0 0.0
    %3106 = vmatprep.subr.mxu0 0.0
    %3107 = vmatpush2.xpose.msra.mxu0 0.0
    %3108 = vmatprep.subr.mxu0 0.0
    %3109 = vmatpush2.xpose.msra.mxu0 0.0
    %3110 = vmatprep.subr.mxu0 0.0
    %3111 = vmatpush2.xpose.msra.mxu0 0.0
    %3112 = vmatprep.subr.mxu0 0.0
    %3113 = vmatpush2.xpose.msra.mxu0 0.0
    %3114 = vmatprep.subr.mxu0 0.0
    %3115 = vmatpush2.xpose.msra.mxu0 0.0
    %3116 = vmatprep.subr.mxu0 0.0
    %3117 = vmatpush2.xpose.msra.mxu0 0.0
    %3118 = vmatprep.subr.mxu0 0.0
    %3119 = vmatpush2.xpose.msra.mxu0 0.0
    %3120 = vmatprep.subr.mxu0 0.0
    %3121 = vmatpush2.xpose.msra.mxu0 0.0
    %3122 = vmatprep.subr.mxu0 0.0
    %3123 = vmatpush2.xpose.msra.mxu0 0.0
    %3124 = vmatprep.subr.mxu0 0.0
    %3125 = vmatpush2.xpose.msra.mxu0 0.0
    %3126 = vmatprep.subr.mxu0 0.0
    %3127 = vmatpush2.xpose.msra.mxu0 0.0
    %3128 = vmatprep.subr.mxu0 0.0
    %3129 = vmatpush2.xpose.msra.mxu0 0.0
    %3130 = vmatprep.subr.mxu0 0.0
    %3131 = vmatpush2.xpose.msra.mxu0 0.0
    %3132 = vmatprep.mubr.f32.mxu0 0.0
    %3133 = vmatmul.mubr.f32.gmra.mxu0 %v3063
    %v3134 = vpop.f32.mrf.mxu0
    %v3135 = vadd.f32 0.0, %v3134
    %v3136 = vpop.f32.mrf.mxu0
    %3137 = vdwg.mxu0
    %v3138 = vsel %vm453, %v3059, -inf
    %3139 = vmax.xlane.f32.xlu0 %v3138
    %v3140 = vpop.xlane.xlu0 %3139
    %v3141 = vsel %vm453, %v3135, -inf
    %3142 = vmax.xlane.f32.xlu0 %v3141
    %v3143 = vpop.xlane.xlu0 %3142
    %v3144 = vsub.f32 %v3059, %v3140
    %v3145 = vsub.f32 %v3135, %v3143
    %v3146 = vmul.f32 %v3144, 1.442695
    %v3147 = vpow.pop %v3146
    %v3148 = vmul.f32 %v3145, 1.442695
    %v3149 = vpow.pop %v3148
    %v3150 = vsel %vm453, %v3147, 0.0
    %3151 = vadd.xlane.f32.xlu0 %v3150
    %v3152 = vpop.xlane.xlu0 %3151
    %v3153 = vsel %vm453, %v3149, 0.0
    %3154 = vadd.xlane.f32.xlu0 %v3153
    %v3155 = vpop.xlane.xlu0 %3154
    %v3157 = vsel %vm453, %v3147, 0
    %3159 = vmatprep.subr.mxu0 0.0
    %3160 = vmatpush1.msra.mxu0 0.0
    %3161 = vmatprep.subr.mxu0 0.0
    %3162 = vmatpush1.msra.mxu0 0.0
    %3163 = vmatprep.subr.mxu0 0.0
    %3164 = vmatpush1.msra.mxu0 0.0
    %3165 = vmatprep.subr.mxu0 0.0
    %3166 = vmatpush1.msra.mxu0 0.0
    %3167 = vmatprep.subr.mxu0 0.0
    %3168 = vmatpush1.msra.mxu0 0.0
    %3169 = vmatprep.subr.mxu0 0.0
    %3170 = vmatpush1.msra.mxu0 0.0
    %3171 = vmatprep.subr.mxu0 0.0
    %3172 = vmatpush1.msra.mxu0 0.0
    %3173 = vmatprep.subr.mxu0 0.0
    %3174 = vmatpush1.msra.mxu0 0.0
    %3175 = vmatprep.subr.mxu0 0.0
    %3176 = vmatpush1.msra.mxu0 0.0
    %3177 = vmatprep.subr.mxu0 0.0
    %3178 = vmatpush1.msra.mxu0 0.0
    %3179 = vmatprep.subr.mxu0 0.0
    %3180 = vmatpush1.msra.mxu0 0.0
    %3181 = vmatprep.subr.mxu0 0.0
    %3182 = vmatpush1.msra.mxu0 0.0
    %3183 = vmatprep.subr.mxu0 0.0
    %3184 = vmatpush1.msra.mxu0 0.0
    %3185 = vmatprep.subr.mxu0 0.0
    %3186 = vmatpush1.msra.mxu0 0.0
    %3187 = vmatprep.subr.mxu0 0.0
    %3188 = vmatpush1.msra.mxu0 0.0
    %3189 = vmatprep.subr.mxu0 0.0
    %3190 = vmatpush1.msra.mxu0 %v2978
    %3191 = vmatprep.subr.mxu0 0.0
    %3192 = vmatpush2.msra.mxu0 0.0
    %3193 = vmatprep.subr.mxu0 0.0
    %3194 = vmatpush2.msra.mxu0 0.0
    %3195 = vmatprep.subr.mxu0 0.0
    %3196 = vmatpush2.msra.mxu0 0.0
    %3197 = vmatprep.subr.mxu0 0.0
    %3198 = vmatpush2.msra.mxu0 0.0
    %3199 = vmatprep.subr.mxu0 0.0
    %3200 = vmatpush2.msra.mxu0 0.0
    %3201 = vmatprep.subr.mxu0 0.0
    %3202 = vmatpush2.msra.mxu0 0.0
    %3203 = vmatprep.subr.mxu0 0.0
    %3204 = vmatpush2.msra.mxu0 0.0
    %3205 = vmatprep.subr.mxu0 0.0
    %3206 = vmatpush2.msra.mxu0 0.0
    %3207 = vmatprep.subr.mxu0 0.0
    %3208 = vmatpush2.msra.mxu0 0.0
    %3209 = vmatprep.subr.mxu0 0.0
    %3210 = vmatpush2.msra.mxu0 0.0
    %3211 = vmatprep.subr.mxu0 0.0
    %3212 = vmatpush2.msra.mxu0 0.0
    %3213 = vmatprep.subr.mxu0 0.0
    %3214 = vmatpush2.msra.mxu0 0.0
    %3215 = vmatprep.subr.mxu0 0.0
    %3216 = vmatpush2.msra.mxu0 0.0
    %3217 = vmatprep.subr.mxu0 0.0
    %3218 = vmatpush2.msra.mxu0 0.0
    %3219 = vmatprep.subr.mxu0 0.0
    %3220 = vmatpush2.msra.mxu0 0.0
    %3221 = vmatprep.subr.mxu0 0.0
    %3222 = vmatpush2.msra.mxu0 0.0
    %3223 = vmatprep.mubr.f32.mxu0 0.0
    %3224 = vmatmul.mubr.f32.gmra.mxu0 %v3157
    %v3225 = vpop.f32.mrf.mxu0
    %v3226 = vadd.f32 0.0, %v3225
    %v3227 = vpop.f32.mrf.mxu0
    %3228 = vdwg.mxu0
    %v3230 = vsel %vm453, %v3149, 0
    %3232 = vmatprep.subr.mxu0 0.0
    %3233 = vmatpush1.msra.mxu0 0.0
    %3234 = vmatprep.subr.mxu0 0.0
    %3235 = vmatpush1.msra.mxu0 0.0
    %3236 = vmatprep.subr.mxu0 0.0
    %3237 = vmatpush1.msra.mxu0 0.0
    %3238 = vmatprep.subr.mxu0 0.0
    %3239 = vmatpush1.msra.mxu0 0.0
    %3240 = vmatprep.subr.mxu0 0.0
    %3241 = vmatpush1.msra.mxu0 0.0
    %3242 = vmatprep.subr.mxu0 0.0
    %3243 = vmatpush1.msra.mxu0 0.0
    %3244 = vmatprep.subr.mxu0 0.0
    %3245 = vmatpush1.msra.mxu0 0.0
    %3246 = vmatprep.subr.mxu0 0.0
    %3247 = vmatpush1.msra.mxu0 0.0
    %3248 = vmatprep.subr.mxu0 0.0
    %3249 = vmatpush1.msra.mxu0 0.0
    %3250 = vmatprep.subr.mxu0 0.0
    %3251 = vmatpush1.msra.mxu0 0.0
    %3252 = vmatprep.subr.mxu0 0.0
    %3253 = vmatpush1.msra.mxu0 0.0
    %3254 = vmatprep.subr.mxu0 0.0
    %3255 = vmatpush1.msra.mxu0 0.0
    %3256 = vmatprep.subr.mxu0 0.0
    %3257 = vmatpush1.msra.mxu0 0.0
    %3258 = vmatprep.subr.mxu0 0.0
    %3259 = vmatpush1.msra.mxu0 0.0
    %3260 = vmatprep.subr.mxu0 0.0
    %3261 = vmatpush1.msra.mxu0 0.0
    %3262 = vmatprep.subr.mxu0 0.0
    %3263 = vmatpush1.msra.mxu0 %v2983
    %3264 = vmatprep.subr.mxu0 0.0
    %3265 = vmatpush2.msra.mxu0 0.0
    %3266 = vmatprep.subr.mxu0 0.0
    %3267 = vmatpush2.msra.mxu0 0.0
    %3268 = vmatprep.subr.mxu0 0.0
    %3269 = vmatpush2.msra.mxu0 0.0
    %3270 = vmatprep.subr.mxu0 0.0
    %3271 = vmatpush2.msra.mxu0 0.0
    %3272 = vmatprep.subr.mxu0 0.0
    %3273 = vmatpush2.msra.mxu0 0.0
    %3274 = vmatprep.subr.mxu0 0.0
    %3275 = vmatpush2.msra.mxu0 0.0
    %3276 = vmatprep.subr.mxu0 0.0
    %3277 = vmatpush2.msra.mxu0 0.0
    %3278 = vmatprep.subr.mxu0 0.0
    %3279 = vmatpush2.msra.mxu0 0.0
    %3280 = vmatprep.subr.mxu0 0.0
    %3281 = vmatpush2.msra.mxu0 0.0
    %3282 = vmatprep.subr.mxu0 0.0
    %3283 = vmatpush2.msra.mxu0 0.0
    %3284 = vmatprep.subr.mxu0 0.0
    %3285 = vmatpush2.msra.mxu0 0.0
    %3286 = vmatprep.subr.mxu0 0.0
    %3287 = vmatpush2.msra.mxu0 0.0
    %3288 = vmatprep.subr.mxu0 0.0
    %3289 = vmatpush2.msra.mxu0 0.0
    %3290 = vmatprep.subr.mxu0 0.0
    %3291 = vmatpush2.msra.mxu0 0.0
    %3292 = vmatprep.subr.mxu0 0.0
    %3293 = vmatpush2.msra.mxu0 0.0
    %3294 = vmatprep.subr.mxu0 0.0
    %3295 = vmatpush2.msra.mxu0 0.0
    %3296 = vmatprep.mubr.f32.mxu0 0.0
    %3297 = vmatmul.mubr.f32.gmra.mxu0 %v3230
    %v3298 = vpop.f32.mrf.mxu0
    %v3299 = vadd.f32 0.0, %v3298
    %v3300 = vpop.f32.mrf.mxu0
    %3301 = vdwg.mxu0
    %v3302 = vrcp.pop %v3152
    %v3303 = vmul.f32 %v3226, %v3302
    %v3304 = vrcp.pop %v3155
    %v3305 = vmul.f32 %v3299, %v3304
    %s3306 = scalar_lea.vmem %s7, 16
    %v3307 = vld [vmem:[%s3306] sm:$0xf]
    %v3309 = vsel %vm300, %v3303, 0
    %v3312 = vsel %vm300, %v3305, 0
    %v3315 = vsel %vm1215, %v3307, 0
    %3317 = vmatprep.subr.mxu0 0.0
    %3318 = vmatpush1.msra.mxu0 0.0
    %3319 = vmatprep.subr.mxu0 0.0
    %3320 = vmatpush1.msra.mxu0 0.0
    %3321 = vmatprep.subr.mxu0 0.0
    %3322 = vmatpush1.msra.mxu0 0.0
    %3323 = vmatprep.subr.mxu0 0.0
    %3324 = vmatpush1.msra.mxu0 0.0
    %3325 = vmatprep.subr.mxu0 0.0
    %3326 = vmatpush1.msra.mxu0 0.0
    %3327 = vmatprep.subr.mxu0 0.0
    %3328 = vmatpush1.msra.mxu0 0.0
    %3329 = vmatprep.subr.mxu0 0.0
    %3330 = vmatpush1.msra.mxu0 0.0
    %3331 = vmatprep.subr.mxu0 0.0
    %3332 = vmatpush1.msra.mxu0 0.0
    %3333 = vmatprep.subr.mxu0 0.0
    %3334 = vmatpush1.msra.mxu0 0.0
    %3335 = vmatprep.subr.mxu0 0.0
    %3336 = vmatpush1.msra.mxu0 0.0
    %3337 = vmatprep.subr.mxu0 0.0
    %3338 = vmatpush1.msra.mxu0 0.0
    %3339 = vmatprep.subr.mxu0 0.0
    %3340 = vmatpush1.msra.mxu0 0.0
    %3341 = vmatprep.subr.mxu0 0.0
    %3342 = vmatpush1.msra.mxu0 0.0
    %3343 = vmatprep.subr.mxu0 0.0
    %3344 = vmatpush1.msra.mxu0 0.0
    %3345 = vmatprep.subr.mxu0 0.0
    %3346 = vmatpush1.msra.mxu0 0.0
    %3347 = vmatprep.subr.mxu0 0.0
    %3348 = vmatpush1.msra.mxu0 %v3315
    %3349 = vmatprep.subr.mxu0 0.0
    %3350 = vmatpush2.msra.mxu0 0.0
    %3351 = vmatprep.subr.mxu0 0.0
    %3352 = vmatpush2.msra.mxu0 0.0
    %3353 = vmatprep.subr.mxu0 0.0
    %3354 = vmatpush2.msra.mxu0 0.0
    %3355 = vmatprep.subr.mxu0 0.0
    %3356 = vmatpush2.msra.mxu0 0.0
    %3357 = vmatprep.subr.mxu0 0.0
    %3358 = vmatpush2.msra.mxu0 0.0
    %3359 = vmatprep.subr.mxu0 0.0
    %3360 = vmatpush2.msra.mxu0 0.0
    %3361 = vmatprep.subr.mxu0 0.0
    %3362 = vmatpush2.msra.mxu0 0.0
    %3363 = vmatprep.subr.mxu0 0.0
    %3364 = vmatpush2.msra.mxu0 0.0
    %3365 = vmatprep.subr.mxu0 0.0
    %3366 = vmatpush2.msra.mxu0 0.0
    %3367 = vmatprep.subr.mxu0 0.0
    %3368 = vmatpush2.msra.mxu0 0.0
    %3369 = vmatprep.subr.mxu0 0.0
    %3370 = vmatpush2.msra.mxu0 0.0
    %3371 = vmatprep.subr.mxu0 0.0
    %3372 = vmatpush2.msra.mxu0 0.0
    %3373 = vmatprep.subr.mxu0 0.0
    %3374 = vmatpush2.msra.mxu0 0.0
    %3375 = vmatprep.subr.mxu0 0.0
    %3376 = vmatpush2.msra.mxu0 0.0
    %3377 = vmatprep.subr.mxu0 0.0
    %3378 = vmatpush2.msra.mxu0 0.0
    %3379 = vmatprep.subr.mxu0 0.0
    %3380 = vmatpush2.msra.mxu0 0.0
    %3381 = vmatprep.mubr.f32.mxu0 0.0
    %3382 = vmatmul.mubr.f32.gmra.mxu0 %v3309
    %v3383 = vpop.f32.mrf.mxu0
    %v3384 = vadd.f32 0.0, %v3383
    %v3385 = vpop.f32.mrf.mxu0
    %3386 = vmatprep.mubr.f32.mxu0 0.0
    %3387 = vmatmul.mubr.f32.gmra.mxu0 %v3312
    %v3388 = vpop.f32.mrf.mxu0
    %v3389 = vadd.f32 0.0, %v3388
    %v3390 = vpop.f32.mrf.mxu0
    %3391 = vdwg.mxu0
    %v3392 = vadd.f32 %v2720, %v3384
    %v3393 = vadd.f32 %v2721, %v3389
    %s3394 = scalar_lea.vmem %s1, 160
    %v3395 = vld [vmem:[%s3394] sm:$0xff]
    %v3396 = vld [vmem:[%s3394 + $0x8] sm:$0xff]
    %v3397 = vld [vmem:[%s3394 + $0x10] sm:$0xff]
    %v3398 = vld [vmem:[%s3394 + $0x18] sm:$0xff]
    %s3399 = scalar_lea.vmem %s4, 5
    %v3400 = vld [vmem:[%s3399] sm:$0x1]
    %v3402 = vlaneseq
    %v3403 = vshrl.u32 %v3402, 7
    %v3404 = vsub.s32 0, %v3403
    %v3405 = vrot.slane %v3400, %v3404
    %3407 = vmatprep.subr.mxu0 0.0
    %3408 = vmatpush1.msra.mxu0 0.0
    %3409 = vmatprep.subr.mxu0 0.0
    %3410 = vmatpush1.msra.mxu0 0.0
    %3411 = vmatprep.subr.mxu0 0.0
    %3412 = vmatpush1.msra.mxu0 0.0
    %3413 = vmatprep.subr.mxu0 0.0
    %3414 = vmatpush1.msra.mxu0 0.0
    %3415 = vmatprep.subr.mxu0 0.0
    %3416 = vmatpush1.msra.mxu0 0.0
    %3417 = vmatprep.subr.mxu0 0.0
    %3418 = vmatpush1.msra.mxu0 0.0
    %3419 = vmatprep.subr.mxu0 0.0
    %3420 = vmatpush1.msra.mxu0 0.0
    %3421 = vmatprep.subr.mxu0 0.0
    %3422 = vmatpush1.msra.mxu0 0.0
    %3423 = vmatprep.subr.mxu0 0.0
    %3424 = vmatpush1.msra.mxu0 0.0
    %3425 = vmatprep.subr.mxu0 0.0
    %3426 = vmatpush1.msra.mxu0 0.0
    %3427 = vmatprep.subr.mxu0 0.0
    %3428 = vmatpush1.msra.mxu0 0.0
    %3429 = vmatprep.subr.mxu0 0.0
    %3430 = vmatpush1.msra.mxu0 0.0
    %3431 = vmatprep.subr.mxu0 0.0
    %3432 = vmatpush1.msra.mxu0 %v3398
    %3433 = vmatprep.subr.mxu0 0.0
    %3434 = vmatpush1.msra.mxu0 %v3397
    %3435 = vmatprep.subr.mxu0 0.0
    %3436 = vmatpush1.msra.mxu0 %v3396
    %3437 = vmatprep.subr.mxu0 0.0
    %3438 = vmatpush1.msra.mxu0 %v3395
    %3439 = vmatprep.subr.mxu0 0.0
    %3440 = vmatpush2.msra.mxu0 0.0
    %3441 = vmatprep.subr.mxu0 0.0
    %3442 = vmatpush2.msra.mxu0 0.0
    %3443 = vmatprep.subr.mxu0 0.0
    %3444 = vmatpush2.msra.mxu0 0.0
    %3445 = vmatprep.subr.mxu0 0.0
    %3446 = vmatpush2.msra.mxu0 0.0
    %3447 = vmatprep.subr.mxu0 0.0
    %3448 = vmatpush2.msra.mxu0 0.0
    %3449 = vmatprep.subr.mxu0 0.0
    %3450 = vmatpush2.msra.mxu0 0.0
    %3451 = vmatprep.subr.mxu0 0.0
    %3452 = vmatpush2.msra.mxu0 0.0
    %3453 = vmatprep.subr.mxu0 0.0
    %3454 = vmatpush2.msra.mxu0 0.0
    %3455 = vmatprep.subr.mxu0 0.0
    %3456 = vmatpush2.msra.mxu0 0.0
    %3457 = vmatprep.subr.mxu0 0.0
    %3458 = vmatpush2.msra.mxu0 0.0
    %3459 = vmatprep.subr.mxu0 0.0
    %3460 = vmatpush2.msra.mxu0 0.0
    %3461 = vmatprep.subr.mxu0 0.0
    %3462 = vmatpush2.msra.mxu0 0.0
    %3463 = vmatprep.subr.mxu0 0.0
    %3464 = vmatpush2.msra.mxu0 0.0
    %3465 = vmatprep.subr.mxu0 0.0
    %3466 = vmatpush2.msra.mxu0 0.0
    %3467 = vmatprep.subr.mxu0 0.0
    %3468 = vmatpush2.msra.mxu0 0.0
    %3469 = vmatprep.subr.mxu0 0.0
    %3470 = vmatpush2.msra.mxu0 0.0
    %3471 = vmatprep.mubr.f32.mxu0 0.0
    %3472 = vmatmul.mubr.f32.gmra.mxu0 %v48
    %v3473 = vpop.f32.mrf.mxu0
    %v3474 = vadd.f32 %v3405, %v3473
    %v3475 = vpop.f32.mrf.mxu0
    %3476 = vmatprep.mubr.f32.mxu0 0.0
    %3477 = vmatmul.mubr.f32.gmra.mxu0 %v51
    %v3478 = vpop.f32.mrf.mxu0
    %v3479 = vadd.f32 %v3405, %v3478
    %v3480 = vpop.f32.mrf.mxu0
    %3481 = vdwg.mxu0
    %s3482 = scalar_lea.vmem %s2, 160
    %v3483 = vld [vmem:[%s3482] sm:$0xff]
    %v3484 = vld [vmem:[%s3482 + $0x8] sm:$0xff]
    %v3485 = vld [vmem:[%s3482 + $0x10] sm:$0xff]
    %v3486 = vld [vmem:[%s3482 + $0x18] sm:$0xff]
    %s3487 = scalar_lea.vmem %s5, 5
    %v3488 = vld [vmem:[%s3487] sm:$0x1]
    %v3490 = vlaneseq
    %v3491 = vshrl.u32 %v3490, 7
    %v3492 = vsub.s32 0, %v3491
    %v3493 = vrot.slane %v3488, %v3492
    %3495 = vmatprep.subr.mxu0 0.0
    %3496 = vmatpush1.msra.mxu0 0.0
    %3497 = vmatprep.subr.mxu0 0.0
    %3498 = vmatpush1.msra.mxu0 0.0
    %3499 = vmatprep.subr.mxu0 0.0
    %3500 = vmatpush1.msra.mxu0 0.0
    %3501 = vmatprep.subr.mxu0 0.0
    %3502 = vmatpush1.msra.mxu0 0.0
    %3503 = vmatprep.subr.mxu0 0.0
    %3504 = vmatpush1.msra.mxu0 0.0
    %3505 = vmatprep.subr.mxu0 0.0
    %3506 = vmatpush1.msra.mxu0 0.0
    %3507 = vmatprep.subr.mxu0 0.0
    %3508 = vmatpush1.msra.mxu0 0.0
    %3509 = vmatprep.subr.mxu0 0.0
    %3510 = vmatpush1.msra.mxu0 0.0
    %3511 = vmatprep.subr.mxu0 0.0
    %3512 = vmatpush1.msra.mxu0 0.0
    %3513 = vmatprep.subr.mxu0 0.0
    %3514 = vmatpush1.msra.mxu0 0.0
    %3515 = vmatprep.subr.mxu0 0.0
    %3516 = vmatpush1.msra.mxu0 0.0
    %3517 = vmatprep.subr.mxu0 0.0
    %3518 = vmatpush1.msra.mxu0 0.0
    %3519 = vmatprep.subr.mxu0 0.0
    %3520 = vmatpush1.msra.mxu0 %v3486
    %3521 = vmatprep.subr.mxu0 0.0
    %3522 = vmatpush1.msra.mxu0 %v3485
    %3523 = vmatprep.subr.mxu0 0.0
    %3524 = vmatpush1.msra.mxu0 %v3484
    %3525 = vmatprep.subr.mxu0 0.0
    %3526 = vmatpush1.msra.mxu0 %v3483
    %3527 = vmatprep.subr.mxu0 0.0
    %3528 = vmatpush2.msra.mxu0 0.0
    %3529 = vmatprep.subr.mxu0 0.0
    %3530 = vmatpush2.msra.mxu0 0.0
    %3531 = vmatprep.subr.mxu0 0.0
    %3532 = vmatpush2.msra.mxu0 0.0
    %3533 = vmatprep.subr.mxu0 0.0
    %3534 = vmatpush2.msra.mxu0 0.0
    %3535 = vmatprep.subr.mxu0 0.0
    %3536 = vmatpush2.msra.mxu0 0.0
    %3537 = vmatprep.subr.mxu0 0.0
    %3538 = vmatpush2.msra.mxu0 0.0
    %3539 = vmatprep.subr.mxu0 0.0
    %3540 = vmatpush2.msra.mxu0 0.0
    %3541 = vmatprep.subr.mxu0 0.0
    %3542 = vmatpush2.msra.mxu0 0.0
    %3543 = vmatprep.subr.mxu0 0.0
    %3544 = vmatpush2.msra.mxu0 0.0
    %3545 = vmatprep.subr.mxu0 0.0
    %3546 = vmatpush2.msra.mxu0 0.0
    %3547 = vmatprep.subr.mxu0 0.0
    %3548 = vmatpush2.msra.mxu0 0.0
    %3549 = vmatprep.subr.mxu0 0.0
    %3550 = vmatpush2.msra.mxu0 0.0
    %3551 = vmatprep.subr.mxu0 0.0
    %3552 = vmatpush2.msra.mxu0 0.0
    %3553 = vmatprep.subr.mxu0 0.0
    %3554 = vmatpush2.msra.mxu0 0.0
    %3555 = vmatprep.subr.mxu0 0.0
    %3556 = vmatpush2.msra.mxu0 0.0
    %3557 = vmatprep.subr.mxu0 0.0
    %3558 = vmatpush2.msra.mxu0 0.0
    %3559 = vmatprep.mubr.f32.mxu0 0.0
    %3560 = vmatmul.mubr.f32.gmra.mxu0 %v48
    %v3561 = vpop.f32.mrf.mxu0
    %v3562 = vadd.f32 %v3493, %v3561
    %v3563 = vpop.f32.mrf.mxu0
    %3564 = vmatprep.mubr.f32.mxu0 0.0
    %3565 = vmatmul.mubr.f32.gmra.mxu0 %v51
    %v3566 = vpop.f32.mrf.mxu0
    %v3567 = vadd.f32 %v3493, %v3566
    %v3568 = vpop.f32.mrf.mxu0
    %3569 = vdwg.mxu0
    %s3570 = scalar_lea.vmem %s3, 160
    %v3571 = vld [vmem:[%s3570] sm:$0xff]
    %v3572 = vld [vmem:[%s3570 + $0x8] sm:$0xff]
    %v3573 = vld [vmem:[%s3570 + $0x10] sm:$0xff]
    %v3574 = vld [vmem:[%s3570 + $0x18] sm:$0xff]
    %s3575 = scalar_lea.vmem %s6, 5
    %v3576 = vld [vmem:[%s3575] sm:$0x1]
    %v3578 = vlaneseq
    %v3579 = vshrl.u32 %v3578, 7
    %v3580 = vsub.s32 0, %v3579
    %v3581 = vrot.slane %v3576, %v3580
    %3583 = vmatprep.subr.mxu0 0.0
    %3584 = vmatpush1.msra.mxu0 0.0
    %3585 = vmatprep.subr.mxu0 0.0
    %3586 = vmatpush1.msra.mxu0 0.0
    %3587 = vmatprep.subr.mxu0 0.0
    %3588 = vmatpush1.msra.mxu0 0.0
    %3589 = vmatprep.subr.mxu0 0.0
    %3590 = vmatpush1.msra.mxu0 0.0
    %3591 = vmatprep.subr.mxu0 0.0
    %3592 = vmatpush1.msra.mxu0 0.0
    %3593 = vmatprep.subr.mxu0 0.0
    %3594 = vmatpush1.msra.mxu0 0.0
    %3595 = vmatprep.subr.mxu0 0.0
    %3596 = vmatpush1.msra.mxu0 0.0
    %3597 = vmatprep.subr.mxu0 0.0
    %3598 = vmatpush1.msra.mxu0 0.0
    %3599 = vmatprep.subr.mxu0 0.0
    %3600 = vmatpush1.msra.mxu0 0.0
    %3601 = vmatprep.subr.mxu0 0.0
    %3602 = vmatpush1.msra.mxu0 0.0
    %3603 = vmatprep.subr.mxu0 0.0
    %3604 = vmatpush1.msra.mxu0 0.0
    %3605 = vmatprep.subr.mxu0 0.0
    %3606 = vmatpush1.msra.mxu0 0.0
    %3607 = vmatprep.subr.mxu0 0.0
    %3608 = vmatpush1.msra.mxu0 %v3574
    %3609 = vmatprep.subr.mxu0 0.0
    %3610 = vmatpush1.msra.mxu0 %v3573
    %3611 = vmatprep.subr.mxu0 0.0
    %3612 = vmatpush1.msra.mxu0 %v3572
    %3613 = vmatprep.subr.mxu0 0.0
    %3614 = vmatpush1.msra.mxu0 %v3571
    %3615 = vmatprep.subr.mxu0 0.0
    %3616 = vmatpush2.msra.mxu0 0.0
    %3617 = vmatprep.subr.mxu0 0.0
    %3618 = vmatpush2.msra.mxu0 0.0
    %3619 = vmatprep.subr.mxu0 0.0
    %3620 = vmatpush2.msra.mxu0 0.0
    %3621 = vmatprep.subr.mxu0 0.0
    %3622 = vmatpush2.msra.mxu0 0.0
    %3623 = vmatprep.subr.mxu0 0.0
    %3624 = vmatpush2.msra.mxu0 0.0
    %3625 = vmatprep.subr.mxu0 0.0
    %3626 = vmatpush2.msra.mxu0 0.0
    %3627 = vmatprep.subr.mxu0 0.0
    %3628 = vmatpush2.msra.mxu0 0.0
    %3629 = vmatprep.subr.mxu0 0.0
    %3630 = vmatpush2.msra.mxu0 0.0
    %3631 = vmatprep.subr.mxu0 0.0
    %3632 = vmatpush2.msra.mxu0 0.0
    %3633 = vmatprep.subr.mxu0 0.0
    %3634 = vmatpush2.msra.mxu0 0.0
    %3635 = vmatprep.subr.mxu0 0.0
    %3636 = vmatpush2.msra.mxu0 0.0
    %3637 = vmatprep.subr.mxu0 0.0
    %3638 = vmatpush2.msra.mxu0 0.0
    %3639 = vmatprep.subr.mxu0 0.0
    %3640 = vmatpush2.msra.mxu0 0.0
    %3641 = vmatprep.subr.mxu0 0.0
    %3642 = vmatpush2.msra.mxu0 0.0
    %3643 = vmatprep.subr.mxu0 0.0
    %3644 = vmatpush2.msra.mxu0 0.0
    %3645 = vmatprep.subr.mxu0 0.0
    %3646 = vmatpush2.msra.mxu0 0.0
    %3647 = vmatprep.mubr.f32.mxu0 0.0
    %3648 = vmatmul.mubr.f32.gmra.mxu0 %v48
    %v3649 = vpop.f32.mrf.mxu0
    %v3650 = vadd.f32 %v3581, %v3649
    %v3651 = vpop.f32.mrf.mxu0
    %3652 = vmatprep.mubr.f32.mxu0 0.0
    %3653 = vmatmul.mubr.f32.gmra.mxu0 %v51
    %v3654 = vpop.f32.mrf.mxu0
    %v3655 = vadd.f32 %v3581, %v3654
    %v3656 = vpop.f32.mrf.mxu0
    %3657 = vdwg.mxu0
    %v3659 = vsel %vm300, %v3474, 0
    %v3662 = vsel %vm300, %v3562, 0
    %3664 = vmatprep.subr.mxu0 0.0
    %3665 = vmatpush1.xpose.msra.mxu0 0.0
    %3666 = vmatprep.subr.mxu0 0.0
    %3667 = vmatpush1.xpose.msra.mxu0 0.0
    %3668 = vmatprep.subr.mxu0 0.0
    %3669 = vmatpush1.xpose.msra.mxu0 0.0
    %3670 = vmatprep.subr.mxu0 0.0
    %3671 = vmatpush1.xpose.msra.mxu0 0.0
    %3672 = vmatprep.subr.mxu0 0.0
    %3673 = vmatpush1.xpose.msra.mxu0 0.0
    %3674 = vmatprep.subr.mxu0 0.0
    %3675 = vmatpush1.xpose.msra.mxu0 0.0
    %3676 = vmatprep.subr.mxu0 0.0
    %3677 = vmatpush1.xpose.msra.mxu0 0.0
    %3678 = vmatprep.subr.mxu0 0.0
    %3679 = vmatpush1.xpose.msra.mxu0 0.0
    %3680 = vmatprep.subr.mxu0 0.0
    %3681 = vmatpush1.xpose.msra.mxu0 0.0
    %3682 = vmatprep.subr.mxu0 0.0
    %3683 = vmatpush1.xpose.msra.mxu0 0.0
    %3684 = vmatprep.subr.mxu0 0.0
    %3685 = vmatpush1.xpose.msra.mxu0 0.0
    %3686 = vmatprep.subr.mxu0 0.0
    %3687 = vmatpush1.xpose.msra.mxu0 0.0
    %3688 = vmatprep.subr.mxu0 0.0
    %3689 = vmatpush1.xpose.msra.mxu0 0.0
    %3690 = vmatprep.subr.mxu0 0.0
    %3691 = vmatpush1.xpose.msra.mxu0 0.0
    %3692 = vmatprep.subr.mxu0 0.0
    %3693 = vmatpush1.xpose.msra.mxu0 0.0
    %3694 = vmatprep.subr.mxu0 0.0
    %3695 = vmatpush1.xpose.msra.mxu0 %v3662
    %3696 = vmatprep.subr.mxu0 0.0
    %3697 = vmatpush2.xpose.msra.mxu0 0.0
    %3698 = vmatprep.subr.mxu0 0.0
    %3699 = vmatpush2.xpose.msra.mxu0 0.0
    %3700 = vmatprep.subr.mxu0 0.0
    %3701 = vmatpush2.xpose.msra.mxu0 0.0
    %3702 = vmatprep.subr.mxu0 0.0
    %3703 = vmatpush2.xpose.msra.mxu0 0.0
    %3704 = vmatprep.subr.mxu0 0.0
    %3705 = vmatpush2.xpose.msra.mxu0 0.0
    %3706 = vmatprep.subr.mxu0 0.0
    %3707 = vmatpush2.xpose.msra.mxu0 0.0
    %3708 = vmatprep.subr.mxu0 0.0
    %3709 = vmatpush2.xpose.msra.mxu0 0.0
    %3710 = vmatprep.subr.mxu0 0.0
    %3711 = vmatpush2.xpose.msra.mxu0 0.0
    %3712 = vmatprep.subr.mxu0 0.0
    %3713 = vmatpush2.xpose.msra.mxu0 0.0
    %3714 = vmatprep.subr.mxu0 0.0
    %3715 = vmatpush2.xpose.msra.mxu0 0.0
    %3716 = vmatprep.subr.mxu0 0.0
    %3717 = vmatpush2.xpose.msra.mxu0 0.0
    %3718 = vmatprep.subr.mxu0 0.0
    %3719 = vmatpush2.xpose.msra.mxu0 0.0
    %3720 = vmatprep.subr.mxu0 0.0
    %3721 = vmatpush2.xpose.msra.mxu0 0.0
    %3722 = vmatprep.subr.mxu0 0.0
    %3723 = vmatpush2.xpose.msra.mxu0 0.0
    %3724 = vmatprep.subr.mxu0 0.0
    %3725 = vmatpush2.xpose.msra.mxu0 0.0
    %3726 = vmatprep.subr.mxu0 0.0
    %3727 = vmatpush2.xpose.msra.mxu0 0.0
    %3728 = vmatprep.mubr.f32.mxu0 0.0
    %3729 = vmatmul.mubr.f32.gmra.mxu0 %v3659
    %v3730 = vpop.f32.mrf.mxu0
    %v3731 = vadd.f32 0.0, %v3730
    %v3732 = vpop.f32.mrf.mxu0
    %3733 = vdwg.mxu0
    %v3735 = vsel %vm300, %v3479, 0
    %v3738 = vsel %vm300, %v3567, 0
    %3740 = vmatprep.subr.mxu0 0.0
    %3741 = vmatpush1.xpose.msra.mxu0 0.0
    %3742 = vmatprep.subr.mxu0 0.0
    %3743 = vmatpush1.xpose.msra.mxu0 0.0
    %3744 = vmatprep.subr.mxu0 0.0
    %3745 = vmatpush1.xpose.msra.mxu0 0.0
    %3746 = vmatprep.subr.mxu0 0.0
    %3747 = vmatpush1.xpose.msra.mxu0 0.0
    %3748 = vmatprep.subr.mxu0 0.0
    %3749 = vmatpush1.xpose.msra.mxu0 0.0
    %3750 = vmatprep.subr.mxu0 0.0
    %3751 = vmatpush1.xpose.msra.mxu0 0.0
    %3752 = vmatprep.subr.mxu0 0.0
    %3753 = vmatpush1.xpose.msra.mxu0 0.0
    %3754 = vmatprep.subr.mxu0 0.0
    %3755 = vmatpush1.xpose.msra.mxu0 0.0
    %3756 = vmatprep.subr.mxu0 0.0
    %3757 = vmatpush1.xpose.msra.mxu0 0.0
    %3758 = vmatprep.subr.mxu0 0.0
    %3759 = vmatpush1.xpose.msra.mxu0 0.0
    %3760 = vmatprep.subr.mxu0 0.0
    %3761 = vmatpush1.xpose.msra.mxu0 0.0
    %3762 = vmatprep.subr.mxu0 0.0
    %3763 = vmatpush1.xpose.msra.mxu0 0.0
    %3764 = vmatprep.subr.mxu0 0.0
    %3765 = vmatpush1.xpose.msra.mxu0 0.0
    %3766 = vmatprep.subr.mxu0 0.0
    %3767 = vmatpush1.xpose.msra.mxu0 0.0
    %3768 = vmatprep.subr.mxu0 0.0
    %3769 = vmatpush1.xpose.msra.mxu0 0.0
    %3770 = vmatprep.subr.mxu0 0.0
    %3771 = vmatpush1.xpose.msra.mxu0 %v3738
    %3772 = vmatprep.subr.mxu0 0.0
    %3773 = vmatpush2.xpose.msra.mxu0 0.0
    %3774 = vmatprep.subr.mxu0 0.0
    %3775 = vmatpush2.xpose.msra.mxu0 0.0
    %3776 = vmatprep.subr.mxu0 0.0
    %3777 = vmatpush2.xpose.msra.mxu0 0.0
    %3778 = vmatprep.subr.mxu0 0.0
    %3779 = vmatpush2.xpose.msra.mxu0 0.0
    %3780 = vmatprep.subr.mxu0 0.0
    %3781 = vmatpush2.xpose.msra.mxu0 0.0
    %3782 = vmatprep.subr.mxu0 0.0
    %3783 = vmatpush2.xpose.msra.mxu0 0.0
    %3784 = vmatprep.subr.mxu0 0.0
    %3785 = vmatpush2.xpose.msra.mxu0 0.0
    %3786 = vmatprep.subr.mxu0 0.0
    %3787 = vmatpush2.xpose.msra.mxu0 0.0
    %3788 = vmatprep.subr.mxu0 0.0
    %3789 = vmatpush2.xpose.msra.mxu0 0.0
    %3790 = vmatprep.subr.mxu0 0.0
    %3791 = vmatpush2.xpose.msra.mxu0 0.0
    %3792 = vmatprep.subr.mxu0 0.0
    %3793 = vmatpush2.xpose.msra.mxu0 0.0
    %3794 = vmatprep.subr.mxu0 0.0
    %3795 = vmatpush2.xpose.msra.mxu0 0.0
    %3796 = vmatprep.subr.mxu0 0.0
    %3797 = vmatpush2.xpose.msra.mxu0 0.0
    %3798 = vmatprep.subr.mxu0 0.0
    %3799 = vmatpush2.xpose.msra.mxu0 0.0
    %3800 = vmatprep.subr.mxu0 0.0
    %3801 = vmatpush2.xpose.msra.mxu0 0.0
    %3802 = vmatprep.subr.mxu0 0.0
    %3803 = vmatpush2.xpose.msra.mxu0 0.0
    %3804 = vmatprep.mubr.f32.mxu0 0.0
    %3805 = vmatmul.mubr.f32.gmra.mxu0 %v3735
    %v3806 = vpop.f32.mrf.mxu0
    %v3807 = vadd.f32 0.0, %v3806
    %v3808 = vpop.f32.mrf.mxu0
    %3809 = vdwg.mxu0
    %v3810 = vsel %vm453, %v3731, -inf
    %3811 = vmax.xlane.f32.xlu0 %v3810
    %v3812 = vpop.xlane.xlu0 %3811
    %v3813 = vsel %vm453, %v3807, -inf
    %3814 = vmax.xlane.f32.xlu0 %v3813
    %v3815 = vpop.xlane.xlu0 %3814
    %v3816 = vsub.f32 %v3731, %v3812
    %v3817 = vsub.f32 %v3807, %v3815
    %v3818 = vmul.f32 %v3816, 1.442695
    %v3819 = vpow.pop %v3818
    %v3820 = vmul.f32 %v3817, 1.442695
    %v3821 = vpow.pop %v3820
    %v3822 = vsel %vm453, %v3819, 0.0
    %3823 = vadd.xlane.f32.xlu0 %v3822
    %v3824 = vpop.xlane.xlu0 %3823
    %v3825 = vsel %vm453, %v3821, 0.0
    %3826 = vadd.xlane.f32.xlu0 %v3825
    %v3827 = vpop.xlane.xlu0 %3826
    %v3829 = vsel %vm453, %v3819, 0
    %3831 = vmatprep.subr.mxu0 0.0
    %3832 = vmatpush1.msra.mxu0 0.0
    %3833 = vmatprep.subr.mxu0 0.0
    %3834 = vmatpush1.msra.mxu0 0.0
    %3835 = vmatprep.subr.mxu0 0.0
    %3836 = vmatpush1.msra.mxu0 0.0
    %3837 = vmatprep.subr.mxu0 0.0
    %3838 = vmatpush1.msra.mxu0 0.0
    %3839 = vmatprep.subr.mxu0 0.0
    %3840 = vmatpush1.msra.mxu0 0.0
    %3841 = vmatprep.subr.mxu0 0.0
    %3842 = vmatpush1.msra.mxu0 0.0
    %3843 = vmatprep.subr.mxu0 0.0
    %3844 = vmatpush1.msra.mxu0 0.0
    %3845 = vmatprep.subr.mxu0 0.0
    %3846 = vmatpush1.msra.mxu0 0.0
    %3847 = vmatprep.subr.mxu0 0.0
    %3848 = vmatpush1.msra.mxu0 0.0
    %3849 = vmatprep.subr.mxu0 0.0
    %3850 = vmatpush1.msra.mxu0 0.0
    %3851 = vmatprep.subr.mxu0 0.0
    %3852 = vmatpush1.msra.mxu0 0.0
    %3853 = vmatprep.subr.mxu0 0.0
    %3854 = vmatpush1.msra.mxu0 0.0
    %3855 = vmatprep.subr.mxu0 0.0
    %3856 = vmatpush1.msra.mxu0 0.0
    %3857 = vmatprep.subr.mxu0 0.0
    %3858 = vmatpush1.msra.mxu0 0.0
    %3859 = vmatprep.subr.mxu0 0.0
    %3860 = vmatpush1.msra.mxu0 0.0
    %3861 = vmatprep.subr.mxu0 0.0
    %3862 = vmatpush1.msra.mxu0 %v3650
    %3863 = vmatprep.subr.mxu0 0.0
    %3864 = vmatpush2.msra.mxu0 0.0
    %3865 = vmatprep.subr.mxu0 0.0
    %3866 = vmatpush2.msra.mxu0 0.0
    %3867 = vmatprep.subr.mxu0 0.0
    %3868 = vmatpush2.msra.mxu0 0.0
    %3869 = vmatprep.subr.mxu0 0.0
    %3870 = vmatpush2.msra.mxu0 0.0
    %3871 = vmatprep.subr.mxu0 0.0
    %3872 = vmatpush2.msra.mxu0 0.0
    %3873 = vmatprep.subr.mxu0 0.0
    %3874 = vmatpush2.msra.mxu0 0.0
    %3875 = vmatprep.subr.mxu0 0.0
    %3876 = vmatpush2.msra.mxu0 0.0
    %3877 = vmatprep.subr.mxu0 0.0
    %3878 = vmatpush2.msra.mxu0 0.0
    %3879 = vmatprep.subr.mxu0 0.0
    %3880 = vmatpush2.msra.mxu0 0.0
    %3881 = vmatprep.subr.mxu0 0.0
    %3882 = vmatpush2.msra.mxu0 0.0
    %3883 = vmatprep.subr.mxu0 0.0
    %3884 = vmatpush2.msra.mxu0 0.0
    %3885 = vmatprep.subr.mxu0 0.0
    %3886 = vmatpush2.msra.mxu0 0.0
    %3887 = vmatprep.subr.mxu0 0.0
    %3888 = vmatpush2.msra.mxu0 0.0
    %3889 = vmatprep.subr.mxu0 0.0
    %3890 = vmatpush2.msra.mxu0 0.0
    %3891 = vmatprep.subr.mxu0 0.0
    %3892 = vmatpush2.msra.mxu0 0.0
    %3893 = vmatprep.subr.mxu0 0.0
    %3894 = vmatpush2.msra.mxu0 0.0
    %3895 = vmatprep.mubr.f32.mxu0 0.0
    %3896 = vmatmul.mubr.f32.gmra.mxu0 %v3829
    %v3897 = vpop.f32.mrf.mxu0
    %v3898 = vadd.f32 0.0, %v3897
    %v3899 = vpop.f32.mrf.mxu0
    %3900 = vdwg.mxu0
    %v3902 = vsel %vm453, %v3821, 0
    %3904 = vmatprep.subr.mxu0 0.0
    %3905 = vmatpush1.msra.mxu0 0.0
    %3906 = vmatprep.subr.mxu0 0.0
    %3907 = vmatpush1.msra.mxu0 0.0
    %3908 = vmatprep.subr.mxu0 0.0
    %3909 = vmatpush1.msra.mxu0 0.0
    %3910 = vmatprep.subr.mxu0 0.0
    %3911 = vmatpush1.msra.mxu0 0.0
    %3912 = vmatprep.subr.mxu0 0.0
    %3913 = vmatpush1.msra.mxu0 0.0
    %3914 = vmatprep.subr.mxu0 0.0
    %3915 = vmatpush1.msra.mxu0 0.0
    %3916 = vmatprep.subr.mxu0 0.0
    %3917 = vmatpush1.msra.mxu0 0.0
    %3918 = vmatprep.subr.mxu0 0.0
    %3919 = vmatpush1.msra.mxu0 0.0
    %3920 = vmatprep.subr.mxu0 0.0
    %3921 = vmatpush1.msra.mxu0 0.0
    %3922 = vmatprep.subr.mxu0 0.0
    %3923 = vmatpush1.msra.mxu0 0.0
    %3924 = vmatprep.subr.mxu0 0.0
    %3925 = vmatpush1.msra.mxu0 0.0
    %3926 = vmatprep.subr.mxu0 0.0
    %3927 = vmatpush1.msra.mxu0 0.0
    %3928 = vmatprep.subr.mxu0 0.0
    %3929 = vmatpush1.msra.mxu0 0.0
    %3930 = vmatprep.subr.mxu0 0.0
    %3931 = vmatpush1.msra.mxu0 0.0
    %3932 = vmatprep.subr.mxu0 0.0
    %3933 = vmatpush1.msra.mxu0 0.0
    %3934 = vmatprep.subr.mxu0 0.0
    %3935 = vmatpush1.msra.mxu0 %v3655
    %3936 = vmatprep.subr.mxu0 0.0
    %3937 = vmatpush2.msra.mxu0 0.0
    %3938 = vmatprep.subr.mxu0 0.0
    %3939 = vmatpush2.msra.mxu0 0.0
    %3940 = vmatprep.subr.mxu0 0.0
    %3941 = vmatpush2.msra.mxu0 0.0
    %3942 = vmatprep.subr.mxu0 0.0
    %3943 = vmatpush2.msra.mxu0 0.0
    %3944 = vmatprep.subr.mxu0 0.0
    %3945 = vmatpush2.msra.mxu0 0.0
    %3946 = vmatprep.subr.mxu0 0.0
    %3947 = vmatpush2.msra.mxu0 0.0
    %3948 = vmatprep.subr.mxu0 0.0
    %3949 = vmatpush2.msra.mxu0 0.0
    %3950 = vmatprep.subr.mxu0 0.0
    %3951 = vmatpush2.msra.mxu0 0.0
    %3952 = vmatprep.subr.mxu0 0.0
    %3953 = vmatpush2.msra.mxu0 0.0
    %3954 = vmatprep.subr.mxu0 0.0
    %3955 = vmatpush2.msra.mxu0 0.0
    %3956 = vmatprep.subr.mxu0 0.0
    %3957 = vmatpush2.msra.mxu0 0.0
    %3958 = vmatprep.subr.mxu0 0.0
    %3959 = vmatpush2.msra.mxu0 0.0
    %3960 = vmatprep.subr.mxu0 0.0
    %3961 = vmatpush2.msra.mxu0 0.0
    %3962 = vmatprep.subr.mxu0 0.0
    %3963 = vmatpush2.msra.mxu0 0.0
    %3964 = vmatprep.subr.mxu0 0.0
    %3965 = vmatpush2.msra.mxu0 0.0
    %3966 = vmatprep.subr.mxu0 0.0
    %3967 = vmatpush2.msra.mxu0 0.0
    %3968 = vmatprep.mubr.f32.mxu0 0.0
    %3969 = vmatmul.mubr.f32.gmra.mxu0 %v3902
    %v3970 = vpop.f32.mrf.mxu0
    %v3971 = vadd.f32 0.0, %v3970
    %v3972 = vpop.f32.mrf.mxu0
    %3973 = vdwg.mxu0
    %v3974 = vrcp.pop %v3824
    %v3975 = vmul.f32 %v3898, %v3974
    %v3976 = vrcp.pop %v3827
    %v3977 = vmul.f32 %v3971, %v3976
    %s3978 = scalar_lea.vmem %s7, 20
    %v3979 = vld [vmem:[%s3978] sm:$0xf]
    %v3981 = vsel %vm300, %v3975, 0
    %v3984 = vsel %vm300, %v3977, 0
    %v3987 = vsel %vm1215, %v3979, 0
    %3989 = vmatprep.subr.mxu0 0.0
    %3990 = vmatpush1.msra.mxu0 0.0
    %3991 = vmatprep.subr.mxu0 0.0
    %3992 = vmatpush1.msra.mxu0 0.0
    %3993 = vmatprep.subr.mxu0 0.0
    %3994 = vmatpush1.msra.mxu0 0.0
    %3995 = vmatprep.subr.mxu0 0.0
    %3996 = vmatpush1.msra.mxu0 0.0
    %3997 = vmatprep.subr.mxu0 0.0
    %3998 = vmatpush1.msra.mxu0 0.0
    %3999 = vmatprep.subr.mxu0 0.0
    %4000 = vmatpush1.msra.mxu0 0.0
    %4001 = vmatprep.subr.mxu0 0.0
    %4002 = vmatpush1.msra.mxu0 0.0
    %4003 = vmatprep.subr.mxu0 0.0
    %4004 = vmatpush1.msra.mxu0 0.0
    %4005 = vmatprep.subr.mxu0 0.0
    %4006 = vmatpush1.msra.mxu0 0.0
    %4007 = vmatprep.subr.mxu0 0.0
    %4008 = vmatpush1.msra.mxu0 0.0
    %4009 = vmatprep.subr.mxu0 0.0
    %4010 = vmatpush1.msra.mxu0 0.0
    %4011 = vmatprep.subr.mxu0 0.0
    %4012 = vmatpush1.msra.mxu0 0.0
    %4013 = vmatprep.subr.mxu0 0.0
    %4014 = vmatpush1.msra.mxu0 0.0
    %4015 = vmatprep.subr.mxu0 0.0
    %4016 = vmatpush1.msra.mxu0 0.0
    %4017 = vmatprep.subr.mxu0 0.0
    %4018 = vmatpush1.msra.mxu0 0.0
    %4019 = vmatprep.subr.mxu0 0.0
    %4020 = vmatpush1.msra.mxu0 %v3987
    %4021 = vmatprep.subr.mxu0 0.0
    %4022 = vmatpush2.msra.mxu0 0.0
    %4023 = vmatprep.subr.mxu0 0.0
    %4024 = vmatpush2.msra.mxu0 0.0
    %4025 = vmatprep.subr.mxu0 0.0
    %4026 = vmatpush2.msra.mxu0 0.0
    %4027 = vmatprep.subr.mxu0 0.0
    %4028 = vmatpush2.msra.mxu0 0.0
    %4029 = vmatprep.subr.mxu0 0.0
    %4030 = vmatpush2.msra.mxu0 0.0
    %4031 = vmatprep.subr.mxu0 0.0
    %4032 = vmatpush2.msra.mxu0 0.0
    %4033 = vmatprep.subr.mxu0 0.0
    %4034 = vmatpush2.msra.mxu0 0.0
    %4035 = vmatprep.subr.mxu0 0.0
    %4036 = vmatpush2.msra.mxu0 0.0
    %4037 = vmatprep.subr.mxu0 0.0
    %4038 = vmatpush2.msra.mxu0 0.0
    %4039 = vmatprep.subr.mxu0 0.0
    %4040 = vmatpush2.msra.mxu0 0.0
    %4041 = vmatprep.subr.mxu0 0.0
    %4042 = vmatpush2.msra.mxu0 0.0
    %4043 = vmatprep.subr.mxu0 0.0
    %4044 = vmatpush2.msra.mxu0 0.0
    %4045 = vmatprep.subr.mxu0 0.0
    %4046 = vmatpush2.msra.mxu0 0.0
    %4047 = vmatprep.subr.mxu0 0.0
    %4048 = vmatpush2.msra.mxu0 0.0
    %4049 = vmatprep.subr.mxu0 0.0
    %4050 = vmatpush2.msra.mxu0 0.0
    %4051 = vmatprep.subr.mxu0 0.0
    %4052 = vmatpush2.msra.mxu0 0.0
    %4053 = vmatprep.mubr.f32.mxu0 0.0
    %4054 = vmatmul.mubr.f32.gmra.mxu0 %v3981
    %v4055 = vpop.f32.mrf.mxu0
    %v4056 = vadd.f32 0.0, %v4055
    %v4057 = vpop.f32.mrf.mxu0
    %4058 = vmatprep.mubr.f32.mxu0 0.0
    %4059 = vmatmul.mubr.f32.gmra.mxu0 %v3984
    %v4060 = vpop.f32.mrf.mxu0
    %v4061 = vadd.f32 0.0, %v4060
    %v4062 = vpop.f32.mrf.mxu0
    %4063 = vdwg.mxu0
    %v4064 = vadd.f32 %v3392, %v4056
    %v4065 = vadd.f32 %v3393, %v4061
    %s4066 = scalar_lea.vmem %s1, 192
    %v4067 = vld [vmem:[%s4066] sm:$0xff]
    %v4068 = vld [vmem:[%s4066 + $0x8] sm:$0xff]
    %v4069 = vld [vmem:[%s4066 + $0x10] sm:$0xff]
    %v4070 = vld [vmem:[%s4066 + $0x18] sm:$0xff]
    %s4071 = scalar_lea.vmem %s4, 6
    %v4072 = vld [vmem:[%s4071] sm:$0x1]
    %v4074 = vlaneseq
    %v4075 = vshrl.u32 %v4074, 7
    %v4076 = vsub.s32 0, %v4075
    %v4077 = vrot.slane %v4072, %v4076
    %4079 = vmatprep.subr.mxu0 0.0
    %4080 = vmatpush1.msra.mxu0 0.0
    %4081 = vmatprep.subr.mxu0 0.0
    %4082 = vmatpush1.msra.mxu0 0.0
    %4083 = vmatprep.subr.mxu0 0.0
    %4084 = vmatpush1.msra.mxu0 0.0
    %4085 = vmatprep.subr.mxu0 0.0
    %4086 = vmatpush1.msra.mxu0 0.0
    %4087 = vmatprep.subr.mxu0 0.0
    %4088 = vmatpush1.msra.mxu0 0.0
    %4089 = vmatprep.subr.mxu0 0.0
    %4090 = vmatpush1.msra.mxu0 0.0
    %4091 = vmatprep.subr.mxu0 0.0
    %4092 = vmatpush1.msra.mxu0 0.0
    %4093 = vmatprep.subr.mxu0 0.0
    %4094 = vmatpush1.msra.mxu0 0.0
    %4095 = vmatprep.subr.mxu0 0.0
    %4096 = vmatpush1.msra.mxu0 0.0
    %4097 = vmatprep.subr.mxu0 0.0
    %4098 = vmatpush1.msra.mxu0 0.0
    %4099 = vmatprep.subr.mxu0 0.0
    %4100 = vmatpush1.msra.mxu0 0.0
    %4101 = vmatprep.subr.mxu0 0.0
    %4102 = vmatpush1.msra.mxu0 0.0
    %4103 = vmatprep.subr.mxu0 0.0
    %4104 = vmatpush1.msra.mxu0 %v4070
    %4105 = vmatprep.subr.mxu0 0.0
    %4106 = vmatpush1.msra.mxu0 %v4069
    %4107 = vmatprep.subr.mxu0 0.0
    %4108 = vmatpush1.msra.mxu0 %v4068
    %4109 = vmatprep.subr.mxu0 0.0
    %4110 = vmatpush1.msra.mxu0 %v4067
    %4111 = vmatprep.subr.mxu0 0.0
    %4112 = vmatpush2.msra.mxu0 0.0
    %4113 = vmatprep.subr.mxu0 0.0
    %4114 = vmatpush2.msra.mxu0 0.0
    %4115 = vmatprep.subr.mxu0 0.0
    %4116 = vmatpush2.msra.mxu0 0.0
    %4117 = vmatprep.subr.mxu0 0.0
    %4118 = vmatpush2.msra.mxu0 0.0
    %4119 = vmatprep.subr.mxu0 0.0
    %4120 = vmatpush2.msra.mxu0 0.0
    %4121 = vmatprep.subr.mxu0 0.0
    %4122 = vmatpush2.msra.mxu0 0.0
    %4123 = vmatprep.subr.mxu0 0.0
    %4124 = vmatpush2.msra.mxu0 0.0
    %4125 = vmatprep.subr.mxu0 0.0
    %4126 = vmatpush2.msra.mxu0 0.0
    %4127 = vmatprep.subr.mxu0 0.0
    %4128 = vmatpush2.msra.mxu0 0.0
    %4129 = vmatprep.subr.mxu0 0.0
    %4130 = vmatpush2.msra.mxu0 0.0
    %4131 = vmatprep.subr.mxu0 0.0
    %4132 = vmatpush2.msra.mxu0 0.0
    %4133 = vmatprep.subr.mxu0 0.0
    %4134 = vmatpush2.msra.mxu0 0.0
    %4135 = vmatprep.subr.mxu0 0.0
    %4136 = vmatpush2.msra.mxu0 0.0
    %4137 = vmatprep.subr.mxu0 0.0
    %4138 = vmatpush2.msra.mxu0 0.0
    %4139 = vmatprep.subr.mxu0 0.0
    %4140 = vmatpush2.msra.mxu0 0.0
    %4141 = vmatprep.subr.mxu0 0.0
    %4142 = vmatpush2.msra.mxu0 0.0
    %4143 = vmatprep.mubr.f32.mxu0 0.0
    %4144 = vmatmul.mubr.f32.gmra.mxu0 %v48
    %v4145 = vpop.f32.mrf.mxu0
    %v4146 = vadd.f32 %v4077, %v4145
    %v4147 = vpop.f32.mrf.mxu0
    %4148 = vmatprep.mubr.f32.mxu0 0.0
    %4149 = vmatmul.mubr.f32.gmra.mxu0 %v51
    %v4150 = vpop.f32.mrf.mxu0
    %v4151 = vadd.f32 %v4077, %v4150
    %v4152 = vpop.f32.mrf.mxu0
    %4153 = vdwg.mxu0
    %s4154 = scalar_lea.vmem %s2, 192
    %v4155 = vld [vmem:[%s4154] sm:$0xff]
    %v4156 = vld [vmem:[%s4154 + $0x8] sm:$0xff]
    %v4157 = vld [vmem:[%s4154 + $0x10] sm:$0xff]
    %v4158 = vld [vmem:[%s4154 + $0x18] sm:$0xff]
    %s4159 = scalar_lea.vmem %s5, 6
    %v4160 = vld [vmem:[%s4159] sm:$0x1]
    %v4162 = vlaneseq
    %v4163 = vshrl.u32 %v4162, 7
    %v4164 = vsub.s32 0, %v4163
    %v4165 = vrot.slane %v4160, %v4164
    %4167 = vmatprep.subr.mxu0 0.0
    %4168 = vmatpush1.msra.mxu0 0.0
    %4169 = vmatprep.subr.mxu0 0.0
    %4170 = vmatpush1.msra.mxu0 0.0
    %4171 = vmatprep.subr.mxu0 0.0
    %4172 = vmatpush1.msra.mxu0 0.0
    %4173 = vmatprep.subr.mxu0 0.0
    %4174 = vmatpush1.msra.mxu0 0.0
    %4175 = vmatprep.subr.mxu0 0.0
    %4176 = vmatpush1.msra.mxu0 0.0
    %4177 = vmatprep.subr.mxu0 0.0
    %4178 = vmatpush1.msra.mxu0 0.0
    %4179 = vmatprep.subr.mxu0 0.0
    %4180 = vmatpush1.msra.mxu0 0.0
    %4181 = vmatprep.subr.mxu0 0.0
    %4182 = vmatpush1.msra.mxu0 0.0
    %4183 = vmatprep.subr.mxu0 0.0
    %4184 = vmatpush1.msra.mxu0 0.0
    %4185 = vmatprep.subr.mxu0 0.0
    %4186 = vmatpush1.msra.mxu0 0.0
    %4187 = vmatprep.subr.mxu0 0.0
    %4188 = vmatpush1.msra.mxu0 0.0
    %4189 = vmatprep.subr.mxu0 0.0
    %4190 = vmatpush1.msra.mxu0 0.0
    %4191 = vmatprep.subr.mxu0 0.0
    %4192 = vmatpush1.msra.mxu0 %v4158
    %4193 = vmatprep.subr.mxu0 0.0
    %4194 = vmatpush1.msra.mxu0 %v4157
    %4195 = vmatprep.subr.mxu0 0.0
    %4196 = vmatpush1.msra.mxu0 %v4156
    %4197 = vmatprep.subr.mxu0 0.0
    %4198 = vmatpush1.msra.mxu0 %v4155
    %4199 = vmatprep.subr.mxu0 0.0
    %4200 = vmatpush2.msra.mxu0 0.0
    %4201 = vmatprep.subr.mxu0 0.0
    %4202 = vmatpush2.msra.mxu0 0.0
    %4203 = vmatprep.subr.mxu0 0.0
    %4204 = vmatpush2.msra.mxu0 0.0
    %4205 = vmatprep.subr.mxu0 0.0
    %4206 = vmatpush2.msra.mxu0 0.0
    %4207 = vmatprep.subr.mxu0 0.0
    %4208 = vmatpush2.msra.mxu0 0.0
    %4209 = vmatprep.subr.mxu0 0.0
    %4210 = vmatpush2.msra.mxu0 0.0
    %4211 = vmatprep.subr.mxu0 0.0
    %4212 = vmatpush2.msra.mxu0 0.0
    %4213 = vmatprep.subr.mxu0 0.0
    %4214 = vmatpush2.msra.mxu0 0.0
    %4215 = vmatprep.subr.mxu0 0.0
    %4216 = vmatpush2.msra.mxu0 0.0
    %4217 = vmatprep.subr.mxu0 0.0
    %4218 = vmatpush2.msra.mxu0 0.0
    %4219 = vmatprep.subr.mxu0 0.0
    %4220 = vmatpush2.msra.mxu0 0.0
    %4221 = vmatprep.subr.mxu0 0.0
    %4222 = vmatpush2.msra.mxu0 0.0
    %4223 = vmatprep.subr.mxu0 0.0
    %4224 = vmatpush2.msra.mxu0 0.0
    %4225 = vmatprep.subr.mxu0 0.0
    %4226 = vmatpush2.msra.mxu0 0.0
    %4227 = vmatprep.subr.mxu0 0.0
    %4228 = vmatpush2.msra.mxu0 0.0
    %4229 = vmatprep.subr.mxu0 0.0
    %4230 = vmatpush2.msra.mxu0 0.0
    %4231 = vmatprep.mubr.f32.mxu0 0.0
    %4232 = vmatmul.mubr.f32.gmra.mxu0 %v48
    %v4233 = vpop.f32.mrf.mxu0
    %v4234 = vadd.f32 %v4165, %v4233
    %v4235 = vpop.f32.mrf.mxu0
    %4236 = vmatprep.mubr.f32.mxu0 0.0
    %4237 = vmatmul.mubr.f32.gmra.mxu0 %v51
    %v4238 = vpop.f32.mrf.mxu0
    %v4239 = vadd.f32 %v4165, %v4238
    %v4240 = vpop.f32.mrf.mxu0
    %4241 = vdwg.mxu0
    %s4242 = scalar_lea.vmem %s3, 192
    %v4243 = vld [vmem:[%s4242] sm:$0xff]
    %v4244 = vld [vmem:[%s4242 + $0x8] sm:$0xff]
    %v4245 = vld [vmem:[%s4242 + $0x10] sm:$0xff]
    %v4246 = vld [vmem:[%s4242 + $0x18] sm:$0xff]
    %s4247 = scalar_lea.vmem %s6, 6
    %v4248 = vld [vmem:[%s4247] sm:$0x1]
    %v4250 = vlaneseq
    %v4251 = vshrl.u32 %v4250, 7
    %v4252 = vsub.s32 0, %v4251
    %v4253 = vrot.slane %v4248, %v4252
    %4255 = vmatprep.subr.mxu0 0.0
    %4256 = vmatpush1.msra.mxu0 0.0
    %4257 = vmatprep.subr.mxu0 0.0
    %4258 = vmatpush1.msra.mxu0 0.0
    %4259 = vmatprep.subr.mxu0 0.0
    %4260 = vmatpush1.msra.mxu0 0.0
    %4261 = vmatprep.subr.mxu0 0.0
    %4262 = vmatpush1.msra.mxu0 0.0
    %4263 = vmatprep.subr.mxu0 0.0
    %4264 = vmatpush1.msra.mxu0 0.0
    %4265 = vmatprep.subr.mxu0 0.0
    %4266 = vmatpush1.msra.mxu0 0.0
    %4267 = vmatprep.subr.mxu0 0.0
    %4268 = vmatpush1.msra.mxu0 0.0
    %4269 = vmatprep.subr.mxu0 0.0
    %4270 = vmatpush1.msra.mxu0 0.0
    %4271 = vmatprep.subr.mxu0 0.0
    %4272 = vmatpush1.msra.mxu0 0.0
    %4273 = vmatprep.subr.mxu0 0.0
    %4274 = vmatpush1.msra.mxu0 0.0
    %4275 = vmatprep.subr.mxu0 0.0
    %4276 = vmatpush1.msra.mxu0 0.0
    %4277 = vmatprep.subr.mxu0 0.0
    %4278 = vmatpush1.msra.mxu0 0.0
    %4279 = vmatprep.subr.mxu0 0.0
    %4280 = vmatpush1.msra.mxu0 %v4246
    %4281 = vmatprep.subr.mxu0 0.0
    %4282 = vmatpush1.msra.mxu0 %v4245
    %4283 = vmatprep.subr.mxu0 0.0
    %4284 = vmatpush1.msra.mxu0 %v4244
    %4285 = vmatprep.subr.mxu0 0.0
    %4286 = vmatpush1.msra.mxu0 %v4243
    %4287 = vmatprep.subr.mxu0 0.0
    %4288 = vmatpush2.msra.mxu0 0.0
    %4289 = vmatprep.subr.mxu0 0.0
    %4290 = vmatpush2.msra.mxu0 0.0
    %4291 = vmatprep.subr.mxu0 0.0
    %4292 = vmatpush2.msra.mxu0 0.0
    %4293 = vmatprep.subr.mxu0 0.0
    %4294 = vmatpush2.msra.mxu0 0.0
    %4295 = vmatprep.subr.mxu0 0.0
    %4296 = vmatpush2.msra.mxu0 0.0
    %4297 = vmatprep.subr.mxu0 0.0
    %4298 = vmatpush2.msra.mxu0 0.0
    %4299 = vmatprep.subr.mxu0 0.0
    %4300 = vmatpush2.msra.mxu0 0.0
    %4301 = vmatprep.subr.mxu0 0.0
    %4302 = vmatpush2.msra.mxu0 0.0
    %4303 = vmatprep.subr.mxu0 0.0
    %4304 = vmatpush2.msra.mxu0 0.0
    %4305 = vmatprep.subr.mxu0 0.0
    %4306 = vmatpush2.msra.mxu0 0.0
    %4307 = vmatprep.subr.mxu0 0.0
    %4308 = vmatpush2.msra.mxu0 0.0
    %4309 = vmatprep.subr.mxu0 0.0
    %4310 = vmatpush2.msra.mxu0 0.0
    %4311 = vmatprep.subr.mxu0 0.0
    %4312 = vmatpush2.msra.mxu0 0.0
    %4313 = vmatprep.subr.mxu0 0.0
    %4314 = vmatpush2.msra.mxu0 0.0
    %4315 = vmatprep.subr.mxu0 0.0
    %4316 = vmatpush2.msra.mxu0 0.0
    %4317 = vmatprep.subr.mxu0 0.0
    %4318 = vmatpush2.msra.mxu0 0.0
    %4319 = vmatprep.mubr.f32.mxu0 0.0
    %4320 = vmatmul.mubr.f32.gmra.mxu0 %v48
    %v4321 = vpop.f32.mrf.mxu0
    %v4322 = vadd.f32 %v4253, %v4321
    %v4323 = vpop.f32.mrf.mxu0
    %4324 = vmatprep.mubr.f32.mxu0 0.0
    %4325 = vmatmul.mubr.f32.gmra.mxu0 %v51
    %v4326 = vpop.f32.mrf.mxu0
    %v4327 = vadd.f32 %v4253, %v4326
    %v4328 = vpop.f32.mrf.mxu0
    %4329 = vdwg.mxu0
    %v4331 = vsel %vm300, %v4146, 0
    %v4334 = vsel %vm300, %v4234, 0
    %4336 = vmatprep.subr.mxu0 0.0
    %4337 = vmatpush1.xpose.msra.mxu0 0.0
    %4338 = vmatprep.subr.mxu0 0.0
    %4339 = vmatpush1.xpose.msra.mxu0 0.0
    %4340 = vmatprep.subr.mxu0 0.0
    %4341 = vmatpush1.xpose.msra.mxu0 0.0
    %4342 = vmatprep.subr.mxu0 0.0
    %4343 = vmatpush1.xpose.msra.mxu0 0.0
    %4344 = vmatprep.subr.mxu0 0.0
    %4345 = vmatpush1.xpose.msra.mxu0 0.0
    %4346 = vmatprep.subr.mxu0 0.0
    %4347 = vmatpush1.xpose.msra.mxu0 0.0
    %4348 = vmatprep.subr.mxu0 0.0
    %4349 = vmatpush1.xpose.msra.mxu0 0.0
    %4350 = vmatprep.subr.mxu0 0.0
    %4351 = vmatpush1.xpose.msra.mxu0 0.0
    %4352 = vmatprep.subr.mxu0 0.0
    %4353 = vmatpush1.xpose.msra.mxu0 0.0
    %4354 = vmatprep.subr.mxu0 0.0
    %4355 = vmatpush1.xpose.msra.mxu0 0.0
    %4356 = vmatprep.subr.mxu0 0.0
    %4357 = vmatpush1.xpose.msra.mxu0 0.0
    %4358 = vmatprep.subr.mxu0 0.0
    %4359 = vmatpush1.xpose.msra.mxu0 0.0
    %4360 = vmatprep.subr.mxu0 0.0
    %4361 = vmatpush1.xpose.msra.mxu0 0.0
    %4362 = vmatprep.subr.mxu0 0.0
    %4363 = vmatpush1.xpose.msra.mxu0 0.0
    %4364 = vmatprep.subr.mxu0 0.0
    %4365 = vmatpush1.xpose.msra.mxu0 0.0
    %4366 = vmatprep.subr.mxu0 0.0
    %4367 = vmatpush1.xpose.msra.mxu0 %v4334
    %4368 = vmatprep.subr.mxu0 0.0
    %4369 = vmatpush2.xpose.msra.mxu0 0.0
    %4370 = vmatprep.subr.mxu0 0.0
    %4371 = vmatpush2.xpose.msra.mxu0 0.0
    %4372 = vmatprep.subr.mxu0 0.0
    %4373 = vmatpush2.xpose.msra.mxu0 0.0
    %4374 = vmatprep.subr.mxu0 0.0
    %4375 = vmatpush2.xpose.msra.mxu0 0.0
    %4376 = vmatprep.subr.mxu0 0.0
    %4377 = vmatpush2.xpose.msra.mxu0 0.0
    %4378 = vmatprep.subr.mxu0 0.0
    %4379 = vmatpush2.xpose.msra.mxu0 0.0
    %4380 = vmatprep.subr.mxu0 0.0
    %4381 = vmatpush2.xpose.msra.mxu0 0.0
    %4382 = vmatprep.subr.mxu0 0.0
    %4383 = vmatpush2.xpose.msra.mxu0 0.0
    %4384 = vmatprep.subr.mxu0 0.0
    %4385 = vmatpush2.xpose.msra.mxu0 0.0
    %4386 = vmatprep.subr.mxu0 0.0
    %4387 = vmatpush2.xpose.msra.mxu0 0.0
    %4388 = vmatprep.subr.mxu0 0.0
    %4389 = vmatpush2.xpose.msra.mxu0 0.0
    %4390 = vmatprep.subr.mxu0 0.0
    %4391 = vmatpush2.xpose.msra.mxu0 0.0
    %4392 = vmatprep.subr.mxu0 0.0
    %4393 = vmatpush2.xpose.msra.mxu0 0.0
    %4394 = vmatprep.subr.mxu0 0.0
    %4395 = vmatpush2.xpose.msra.mxu0 0.0
    %4396 = vmatprep.subr.mxu0 0.0
    %4397 = vmatpush2.xpose.msra.mxu0 0.0
    %4398 = vmatprep.subr.mxu0 0.0
    %4399 = vmatpush2.xpose.msra.mxu0 0.0
    %4400 = vmatprep.mubr.f32.mxu0 0.0
    %4401 = vmatmul.mubr.f32.gmra.mxu0 %v4331
    %v4402 = vpop.f32.mrf.mxu0
    %v4403 = vadd.f32 0.0, %v4402
    %v4404 = vpop.f32.mrf.mxu0
    %4405 = vdwg.mxu0
    %v4407 = vsel %vm300, %v4151, 0
    %v4410 = vsel %vm300, %v4239, 0
    %4412 = vmatprep.subr.mxu0 0.0
    %4413 = vmatpush1.xpose.msra.mxu0 0.0
    %4414 = vmatprep.subr.mxu0 0.0
    %4415 = vmatpush1.xpose.msra.mxu0 0.0
    %4416 = vmatprep.subr.mxu0 0.0
    %4417 = vmatpush1.xpose.msra.mxu0 0.0
    %4418 = vmatprep.subr.mxu0 0.0
    %4419 = vmatpush1.xpose.msra.mxu0 0.0
    %4420 = vmatprep.subr.mxu0 0.0
    %4421 = vmatpush1.xpose.msra.mxu0 0.0
    %4422 = vmatprep.subr.mxu0 0.0
    %4423 = vmatpush1.xpose.msra.mxu0 0.0
    %4424 = vmatprep.subr.mxu0 0.0
    %4425 = vmatpush1.xpose.msra.mxu0 0.0
    %4426 = vmatprep.subr.mxu0 0.0
    %4427 = vmatpush1.xpose.msra.mxu0 0.0
    %4428 = vmatprep.subr.mxu0 0.0
    %4429 = vmatpush1.xpose.msra.mxu0 0.0
    %4430 = vmatprep.subr.mxu0 0.0
    %4431 = vmatpush1.xpose.msra.mxu0 0.0
    %4432 = vmatprep.subr.mxu0 0.0
    %4433 = vmatpush1.xpose.msra.mxu0 0.0
    %4434 = vmatprep.subr.mxu0 0.0
    %4435 = vmatpush1.xpose.msra.mxu0 0.0
    %4436 = vmatprep.subr.mxu0 0.0
    %4437 = vmatpush1.xpose.msra.mxu0 0.0
    %4438 = vmatprep.subr.mxu0 0.0
    %4439 = vmatpush1.xpose.msra.mxu0 0.0
    %4440 = vmatprep.subr.mxu0 0.0
    %4441 = vmatpush1.xpose.msra.mxu0 0.0
    %4442 = vmatprep.subr.mxu0 0.0
    %4443 = vmatpush1.xpose.msra.mxu0 %v4410
    %4444 = vmatprep.subr.mxu0 0.0
    %4445 = vmatpush2.xpose.msra.mxu0 0.0
    %4446 = vmatprep.subr.mxu0 0.0
    %4447 = vmatpush2.xpose.msra.mxu0 0.0
    %4448 = vmatprep.subr.mxu0 0.0
    %4449 = vmatpush2.xpose.msra.mxu0 0.0
    %4450 = vmatprep.subr.mxu0 0.0
    %4451 = vmatpush2.xpose.msra.mxu0 0.0
    %4452 = vmatprep.subr.mxu0 0.0
    %4453 = vmatpush2.xpose.msra.mxu0 0.0
    %4454 = vmatprep.subr.mxu0 0.0
    %4455 = vmatpush2.xpose.msra.mxu0 0.0
    %4456 = vmatprep.subr.mxu0 0.0
    %4457 = vmatpush2.xpose.msra.mxu0 0.0
    %4458 = vmatprep.subr.mxu0 0.0
    %4459 = vmatpush2.xpose.msra.mxu0 0.0
    %4460 = vmatprep.subr.mxu0 0.0
    %4461 = vmatpush2.xpose.msra.mxu0 0.0
    %4462 = vmatprep.subr.mxu0 0.0
    %4463 = vmatpush2.xpose.msra.mxu0 0.0
    %4464 = vmatprep.subr.mxu0 0.0
    %4465 = vmatpush2.xpose.msra.mxu0 0.0
    %4466 = vmatprep.subr.mxu0 0.0
    %4467 = vmatpush2.xpose.msra.mxu0 0.0
    %4468 = vmatprep.subr.mxu0 0.0
    %4469 = vmatpush2.xpose.msra.mxu0 0.0
    %4470 = vmatprep.subr.mxu0 0.0
    %4471 = vmatpush2.xpose.msra.mxu0 0.0
    %4472 = vmatprep.subr.mxu0 0.0
    %4473 = vmatpush2.xpose.msra.mxu0 0.0
    %4474 = vmatprep.subr.mxu0 0.0
    %4475 = vmatpush2.xpose.msra.mxu0 0.0
    %4476 = vmatprep.mubr.f32.mxu0 0.0
    %4477 = vmatmul.mubr.f32.gmra.mxu0 %v4407
    %v4478 = vpop.f32.mrf.mxu0
    %v4479 = vadd.f32 0.0, %v4478
    %v4480 = vpop.f32.mrf.mxu0
    %4481 = vdwg.mxu0
    %v4482 = vsel %vm453, %v4403, -inf
    %4483 = vmax.xlane.f32.xlu0 %v4482
    %v4484 = vpop.xlane.xlu0 %4483
    %v4485 = vsel %vm453, %v4479, -inf
    %4486 = vmax.xlane.f32.xlu0 %v4485
    %v4487 = vpop.xlane.xlu0 %4486
    %v4488 = vsub.f32 %v4403, %v4484
    %v4489 = vsub.f32 %v4479, %v4487
    %v4490 = vmul.f32 %v4488, 1.442695
    %v4491 = vpow.pop %v4490
    %v4492 = vmul.f32 %v4489, 1.442695
    %v4493 = vpow.pop %v4492
    %v4494 = vsel %vm453, %v4491, 0.0
    %4495 = vadd.xlane.f32.xlu0 %v4494
    %v4496 = vpop.xlane.xlu0 %4495
    %v4497 = vsel %vm453, %v4493, 0.0
    %4498 = vadd.xlane.f32.xlu0 %v4497
    %v4499 = vpop.xlane.xlu0 %4498
    %v4501 = vsel %vm453, %v4491, 0
    %4503 = vmatprep.subr.mxu0 0.0
    %4504 = vmatpush1.msra.mxu0 0.0
    %4505 = vmatprep.subr.mxu0 0.0
    %4506 = vmatpush1.msra.mxu0 0.0
    %4507 = vmatprep.subr.mxu0 0.0
    %4508 = vmatpush1.msra.mxu0 0.0
    %4509 = vmatprep.subr.mxu0 0.0
    %4510 = vmatpush1.msra.mxu0 0.0
    %4511 = vmatprep.subr.mxu0 0.0
    %4512 = vmatpush1.msra.mxu0 0.0
    %4513 = vmatprep.subr.mxu0 0.0
    %4514 = vmatpush1.msra.mxu0 0.0
    %4515 = vmatprep.subr.mxu0 0.0
    %4516 = vmatpush1.msra.mxu0 0.0
    %4517 = vmatprep.subr.mxu0 0.0
    %4518 = vmatpush1.msra.mxu0 0.0
    %4519 = vmatprep.subr.mxu0 0.0
    %4520 = vmatpush1.msra.mxu0 0.0
    %4521 = vmatprep.subr.mxu0 0.0
    %4522 = vmatpush1.msra.mxu0 0.0
    %4523 = vmatprep.subr.mxu0 0.0
    %4524 = vmatpush1.msra.mxu0 0.0
    %4525 = vmatprep.subr.mxu0 0.0
    %4526 = vmatpush1.msra.mxu0 0.0
    %4527 = vmatprep.subr.mxu0 0.0
    %4528 = vmatpush1.msra.mxu0 0.0
    %4529 = vmatprep.subr.mxu0 0.0
    %4530 = vmatpush1.msra.mxu0 0.0
    %4531 = vmatprep.subr.mxu0 0.0
    %4532 = vmatpush1.msra.mxu0 0.0
    %4533 = vmatprep.subr.mxu0 0.0
    %4534 = vmatpush1.msra.mxu0 %v4322
    %4535 = vmatprep.subr.mxu0 0.0
    %4536 = vmatpush2.msra.mxu0 0.0
    %4537 = vmatprep.subr.mxu0 0.0
    %4538 = vmatpush2.msra.mxu0 0.0
    %4539 = vmatprep.subr.mxu0 0.0
    %4540 = vmatpush2.msra.mxu0 0.0
    %4541 = vmatprep.subr.mxu0 0.0
    %4542 = vmatpush2.msra.mxu0 0.0
    %4543 = vmatprep.subr.mxu0 0.0
    %4544 = vmatpush2.msra.mxu0 0.0
    %4545 = vmatprep.subr.mxu0 0.0
    %4546 = vmatpush2.msra.mxu0 0.0
    %4547 = vmatprep.subr.mxu0 0.0
    %4548 = vmatpush2.msra.mxu0 0.0
    %4549 = vmatprep.subr.mxu0 0.0
    %4550 = vmatpush2.msra.mxu0 0.0
    %4551 = vmatprep.subr.mxu0 0.0
    %4552 = vmatpush2.msra.mxu0 0.0
    %4553 = vmatprep.subr.mxu0 0.0
    %4554 = vmatpush2.msra.mxu0 0.0
    %4555 = vmatprep.subr.mxu0 0.0
    %4556 = vmatpush2.msra.mxu0 0.0
    %4557 = vmatprep.subr.mxu0 0.0
    %4558 = vmatpush2.msra.mxu0 0.0
    %4559 = vmatprep.subr.mxu0 0.0
    %4560 = vmatpush2.msra.mxu0 0.0
    %4561 = vmatprep.subr.mxu0 0.0
    %4562 = vmatpush2.msra.mxu0 0.0
    %4563 = vmatprep.subr.mxu0 0.0
    %4564 = vmatpush2.msra.mxu0 0.0
    %4565 = vmatprep.subr.mxu0 0.0
    %4566 = vmatpush2.msra.mxu0 0.0
    %4567 = vmatprep.mubr.f32.mxu0 0.0
    %4568 = vmatmul.mubr.f32.gmra.mxu0 %v4501
    %v4569 = vpop.f32.mrf.mxu0
    %v4570 = vadd.f32 0.0, %v4569
    %v4571 = vpop.f32.mrf.mxu0
    %4572 = vdwg.mxu0
    %v4574 = vsel %vm453, %v4493, 0
    %4576 = vmatprep.subr.mxu0 0.0
    %4577 = vmatpush1.msra.mxu0 0.0
    %4578 = vmatprep.subr.mxu0 0.0
    %4579 = vmatpush1.msra.mxu0 0.0
    %4580 = vmatprep.subr.mxu0 0.0
    %4581 = vmatpush1.msra.mxu0 0.0
    %4582 = vmatprep.subr.mxu0 0.0
    %4583 = vmatpush1.msra.mxu0 0.0
    %4584 = vmatprep.subr.mxu0 0.0
    %4585 = vmatpush1.msra.mxu0 0.0
    %4586 = vmatprep.subr.mxu0 0.0
    %4587 = vmatpush1.msra.mxu0 0.0
    %4588 = vmatprep.subr.mxu0 0.0
    %4589 = vmatpush1.msra.mxu0 0.0
    %4590 = vmatprep.subr.mxu0 0.0
    %4591 = vmatpush1.msra.mxu0 0.0
    %4592 = vmatprep.subr.mxu0 0.0
    %4593 = vmatpush1.msra.mxu0 0.0
    %4594 = vmatprep.subr.mxu0 0.0
    %4595 = vmatpush1.msra.mxu0 0.0
    %4596 = vmatprep.subr.mxu0 0.0
    %4597 = vmatpush1.msra.mxu0 0.0
    %4598 = vmatprep.subr.mxu0 0.0
    %4599 = vmatpush1.msra.mxu0 0.0
    %4600 = vmatprep.subr.mxu0 0.0
    %4601 = vmatpush1.msra.mxu0 0.0
    %4602 = vmatprep.subr.mxu0 0.0
    %4603 = vmatpush1.msra.mxu0 0.0
    %4604 = vmatprep.subr.mxu0 0.0
    %4605 = vmatpush1.msra.mxu0 0.0
    %4606 = vmatprep.subr.mxu0 0.0
    %4607 = vmatpush1.msra.mxu0 %v4327
    %4608 = vmatprep.subr.mxu0 0.0
    %4609 = vmatpush2.msra.mxu0 0.0
    %4610 = vmatprep.subr.mxu0 0.0
    %4611 = vmatpush2.msra.mxu0 0.0
    %4612 = vmatprep.subr.mxu0 0.0
    %4613 = vmatpush2.msra.mxu0 0.0
    %4614 = vmatprep.subr.mxu0 0.0
    %4615 = vmatpush2.msra.mxu0 0.0
    %4616 = vmatprep.subr.mxu0 0.0
    %4617 = vmatpush2.msra.mxu0 0.0
    %4618 = vmatprep.subr.mxu0 0.0
    %4619 = vmatpush2.msra.mxu0 0.0
    %4620 = vmatprep.subr.mxu0 0.0
    %4621 = vmatpush2.msra.mxu0 0.0
    %4622 = vmatprep.subr.mxu0 0.0
    %4623 = vmatpush2.msra.mxu0 0.0
    %4624 = vmatprep.subr.mxu0 0.0
    %4625 = vmatpush2.msra.mxu0 0.0
    %4626 = vmatprep.subr.mxu0 0.0
    %4627 = vmatpush2.msra.mxu0 0.0
    %4628 = vmatprep.subr.mxu0 0.0
    %4629 = vmatpush2.msra.mxu0 0.0
    %4630 = vmatprep.subr.mxu0 0.0
    %4631 = vmatpush2.msra.mxu0 0.0
    %4632 = vmatprep.subr.mxu0 0.0
    %4633 = vmatpush2.msra.mxu0 0.0
    %4634 = vmatprep.subr.mxu0 0.0
    %4635 = vmatpush2.msra.mxu0 0.0
    %4636 = vmatprep.subr.mxu0 0.0
    %4637 = vmatpush2.msra.mxu0 0.0
    %4638 = vmatprep.subr.mxu0 0.0
    %4639 = vmatpush2.msra.mxu0 0.0
    %4640 = vmatprep.mubr.f32.mxu0 0.0
    %4641 = vmatmul.mubr.f32.gmra.mxu0 %v4574
    %v4642 = vpop.f32.mrf.mxu0
    %v4643 = vadd.f32 0.0, %v4642
    %v4644 = vpop.f32.mrf.mxu0
    %4645 = vdwg.mxu0
    %v4646 = vrcp.pop %v4496
    %v4647 = vmul.f32 %v4570, %v4646
    %v4648 = vrcp.pop %v4499
    %v4649 = vmul.f32 %v4643, %v4648
    %s4650 = scalar_lea.vmem %s7, 24
    %v4651 = vld [vmem:[%s4650] sm:$0xf]
    %v4653 = vsel %vm300, %v4647, 0
    %v4656 = vsel %vm300, %v4649, 0
    %v4659 = vsel %vm1215, %v4651, 0
    %4661 = vmatprep.subr.mxu0 0.0
    %4662 = vmatpush1.msra.mxu0 0.0
    %4663 = vmatprep.subr.mxu0 0.0
    %4664 = vmatpush1.msra.mxu0 0.0
    %4665 = vmatprep.subr.mxu0 0.0
    %4666 = vmatpush1.msra.mxu0 0.0
    %4667 = vmatprep.subr.mxu0 0.0
    %4668 = vmatpush1.msra.mxu0 0.0
    %4669 = vmatprep.subr.mxu0 0.0
    %4670 = vmatpush1.msra.mxu0 0.0
    %4671 = vmatprep.subr.mxu0 0.0
    %4672 = vmatpush1.msra.mxu0 0.0
    %4673 = vmatprep.subr.mxu0 0.0
    %4674 = vmatpush1.msra.mxu0 0.0
    %4675 = vmatprep.subr.mxu0 0.0
    %4676 = vmatpush1.msra.mxu0 0.0
    %4677 = vmatprep.subr.mxu0 0.0
    %4678 = vmatpush1.msra.mxu0 0.0
    %4679 = vmatprep.subr.mxu0 0.0
    %4680 = vmatpush1.msra.mxu0 0.0
    %4681 = vmatprep.subr.mxu0 0.0
    %4682 = vmatpush1.msra.mxu0 0.0
    %4683 = vmatprep.subr.mxu0 0.0
    %4684 = vmatpush1.msra.mxu0 0.0
    %4685 = vmatprep.subr.mxu0 0.0
    %4686 = vmatpush1.msra.mxu0 0.0
    %4687 = vmatprep.subr.mxu0 0.0
    %4688 = vmatpush1.msra.mxu0 0.0
    %4689 = vmatprep.subr.mxu0 0.0
    %4690 = vmatpush1.msra.mxu0 0.0
    %4691 = vmatprep.subr.mxu0 0.0
    %4692 = vmatpush1.msra.mxu0 %v4659
    %4693 = vmatprep.subr.mxu0 0.0
    %4694 = vmatpush2.msra.mxu0 0.0
    %4695 = vmatprep.subr.mxu0 0.0
    %4696 = vmatpush2.msra.mxu0 0.0
    %4697 = vmatprep.subr.mxu0 0.0
    %4698 = vmatpush2.msra.mxu0 0.0
    %4699 = vmatprep.subr.mxu0 0.0
    %4700 = vmatpush2.msra.mxu0 0.0
    %4701 = vmatprep.subr.mxu0 0.0
    %4702 = vmatpush2.msra.mxu0 0.0
    %4703 = vmatprep.subr.mxu0 0.0
    %4704 = vmatpush2.msra.mxu0 0.0
    %4705 = vmatprep.subr.mxu0 0.0
    %4706 = vmatpush2.msra.mxu0 0.0
    %4707 = vmatprep.subr.mxu0 0.0
    %4708 = vmatpush2.msra.mxu0 0.0
    %4709 = vmatprep.subr.mxu0 0.0
    %4710 = vmatpush2.msra.mxu0 0.0
    %4711 = vmatprep.subr.mxu0 0.0
    %4712 = vmatpush2.msra.mxu0 0.0
    %4713 = vmatprep.subr.mxu0 0.0
    %4714 = vmatpush2.msra.mxu0 0.0
    %4715 = vmatprep.subr.mxu0 0.0
    %4716 = vmatpush2.msra.mxu0 0.0
    %4717 = vmatprep.subr.mxu0 0.0
    %4718 = vmatpush2.msra.mxu0 0.0
    %4719 = vmatprep.subr.mxu0 0.0
    %4720 = vmatpush2.msra.mxu0 0.0
    %4721 = vmatprep.subr.mxu0 0.0
    %4722 = vmatpush2.msra.mxu0 0.0
    %4723 = vmatprep.subr.mxu0 0.0
    %4724 = vmatpush2.msra.mxu0 0.0
    %4725 = vmatprep.mubr.f32.mxu0 0.0
    %4726 = vmatmul.mubr.f32.gmra.mxu0 %v4653
    %v4727 = vpop.f32.mrf.mxu0
    %v4728 = vadd.f32 0.0, %v4727
    %v4729 = vpop.f32.mrf.mxu0
    %4730 = vmatprep.mubr.f32.mxu0 0.0
    %4731 = vmatmul.mubr.f32.gmra.mxu0 %v4656
    %v4732 = vpop.f32.mrf.mxu0
    %v4733 = vadd.f32 0.0, %v4732
    %v4734 = vpop.f32.mrf.mxu0
    %4735 = vdwg.mxu0
    %v4736 = vadd.f32 %v4064, %v4728
    %v4737 = vadd.f32 %v4065, %v4733
    %s4738 = scalar_lea.vmem %s1, 224
    %v4739 = vld [vmem:[%s4738] sm:$0xff]
    %v4740 = vld [vmem:[%s4738 + $0x8] sm:$0xff]
    %v4741 = vld [vmem:[%s4738 + $0x10] sm:$0xff]
    %v4742 = vld [vmem:[%s4738 + $0x18] sm:$0xff]
    %s4743 = scalar_lea.vmem %s4, 7
    %v4744 = vld [vmem:[%s4743] sm:$0x1]
    %v4746 = vlaneseq
    %v4747 = vshrl.u32 %v4746, 7
    %v4748 = vsub.s32 0, %v4747
    %v4749 = vrot.slane %v4744, %v4748
    %4751 = vmatprep.subr.mxu0 0.0
    %4752 = vmatpush1.msra.mxu0 0.0
    %4753 = vmatprep.subr.mxu0 0.0
    %4754 = vmatpush1.msra.mxu0 0.0
    %4755 = vmatprep.subr.mxu0 0.0
    %4756 = vmatpush1.msra.mxu0 0.0
    %4757 = vmatprep.subr.mxu0 0.0
    %4758 = vmatpush1.msra.mxu0 0.0
    %4759 = vmatprep.subr.mxu0 0.0
    %4760 = vmatpush1.msra.mxu0 0.0
    %4761 = vmatprep.subr.mxu0 0.0
    %4762 = vmatpush1.msra.mxu0 0.0
    %4763 = vmatprep.subr.mxu0 0.0
    %4764 = vmatpush1.msra.mxu0 0.0
    %4765 = vmatprep.subr.mxu0 0.0
    %4766 = vmatpush1.msra.mxu0 0.0
    %4767 = vmatprep.subr.mxu0 0.0
    %4768 = vmatpush1.msra.mxu0 0.0
    %4769 = vmatprep.subr.mxu0 0.0
    %4770 = vmatpush1.msra.mxu0 0.0
    %4771 = vmatprep.subr.mxu0 0.0
    %4772 = vmatpush1.msra.mxu0 0.0
    %4773 = vmatprep.subr.mxu0 0.0
    %4774 = vmatpush1.msra.mxu0 0.0
    %4775 = vmatprep.subr.mxu0 0.0
    %4776 = vmatpush1.msra.mxu0 %v4742
    %4777 = vmatprep.subr.mxu0 0.0
    %4778 = vmatpush1.msra.mxu0 %v4741
    %4779 = vmatprep.subr.mxu0 0.0
    %4780 = vmatpush1.msra.mxu0 %v4740
    %4781 = vmatprep.subr.mxu0 0.0
    %4782 = vmatpush1.msra.mxu0 %v4739
    %4783 = vmatprep.subr.mxu0 0.0
    %4784 = vmatpush2.msra.mxu0 0.0
    %4785 = vmatprep.subr.mxu0 0.0
    %4786 = vmatpush2.msra.mxu0 0.0
    %4787 = vmatprep.subr.mxu0 0.0
    %4788 = vmatpush2.msra.mxu0 0.0
    %4789 = vmatprep.subr.mxu0 0.0
    %4790 = vmatpush2.msra.mxu0 0.0
    %4791 = vmatprep.subr.mxu0 0.0
    %4792 = vmatpush2.msra.mxu0 0.0
    %4793 = vmatprep.subr.mxu0 0.0
    %4794 = vmatpush2.msra.mxu0 0.0
    %4795 = vmatprep.subr.mxu0 0.0
    %4796 = vmatpush2.msra.mxu0 0.0
    %4797 = vmatprep.subr.mxu0 0.0
    %4798 = vmatpush2.msra.mxu0 0.0
    %4799 = vmatprep.subr.mxu0 0.0
    %4800 = vmatpush2.msra.mxu0 0.0
    %4801 = vmatprep.subr.mxu0 0.0
    %4802 = vmatpush2.msra.mxu0 0.0
    %4803 = vmatprep.subr.mxu0 0.0
    %4804 = vmatpush2.msra.mxu0 0.0
    %4805 = vmatprep.subr.mxu0 0.0
    %4806 = vmatpush2.msra.mxu0 0.0
    %4807 = vmatprep.subr.mxu0 0.0
    %4808 = vmatpush2.msra.mxu0 0.0
    %4809 = vmatprep.subr.mxu0 0.0
    %4810 = vmatpush2.msra.mxu0 0.0
    %4811 = vmatprep.subr.mxu0 0.0
    %4812 = vmatpush2.msra.mxu0 0.0
    %4813 = vmatprep.subr.mxu0 0.0
    %4814 = vmatpush2.msra.mxu0 0.0
    %4815 = vmatprep.mubr.f32.mxu0 0.0
    %4816 = vmatmul.mubr.f32.gmra.mxu0 %v48
    %v4817 = vpop.f32.mrf.mxu0
    %v4818 = vadd.f32 %v4749, %v4817
    %v4819 = vpop.f32.mrf.mxu0
    %4820 = vmatprep.mubr.f32.mxu0 0.0
    %4821 = vmatmul.mubr.f32.gmra.mxu0 %v51
    %v4822 = vpop.f32.mrf.mxu0
    %v4823 = vadd.f32 %v4749, %v4822
    %v4824 = vpop.f32.mrf.mxu0
    %4825 = vdwg.mxu0
    %s4826 = scalar_lea.vmem %s2, 224
    %v4827 = vld [vmem:[%s4826] sm:$0xff]
    %v4828 = vld [vmem:[%s4826 + $0x8] sm:$0xff]
    %v4829 = vld [vmem:[%s4826 + $0x10] sm:$0xff]
    %v4830 = vld [vmem:[%s4826 + $0x18] sm:$0xff]
    %s4831 = scalar_lea.vmem %s5, 7
    %v4832 = vld [vmem:[%s4831] sm:$0x1]
    %v4834 = vlaneseq
    %v4835 = vshrl.u32 %v4834, 7
    %v4836 = vsub.s32 0, %v4835
    %v4837 = vrot.slane %v4832, %v4836
    %4839 = vmatprep.subr.mxu0 0.0
    %4840 = vmatpush1.msra.mxu0 0.0
    %4841 = vmatprep.subr.mxu0 0.0
    %4842 = vmatpush1.msra.mxu0 0.0
    %4843 = vmatprep.subr.mxu0 0.0
    %4844 = vmatpush1.msra.mxu0 0.0
    %4845 = vmatprep.subr.mxu0 0.0
    %4846 = vmatpush1.msra.mxu0 0.0
    %4847 = vmatprep.subr.mxu0 0.0
    %4848 = vmatpush1.msra.mxu0 0.0
    %4849 = vmatprep.subr.mxu0 0.0
    %4850 = vmatpush1.msra.mxu0 0.0
    %4851 = vmatprep.subr.mxu0 0.0
    %4852 = vmatpush1.msra.mxu0 0.0
    %4853 = vmatprep.subr.mxu0 0.0
    %4854 = vmatpush1.msra.mxu0 0.0
    %4855 = vmatprep.subr.mxu0 0.0
    %4856 = vmatpush1.msra.mxu0 0.0
    %4857 = vmatprep.subr.mxu0 0.0
    %4858 = vmatpush1.msra.mxu0 0.0
    %4859 = vmatprep.subr.mxu0 0.0
    %4860 = vmatpush1.msra.mxu0 0.0
    %4861 = vmatprep.subr.mxu0 0.0
    %4862 = vmatpush1.msra.mxu0 0.0
    %4863 = vmatprep.subr.mxu0 0.0
    %4864 = vmatpush1.msra.mxu0 %v4830
    %4865 = vmatprep.subr.mxu0 0.0
    %4866 = vmatpush1.msra.mxu0 %v4829
    %4867 = vmatprep.subr.mxu0 0.0
    %4868 = vmatpush1.msra.mxu0 %v4828
    %4869 = vmatprep.subr.mxu0 0.0
    %4870 = vmatpush1.msra.mxu0 %v4827
    %4871 = vmatprep.subr.mxu0 0.0
    %4872 = vmatpush2.msra.mxu0 0.0
    %4873 = vmatprep.subr.mxu0 0.0
    %4874 = vmatpush2.msra.mxu0 0.0
    %4875 = vmatprep.subr.mxu0 0.0
    %4876 = vmatpush2.msra.mxu0 0.0
    %4877 = vmatprep.subr.mxu0 0.0
    %4878 = vmatpush2.msra.mxu0 0.0
    %4879 = vmatprep.subr.mxu0 0.0
    %4880 = vmatpush2.msra.mxu0 0.0
    %4881 = vmatprep.subr.mxu0 0.0
    %4882 = vmatpush2.msra.mxu0 0.0
    %4883 = vmatprep.subr.mxu0 0.0
    %4884 = vmatpush2.msra.mxu0 0.0
    %4885 = vmatprep.subr.mxu0 0.0
    %4886 = vmatpush2.msra.mxu0 0.0
    %4887 = vmatprep.subr.mxu0 0.0
    %4888 = vmatpush2.msra.mxu0 0.0
    %4889 = vmatprep.subr.mxu0 0.0
    %4890 = vmatpush2.msra.mxu0 0.0
    %4891 = vmatprep.subr.mxu0 0.0
    %4892 = vmatpush2.msra.mxu0 0.0
    %4893 = vmatprep.subr.mxu0 0.0
    %4894 = vmatpush2.msra.mxu0 0.0
    %4895 = vmatprep.subr.mxu0 0.0
    %4896 = vmatpush2.msra.mxu0 0.0
    %4897 = vmatprep.subr.mxu0 0.0
    %4898 = vmatpush2.msra.mxu0 0.0
    %4899 = vmatprep.subr.mxu0 0.0
    %4900 = vmatpush2.msra.mxu0 0.0
    %4901 = vmatprep.subr.mxu0 0.0
    %4902 = vmatpush2.msra.mxu0 0.0
    %4903 = vmatprep.mubr.f32.mxu0 0.0
    %4904 = vmatmul.mubr.f32.gmra.mxu0 %v48
    %v4905 = vpop.f32.mrf.mxu0
    %v4906 = vadd.f32 %v4837, %v4905
    %v4907 = vpop.f32.mrf.mxu0
    %4908 = vmatprep.mubr.f32.mxu0 0.0
    %4909 = vmatmul.mubr.f32.gmra.mxu0 %v51
    %v4910 = vpop.f32.mrf.mxu0
    %v4911 = vadd.f32 %v4837, %v4910
    %v4912 = vpop.f32.mrf.mxu0
    %4913 = vdwg.mxu0
    %s4914 = scalar_lea.vmem %s3, 224
    %v4915 = vld [vmem:[%s4914] sm:$0xff]
    %v4916 = vld [vmem:[%s4914 + $0x8] sm:$0xff]
    %v4917 = vld [vmem:[%s4914 + $0x10] sm:$0xff]
    %v4918 = vld [vmem:[%s4914 + $0x18] sm:$0xff]
    %s4919 = scalar_lea.vmem %s6, 7
    %v4920 = vld [vmem:[%s4919] sm:$0x1]
    %v4922 = vlaneseq
    %v4923 = vshrl.u32 %v4922, 7
    %v4924 = vsub.s32 0, %v4923
    %v4925 = vrot.slane %v4920, %v4924
    %4927 = vmatprep.subr.mxu0 0.0
    %4928 = vmatpush1.msra.mxu0 0.0
    %4929 = vmatprep.subr.mxu0 0.0
    %4930 = vmatpush1.msra.mxu0 0.0
    %4931 = vmatprep.subr.mxu0 0.0
    %4932 = vmatpush1.msra.mxu0 0.0
    %4933 = vmatprep.subr.mxu0 0.0
    %4934 = vmatpush1.msra.mxu0 0.0
    %4935 = vmatprep.subr.mxu0 0.0
    %4936 = vmatpush1.msra.mxu0 0.0
    %4937 = vmatprep.subr.mxu0 0.0
    %4938 = vmatpush1.msra.mxu0 0.0
    %4939 = vmatprep.subr.mxu0 0.0
    %4940 = vmatpush1.msra.mxu0 0.0
    %4941 = vmatprep.subr.mxu0 0.0
    %4942 = vmatpush1.msra.mxu0 0.0
    %4943 = vmatprep.subr.mxu0 0.0
    %4944 = vmatpush1.msra.mxu0 0.0
    %4945 = vmatprep.subr.mxu0 0.0
    %4946 = vmatpush1.msra.mxu0 0.0
    %4947 = vmatprep.subr.mxu0 0.0
    %4948 = vmatpush1.msra.mxu0 0.0
    %4949 = vmatprep.subr.mxu0 0.0
    %4950 = vmatpush1.msra.mxu0 0.0
    %4951 = vmatprep.subr.mxu0 0.0
    %4952 = vmatpush1.msra.mxu0 %v4918
    %4953 = vmatprep.subr.mxu0 0.0
    %4954 = vmatpush1.msra.mxu0 %v4917
    %4955 = vmatprep.subr.mxu0 0.0
    %4956 = vmatpush1.msra.mxu0 %v4916
    %4957 = vmatprep.subr.mxu0 0.0
    %4958 = vmatpush1.msra.mxu0 %v4915
    %4959 = vmatprep.subr.mxu0 0.0
    %4960 = vmatpush2.msra.mxu0 0.0
    %4961 = vmatprep.subr.mxu0 0.0
    %4962 = vmatpush2.msra.mxu0 0.0
    %4963 = vmatprep.subr.mxu0 0.0
    %4964 = vmatpush2.msra.mxu0 0.0
    %4965 = vmatprep.subr.mxu0 0.0
    %4966 = vmatpush2.msra.mxu0 0.0
    %4967 = vmatprep.subr.mxu0 0.0
    %4968 = vmatpush2.msra.mxu0 0.0
    %4969 = vmatprep.subr.mxu0 0.0
    %4970 = vmatpush2.msra.mxu0 0.0
    %4971 = vmatprep.subr.mxu0 0.0
    %4972 = vmatpush2.msra.mxu0 0.0
    %4973 = vmatprep.subr.mxu0 0.0
    %4974 = vmatpush2.msra.mxu0 0.0
    %4975 = vmatprep.subr.mxu0 0.0
    %4976 = vmatpush2.msra.mxu0 0.0
    %4977 = vmatprep.subr.mxu0 0.0
    %4978 = vmatpush2.msra.mxu0 0.0
    %4979 = vmatprep.subr.mxu0 0.0
    %4980 = vmatpush2.msra.mxu0 0.0
    %4981 = vmatprep.subr.mxu0 0.0
    %4982 = vmatpush2.msra.mxu0 0.0
    %4983 = vmatprep.subr.mxu0 0.0
    %4984 = vmatpush2.msra.mxu0 0.0
    %4985 = vmatprep.subr.mxu0 0.0
    %4986 = vmatpush2.msra.mxu0 0.0
    %4987 = vmatprep.subr.mxu0 0.0
    %4988 = vmatpush2.msra.mxu0 0.0
    %4989 = vmatprep.subr.mxu0 0.0
    %4990 = vmatpush2.msra.mxu0 0.0
    %4991 = vmatprep.mubr.f32.mxu0 0.0
    %4992 = vmatmul.mubr.f32.gmra.mxu0 %v48
    %v4993 = vpop.f32.mrf.mxu0
    %v4994 = vadd.f32 %v4925, %v4993
    %v4995 = vpop.f32.mrf.mxu0
    %4996 = vmatprep.mubr.f32.mxu0 0.0
    %4997 = vmatmul.mubr.f32.gmra.mxu0 %v51
    %v4998 = vpop.f32.mrf.mxu0
    %v4999 = vadd.f32 %v4925, %v4998
    %v5000 = vpop.f32.mrf.mxu0
    %5001 = vdwg.mxu0
    %v5003 = vsel %vm300, %v4818, 0
    %v5006 = vsel %vm300, %v4906, 0
    %5008 = vmatprep.subr.mxu0 0.0
    %5009 = vmatpush1.xpose.msra.mxu0 0.0
    %5010 = vmatprep.subr.mxu0 0.0
    %5011 = vmatpush1.xpose.msra.mxu0 0.0
    %5012 = vmatprep.subr.mxu0 0.0
    %5013 = vmatpush1.xpose.msra.mxu0 0.0
    %5014 = vmatprep.subr.mxu0 0.0
    %5015 = vmatpush1.xpose.msra.mxu0 0.0
    %5016 = vmatprep.subr.mxu0 0.0
    %5017 = vmatpush1.xpose.msra.mxu0 0.0
    %5018 = vmatprep.subr.mxu0 0.0
    %5019 = vmatpush1.xpose.msra.mxu0 0.0
    %5020 = vmatprep.subr.mxu0 0.0
    %5021 = vmatpush1.xpose.msra.mxu0 0.0
    %5022 = vmatprep.subr.mxu0 0.0
    %5023 = vmatpush1.xpose.msra.mxu0 0.0
    %5024 = vmatprep.subr.mxu0 0.0
    %5025 = vmatpush1.xpose.msra.mxu0 0.0
    %5026 = vmatprep.subr.mxu0 0.0
    %5027 = vmatpush1.xpose.msra.mxu0 0.0
    %5028 = vmatprep.subr.mxu0 0.0
    %5029 = vmatpush1.xpose.msra.mxu0 0.0
    %5030 = vmatprep.subr.mxu0 0.0
    %5031 = vmatpush1.xpose.msra.mxu0 0.0
    %5032 = vmatprep.subr.mxu0 0.0
    %5033 = vmatpush1.xpose.msra.mxu0 0.0
    %5034 = vmatprep.subr.mxu0 0.0
    %5035 = vmatpush1.xpose.msra.mxu0 0.0
    %5036 = vmatprep.subr.mxu0 0.0
    %5037 = vmatpush1.xpose.msra.mxu0 0.0
    %5038 = vmatprep.subr.mxu0 0.0
    %5039 = vmatpush1.xpose.msra.mxu0 %v5006
    %5040 = vmatprep.subr.mxu0 0.0
    %5041 = vmatpush2.xpose.msra.mxu0 0.0
    %5042 = vmatprep.subr.mxu0 0.0
    %5043 = vmatpush2.xpose.msra.mxu0 0.0
    %5044 = vmatprep.subr.mxu0 0.0
    %5045 = vmatpush2.xpose.msra.mxu0 0.0
    %5046 = vmatprep.subr.mxu0 0.0
    %5047 = vmatpush2.xpose.msra.mxu0 0.0
    %5048 = vmatprep.subr.mxu0 0.0
    %5049 = vmatpush2.xpose.msra.mxu0 0.0
    %5050 = vmatprep.subr.mxu0 0.0
    %5051 = vmatpush2.xpose.msra.mxu0 0.0
    %5052 = vmatprep.subr.mxu0 0.0
    %5053 = vmatpush2.xpose.msra.mxu0 0.0
    %5054 = vmatprep.subr.mxu0 0.0
    %5055 = vmatpush2.xpose.msra.mxu0 0.0
    %5056 = vmatprep.subr.mxu0 0.0
    %5057 = vmatpush2.xpose.msra.mxu0 0.0
    %5058 = vmatprep.subr.mxu0 0.0
    %5059 = vmatpush2.xpose.msra.mxu0 0.0
    %5060 = vmatprep.subr.mxu0 0.0
    %5061 = vmatpush2.xpose.msra.mxu0 0.0
    %5062 = vmatprep.subr.mxu0 0.0
    %5063 = vmatpush2.xpose.msra.mxu0 0.0
    %5064 = vmatprep.subr.mxu0 0.0
    %5065 = vmatpush2.xpose.msra.mxu0 0.0
    %5066 = vmatprep.subr.mxu0 0.0
    %5067 = vmatpush2.xpose.msra.mxu0 0.0
    %5068 = vmatprep.subr.mxu0 0.0
    %5069 = vmatpush2.xpose.msra.mxu0 0.0
    %5070 = vmatprep.subr.mxu0 0.0
    %5071 = vmatpush2.xpose.msra.mxu0 0.0
    %5072 = vmatprep.mubr.f32.mxu0 0.0
    %5073 = vmatmul.mubr.f32.gmra.mxu0 %v5003
    %v5074 = vpop.f32.mrf.mxu0
    %v5075 = vadd.f32 0.0, %v5074
    %v5076 = vpop.f32.mrf.mxu0
    %5077 = vdwg.mxu0
    %v5079 = vsel %vm300, %v4823, 0
    %v5082 = vsel %vm300, %v4911, 0
    %5084 = vmatprep.subr.mxu0 0.0
    %5085 = vmatpush1.xpose.msra.mxu0 0.0
    %5086 = vmatprep.subr.mxu0 0.0
    %5087 = vmatpush1.xpose.msra.mxu0 0.0
    %5088 = vmatprep.subr.mxu0 0.0
    %5089 = vmatpush1.xpose.msra.mxu0 0.0
    %5090 = vmatprep.subr.mxu0 0.0
    %5091 = vmatpush1.xpose.msra.mxu0 0.0
    %5092 = vmatprep.subr.mxu0 0.0
    %5093 = vmatpush1.xpose.msra.mxu0 0.0
    %5094 = vmatprep.subr.mxu0 0.0
    %5095 = vmatpush1.xpose.msra.mxu0 0.0
    %5096 = vmatprep.subr.mxu0 0.0
    %5097 = vmatpush1.xpose.msra.mxu0 0.0
    %5098 = vmatprep.subr.mxu0 0.0
    %5099 = vmatpush1.xpose.msra.mxu0 0.0
    %5100 = vmatprep.subr.mxu0 0.0
    %5101 = vmatpush1.xpose.msra.mxu0 0.0
    %5102 = vmatprep.subr.mxu0 0.0
    %5103 = vmatpush1.xpose.msra.mxu0 0.0
    %5104 = vmatprep.subr.mxu0 0.0
    %5105 = vmatpush1.xpose.msra.mxu0 0.0
    %5106 = vmatprep.subr.mxu0 0.0
    %5107 = vmatpush1.xpose.msra.mxu0 0.0
    %5108 = vmatprep.subr.mxu0 0.0
    %5109 = vmatpush1.xpose.msra.mxu0 0.0
    %5110 = vmatprep.subr.mxu0 0.0
    %5111 = vmatpush1.xpose.msra.mxu0 0.0
    %5112 = vmatprep.subr.mxu0 0.0
    %5113 = vmatpush1.xpose.msra.mxu0 0.0
    %5114 = vmatprep.subr.mxu0 0.0
    %5115 = vmatpush1.xpose.msra.mxu0 %v5082
    %5116 = vmatprep.subr.mxu0 0.0
    %5117 = vmatpush2.xpose.msra.mxu0 0.0
    %5118 = vmatprep.subr.mxu0 0.0
    %5119 = vmatpush2.xpose.msra.mxu0 0.0
    %5120 = vmatprep.subr.mxu0 0.0
    %5121 = vmatpush2.xpose.msra.mxu0 0.0
    %5122 = vmatprep.subr.mxu0 0.0
    %5123 = vmatpush2.xpose.msra.mxu0 0.0
    %5124 = vmatprep.subr.mxu0 0.0
    %5125 = vmatpush2.xpose.msra.mxu0 0.0
    %5126 = vmatprep.subr.mxu0 0.0
    %5127 = vmatpush2.xpose.msra.mxu0 0.0
    %5128 = vmatprep.subr.mxu0 0.0
    %5129 = vmatpush2.xpose.msra.mxu0 0.0
    %5130 = vmatprep.subr.mxu0 0.0
    %5131 = vmatpush2.xpose.msra.mxu0 0.0
    %5132 = vmatprep.subr.mxu0 0.0
    %5133 = vmatpush2.xpose.msra.mxu0 0.0
    %5134 = vmatprep.subr.mxu0 0.0
    %5135 = vmatpush2.xpose.msra.mxu0 0.0
    %5136 = vmatprep.subr.mxu0 0.0
    %5137 = vmatpush2.xpose.msra.mxu0 0.0
    %5138 = vmatprep.subr.mxu0 0.0
    %5139 = vmatpush2.xpose.msra.mxu0 0.0
    %5140 = vmatprep.subr.mxu0 0.0
    %5141 = vmatpush2.xpose.msra.mxu0 0.0
    %5142 = vmatprep.subr.mxu0 0.0
    %5143 = vmatpush2.xpose.msra.mxu0 0.0
    %5144 = vmatprep.subr.mxu0 0.0
    %5145 = vmatpush2.xpose.msra.mxu0 0.0
    %5146 = vmatprep.subr.mxu0 0.0
    %5147 = vmatpush2.xpose.msra.mxu0 0.0
    %5148 = vmatprep.mubr.f32.mxu0 0.0
    %5149 = vmatmul.mubr.f32.gmra.mxu0 %v5079
    %v5150 = vpop.f32.mrf.mxu0
    %v5151 = vadd.f32 0.0, %v5150
    %v5152 = vpop.f32.mrf.mxu0
    %5153 = vdwg.mxu0
    %v5154 = vsel %vm453, %v5075, -inf
    %5155 = vmax.xlane.f32.xlu0 %v5154
    %v5156 = vpop.xlane.xlu0 %5155
    %v5157 = vsel %vm453, %v5151, -inf
    %5158 = vmax.xlane.f32.xlu0 %v5157
    %v5159 = vpop.xlane.xlu0 %5158
    %v5160 = vsub.f32 %v5075, %v5156
    %v5161 = vsub.f32 %v5151, %v5159
    %v5162 = vmul.f32 %v5160, 1.442695
    %v5163 = vpow.pop %v5162
    %v5164 = vmul.f32 %v5161, 1.442695
    %v5165 = vpow.pop %v5164
    %v5166 = vsel %vm453, %v5163, 0.0
    %5167 = vadd.xlane.f32.xlu0 %v5166
    %v5168 = vpop.xlane.xlu0 %5167
    %v5169 = vsel %vm453, %v5165, 0.0
    %5170 = vadd.xlane.f32.xlu0 %v5169
    %v5171 = vpop.xlane.xlu0 %5170
    %v5173 = vsel %vm453, %v5163, 0
    %5175 = vmatprep.subr.mxu0 0.0
    %5176 = vmatpush1.msra.mxu0 0.0
    %5177 = vmatprep.subr.mxu0 0.0
    %5178 = vmatpush1.msra.mxu0 0.0
    %5179 = vmatprep.subr.mxu0 0.0
    %5180 = vmatpush1.msra.mxu0 0.0
    %5181 = vmatprep.subr.mxu0 0.0
    %5182 = vmatpush1.msra.mxu0 0.0
    %5183 = vmatprep.subr.mxu0 0.0
    %5184 = vmatpush1.msra.mxu0 0.0
    %5185 = vmatprep.subr.mxu0 0.0
    %5186 = vmatpush1.msra.mxu0 0.0
    %5187 = vmatprep.subr.mxu0 0.0
    %5188 = vmatpush1.msra.mxu0 0.0
    %5189 = vmatprep.subr.mxu0 0.0
    %5190 = vmatpush1.msra.mxu0 0.0
    %5191 = vmatprep.subr.mxu0 0.0
    %5192 = vmatpush1.msra.mxu0 0.0
    %5193 = vmatprep.subr.mxu0 0.0
    %5194 = vmatpush1.msra.mxu0 0.0
    %5195 = vmatprep.subr.mxu0 0.0
    %5196 = vmatpush1.msra.mxu0 0.0
    %5197 = vmatprep.subr.mxu0 0.0
    %5198 = vmatpush1.msra.mxu0 0.0
    %5199 = vmatprep.subr.mxu0 0.0
    %5200 = vmatpush1.msra.mxu0 0.0
    %5201 = vmatprep.subr.mxu0 0.0
    %5202 = vmatpush1.msra.mxu0 0.0
    %5203 = vmatprep.subr.mxu0 0.0
    %5204 = vmatpush1.msra.mxu0 0.0
    %5205 = vmatprep.subr.mxu0 0.0
    %5206 = vmatpush1.msra.mxu0 %v4994
    %5207 = vmatprep.subr.mxu0 0.0
    %5208 = vmatpush2.msra.mxu0 0.0
    %5209 = vmatprep.subr.mxu0 0.0
    %5210 = vmatpush2.msra.mxu0 0.0
    %5211 = vmatprep.subr.mxu0 0.0
    %5212 = vmatpush2.msra.mxu0 0.0
    %5213 = vmatprep.subr.mxu0 0.0
    %5214 = vmatpush2.msra.mxu0 0.0
    %5215 = vmatprep.subr.mxu0 0.0
    %5216 = vmatpush2.msra.mxu0 0.0
    %5217 = vmatprep.subr.mxu0 0.0
    %5218 = vmatpush2.msra.mxu0 0.0
    %5219 = vmatprep.subr.mxu0 0.0
    %5220 = vmatpush2.msra.mxu0 0.0
    %5221 = vmatprep.subr.mxu0 0.0
    %5222 = vmatpush2.msra.mxu0 0.0
    %5223 = vmatprep.subr.mxu0 0.0
    %5224 = vmatpush2.msra.mxu0 0.0
    %5225 = vmatprep.subr.mxu0 0.0
    %5226 = vmatpush2.msra.mxu0 0.0
    %5227 = vmatprep.subr.mxu0 0.0
    %5228 = vmatpush2.msra.mxu0 0.0
    %5229 = vmatprep.subr.mxu0 0.0
    %5230 = vmatpush2.msra.mxu0 0.0
    %5231 = vmatprep.subr.mxu0 0.0
    %5232 = vmatpush2.msra.mxu0 0.0
    %5233 = vmatprep.subr.mxu0 0.0
    %5234 = vmatpush2.msra.mxu0 0.0
    %5235 = vmatprep.subr.mxu0 0.0
    %5236 = vmatpush2.msra.mxu0 0.0
    %5237 = vmatprep.subr.mxu0 0.0
    %5238 = vmatpush2.msra.mxu0 0.0
    %5239 = vmatprep.mubr.f32.mxu0 0.0
    %5240 = vmatmul.mubr.f32.gmra.mxu0 %v5173
    %v5241 = vpop.f32.mrf.mxu0
    %v5242 = vadd.f32 0.0, %v5241
    %v5243 = vpop.f32.mrf.mxu0
    %5244 = vdwg.mxu0
    %v5246 = vsel %vm453, %v5165, 0
    %5248 = vmatprep.subr.mxu0 0.0
    %5249 = vmatpush1.msra.mxu0 0.0
    %5250 = vmatprep.subr.mxu0 0.0
    %5251 = vmatpush1.msra.mxu0 0.0
    %5252 = vmatprep.subr.mxu0 0.0
    %5253 = vmatpush1.msra.mxu0 0.0
    %5254 = vmatprep.subr.mxu0 0.0
    %5255 = vmatpush1.msra.mxu0 0.0
    %5256 = vmatprep.subr.mxu0 0.0
    %5257 = vmatpush1.msra.mxu0 0.0
    %5258 = vmatprep.subr.mxu0 0.0
    %5259 = vmatpush1.msra.mxu0 0.0
    %5260 = vmatprep.subr.mxu0 0.0
    %5261 = vmatpush1.msra.mxu0 0.0
    %5262 = vmatprep.subr.mxu0 0.0
    %5263 = vmatpush1.msra.mxu0 0.0
    %5264 = vmatprep.subr.mxu0 0.0
    %5265 = vmatpush1.msra.mxu0 0.0
    %5266 = vmatprep.subr.mxu0 0.0
    %5267 = vmatpush1.msra.mxu0 0.0
    %5268 = vmatprep.subr.mxu0 0.0
    %5269 = vmatpush1.msra.mxu0 0.0
    %5270 = vmatprep.subr.mxu0 0.0
    %5271 = vmatpush1.msra.mxu0 0.0
    %5272 = vmatprep.subr.mxu0 0.0
    %5273 = vmatpush1.msra.mxu0 0.0
    %5274 = vmatprep.subr.mxu0 0.0
    %5275 = vmatpush1.msra.mxu0 0.0
    %5276 = vmatprep.subr.mxu0 0.0
    %5277 = vmatpush1.msra.mxu0 0.0
    %5278 = vmatprep.subr.mxu0 0.0
    %5279 = vmatpush1.msra.mxu0 %v4999
    %5280 = vmatprep.subr.mxu0 0.0
    %5281 = vmatpush2.msra.mxu0 0.0
    %5282 = vmatprep.subr.mxu0 0.0
    %5283 = vmatpush2.msra.mxu0 0.0
    %5284 = vmatprep.subr.mxu0 0.0
    %5285 = vmatpush2.msra.mxu0 0.0
    %5286 = vmatprep.subr.mxu0 0.0
    %5287 = vmatpush2.msra.mxu0 0.0
    %5288 = vmatprep.subr.mxu0 0.0
    %5289 = vmatpush2.msra.mxu0 0.0
    %5290 = vmatprep.subr.mxu0 0.0
    %5291 = vmatpush2.msra.mxu0 0.0
    %5292 = vmatprep.subr.mxu0 0.0
    %5293 = vmatpush2.msra.mxu0 0.0
    %5294 = vmatprep.subr.mxu0 0.0
    %5295 = vmatpush2.msra.mxu0 0.0
    %5296 = vmatprep.subr.mxu0 0.0
    %5297 = vmatpush2.msra.mxu0 0.0
    %5298 = vmatprep.subr.mxu0 0.0
    %5299 = vmatpush2.msra.mxu0 0.0
    %5300 = vmatprep.subr.mxu0 0.0
    %5301 = vmatpush2.msra.mxu0 0.0
    %5302 = vmatprep.subr.mxu0 0.0
    %5303 = vmatpush2.msra.mxu0 0.0
    %5304 = vmatprep.subr.mxu0 0.0
    %5305 = vmatpush2.msra.mxu0 0.0
    %5306 = vmatprep.subr.mxu0 0.0
    %5307 = vmatpush2.msra.mxu0 0.0
    %5308 = vmatprep.subr.mxu0 0.0
    %5309 = vmatpush2.msra.mxu0 0.0
    %5310 = vmatprep.subr.mxu0 0.0
    %5311 = vmatpush2.msra.mxu0 0.0
    %5312 = vmatprep.mubr.f32.mxu0 0.0
    %5313 = vmatmul.mubr.f32.gmra.mxu0 %v5246
    %v5314 = vpop.f32.mrf.mxu0
    %v5315 = vadd.f32 0.0, %v5314
    %v5316 = vpop.f32.mrf.mxu0
    %5317 = vdwg.mxu0
    %v5318 = vrcp.pop %v5168
    %v5319 = vmul.f32 %v5242, %v5318
    %v5320 = vrcp.pop %v5171
    %v5321 = vmul.f32 %v5315, %v5320
    %s5322 = scalar_lea.vmem %s7, 28
    %v5323 = vld [vmem:[%s5322] sm:$0xf]
    %v5325 = vsel %vm300, %v5319, 0
    %v5328 = vsel %vm300, %v5321, 0
    %v5331 = vsel %vm1215, %v5323, 0
    %5333 = vmatprep.subr.mxu0 0.0
    %5334 = vmatpush1.msra.mxu0 0.0
    %5335 = vmatprep.subr.mxu0 0.0
    %5336 = vmatpush1.msra.mxu0 0.0
    %5337 = vmatprep.subr.mxu0 0.0
    %5338 = vmatpush1.msra.mxu0 0.0
    %5339 = vmatprep.subr.mxu0 0.0
    %5340 = vmatpush1.msra.mxu0 0.0
    %5341 = vmatprep.subr.mxu0 0.0
    %5342 = vmatpush1.msra.mxu0 0.0
    %5343 = vmatprep.subr.mxu0 0.0
    %5344 = vmatpush1.msra.mxu0 0.0
    %5345 = vmatprep.subr.mxu0 0.0
    %5346 = vmatpush1.msra.mxu0 0.0
    %5347 = vmatprep.subr.mxu0 0.0
    %5348 = vmatpush1.msra.mxu0 0.0
    %5349 = vmatprep.subr.mxu0 0.0
    %5350 = vmatpush1.msra.mxu0 0.0
    %5351 = vmatprep.subr.mxu0 0.0
    %5352 = vmatpush1.msra.mxu0 0.0
    %5353 = vmatprep.subr.mxu0 0.0
    %5354 = vmatpush1.msra.mxu0 0.0
    %5355 = vmatprep.subr.mxu0 0.0
    %5356 = vmatpush1.msra.mxu0 0.0
    %5357 = vmatprep.subr.mxu0 0.0
    %5358 = vmatpush1.msra.mxu0 0.0
    %5359 = vmatprep.subr.mxu0 0.0
    %5360 = vmatpush1.msra.mxu0 0.0
    %5361 = vmatprep.subr.mxu0 0.0
    %5362 = vmatpush1.msra.mxu0 0.0
    %5363 = vmatprep.subr.mxu0 0.0
    %5364 = vmatpush1.msra.mxu0 %v5331
    %5365 = vmatprep.subr.mxu0 0.0
    %5366 = vmatpush2.msra.mxu0 0.0
    %5367 = vmatprep.subr.mxu0 0.0
    %5368 = vmatpush2.msra.mxu0 0.0
    %5369 = vmatprep.subr.mxu0 0.0
    %5370 = vmatpush2.msra.mxu0 0.0
    %5371 = vmatprep.subr.mxu0 0.0
    %5372 = vmatpush2.msra.mxu0 0.0
    %5373 = vmatprep.subr.mxu0 0.0
    %5374 = vmatpush2.msra.mxu0 0.0
    %5375 = vmatprep.subr.mxu0 0.0
    %5376 = vmatpush2.msra.mxu0 0.0
    %5377 = vmatprep.subr.mxu0 0.0
    %5378 = vmatpush2.msra.mxu0 0.0
    %5379 = vmatprep.subr.mxu0 0.0
    %5380 = vmatpush2.msra.mxu0 0.0
    %5381 = vmatprep.subr.mxu0 0.0
    %5382 = vmatpush2.msra.mxu0 0.0
    %5383 = vmatprep.subr.mxu0 0.0
    %5384 = vmatpush2.msra.mxu0 0.0
    %5385 = vmatprep.subr.mxu0 0.0
    %5386 = vmatpush2.msra.mxu0 0.0
    %5387 = vmatprep.subr.mxu0 0.0
    %5388 = vmatpush2.msra.mxu0 0.0
    %5389 = vmatprep.subr.mxu0 0.0
    %5390 = vmatpush2.msra.mxu0 0.0
    %5391 = vmatprep.subr.mxu0 0.0
    %5392 = vmatpush2.msra.mxu0 0.0
    %5393 = vmatprep.subr.mxu0 0.0
    %5394 = vmatpush2.msra.mxu0 0.0
    %5395 = vmatprep.subr.mxu0 0.0
    %5396 = vmatpush2.msra.mxu0 0.0
    %5397 = vmatprep.mubr.f32.mxu0 0.0
    %5398 = vmatmul.mubr.f32.gmra.mxu0 %v5325
    %v5399 = vpop.f32.mrf.mxu0
    %v5400 = vadd.f32 0.0, %v5399
    %v5401 = vpop.f32.mrf.mxu0
    %5402 = vmatprep.mubr.f32.mxu0 0.0
    %5403 = vmatmul.mubr.f32.gmra.mxu0 %v5328
    %v5404 = vpop.f32.mrf.mxu0
    %v5405 = vadd.f32 0.0, %v5404
    %v5406 = vpop.f32.mrf.mxu0
    %5407 = vdwg.mxu0
    %v5408 = vadd.f32 %v4736, %v5400
    %v5409 = vadd.f32 %v4737, %v5405
    %v5410 = vld [vmem:[%s8] sm:$0x1]
    %v5412 = vlaneseq
    %v5413 = vshrl.u32 %v5412, 7
    %v5414 = vsub.s32 0, %v5413
    %v5415 = vrot.slane %v5410, %v5414
    %v5417 = vadd.f32 %v5408, %v5415
    %v5418 = vadd.f32 %v5409, %v5415
    %5419 = vst.msk [vmem:[#allocation2] sm:$0xff] %vm46, %v5417
    %5420 = vst.msk [vmem:[#allocation2 + $0x8] sm:$0xff] %vm46, %v5418
    // Predicated region
    $region38: #{tpu_custom_call.1} parent=1 // pred_check
      _
    $region39: #{tpu_custom_call.1} parent=1 // pred_check_branch
      %5422 = sbr.rel (0) target = $region41
    $region40: #{tpu_custom_call.1} parent=1 // pred_region
      %s5424 = ssub.s32 256, 256
      %5425 = vsyncadd [#allocation3], %s5424
      %s5426 = sshll.u32 [#allocation2], 4
      %s5427 = int_to_ptr.vmem [resolvable:$true] %s5426
      %5432 = dma.vmem_to_hbm [thread:$0]  %s5427, 256, %s9, [#allocation3], 128, 128, 8
    $region41: #{tpu_custom_call.1} parent=1 // pred_fallthru
      _
    // Predicated region
    $region42: #{tpu_custom_call.1} parent=1 // pred_check
      _
    $region43: #{tpu_custom_call.1} parent=1 // pred_check_branch
      %5434 = sbr.rel (0) target = $region45
    $region44: #{tpu_custom_call.1} parent=1 // pred_region
      %5435 = dma.done [#allocation3], 256
    $region45: #{tpu_custom_call.1} parent=1 // pred_fallthru
      _
    %5436 = vsyncpa [#allocation3], 1

</llo_original>
